<compile_context>
chip_gen: v7x
topology: tpu7x:2x2x1
jax: 0.10.0
libtpu: 0.0.40
codegen_flags: <defaults>
</compile_context>

<pallas_src>
import functools

import jax
import jax.numpy as jnp
from jax.experimental import pallas as pl
from jax.experimental.pallas import tpu as pltpu

_VMEM_LIMIT = 48 * 1024 * 1024  # explicit scoped-VMEM budget, fits v5e/v6e/v7x


def _round_up(v, m):
    return (v + m - 1) // m * m


def _gelu_exact(y):
    # timm / nn.GELU() default: exact erf-based GELU (float32 in-kernel).
    return 0.5 * y * (1.0 + jax.lax.erf(y * 0.7071067811865476))


# ---------------------------------------------------------------------------
# Fused (LayerNorm?) -> matmul -> bias -> (GELU?) -> (+residual?) kernel,
# tiled over (M, N, K) with a float32 VMEM accumulator on the K axis.
# ---------------------------------------------------------------------------
def fused_linear(x, w, b, *, ln_g=None, ln_b=None, residual=None,
                 activation=None, eps=1e-6, tm=256, tn=256, tk=512):
    """y = [LN(x)] @ w + b, optional exact GELU, optional + residual.

    x: (M, K) f32; w: (K, N) bf16/f32; b: (N,) f32.  Output: (M, N) f32.
    Matmul operands are cast to w.dtype (bf16) with float32 accumulation;
    LN stats, bias, GELU and residual math stay in float32.
    """
    M, K = x.shape
    Kw, N = w.shape
    assert Kw == K
    has_ln = ln_g is not None
    has_res = residual is not None

    # Tile selection: full-extent (padded to a sublane multiple) block when
    # small, aligned tiles + zero padding otherwise.  Zero-padded K rows/cols
    # do not change the matmul; zero-padded M rows are sliced off afterwards.
    if M <= tm:
        TM = Mp = max(_round_up(M, 8), 8)
    else:
        TM, Mp = tm, _round_up(M, tm)
    TN, Np = (N, N) if N <= tn else (tn, _round_up(N, tn))
    if has_ln or K <= tk:
        TK, Kp = K, K          # LayerNorm needs the whole feature row per tile
    else:
        TK, Kp = tk, _round_up(K, tk)

    xp = x if (Mp == M and Kp == K) else jnp.pad(x, ((0, Mp - M), (0, Kp - K)))
    wp = w if (Kp == K and Np == N) else jnp.pad(w, ((0, Kp - K), (0, Np - N)))
    bp = b.reshape(1, N)
    if Np != N:
        bp = jnp.pad(bp, ((0, 0), (0, Np - N)))

    in_specs = [
        pl.BlockSpec((TM, TK), lambda i, j, k: (i, k)),
        pl.BlockSpec((TK, TN), lambda i, j, k: (k, j)),
        pl.BlockSpec((1, TN), lambda i, j, k: (0, j)),
    ]
    inputs = [xp, wp, bp]
    if has_ln:
        in_specs += [pl.BlockSpec((1, TK), lambda i, j, k: (0, k)),
                     pl.BlockSpec((1, TK), lambda i, j, k: (0, k))]
        inputs += [ln_g.reshape(1, K), ln_b.reshape(1, K)]
    if has_res:
        rp = residual
        if Mp != M or Np != N:
            rp = jnp.pad(residual, ((0, Mp - M), (0, Np - N)))
        in_specs.append(pl.BlockSpec((TM, TN), lambda i, j, k: (i, j)))
        inputs.append(rp)

    def kernel(*refs):
        x_ref, w_ref, b_ref = refs[0], refs[1], refs[2]
        idx = 3
        if has_ln:
            g_ref, beta_ref = refs[idx], refs[idx + 1]
            idx += 2
        if has_res:
            r_ref = refs[idx]
            idx += 1
        o_ref, acc_ref = refs[idx], refs[idx + 1]

        @pl.when(pl.program_id(2) == 0)
        def _init():
            acc_ref[...] = jnp.zeros_like(acc_ref)

        xb = x_ref[...].astype(jnp.float32)
        if has_ln:
            mu = jnp.mean(xb, axis=-1, keepdims=True)
            var = jnp.mean((xb - mu) ** 2, axis=-1, keepdims=True)
            xb = (xb - mu) * jax.lax.rsqrt(var + eps)
            xb = xb * g_ref[...] + beta_ref[...]
        acc_ref[...] += jnp.dot(xb.astype(w_ref.dtype), w_ref[...],
                                preferred_element_type=jnp.float32)

        @pl.when(pl.program_id(2) == pl.num_programs(2) - 1)
        def _finalize():
            y = acc_ref[...] + b_ref[...]
            if activation == "gelu":
                y = _gelu_exact(y)          # exact erf GELU (timm default)
            if has_res:
                y = y + r_ref[...]
            o_ref[...] = y.astype(o_ref.dtype)

    out = pl.pallas_call(
        kernel,
        out_shape=jax.ShapeDtypeStruct((Mp, Np), jnp.float32),
        grid=(Mp // TM, Np // TN, Kp // TK),
        in_specs=in_specs,
        out_specs=pl.BlockSpec((TM, TN), lambda i, j, k: (i, j)),
        scratch_shapes=[pltpu.VMEM((TM, TN), jnp.float32)],
        compiler_params=pltpu.CompilerParams(
            dimension_semantics=("parallel", "parallel", "arbitrary"),
            vmem_limit_bytes=_VMEM_LIMIT),
    )(*inputs)
    if Mp != M or Np != N:
        out = out[:M, :N]
    return out


# ---------------------------------------------------------------------------
# Standalone tiled LayerNorm (only used for the final pre-head norm).
# ---------------------------------------------------------------------------
def _layernorm_kernel(x_ref, g_ref, b_ref, o_ref, *, eps):
    x = x_ref[...]
    mu = jnp.mean(x, axis=-1, keepdims=True)
    var = jnp.mean((x - mu) ** 2, axis=-1, keepdims=True)
    y = (x - mu) * jax.lax.rsqrt(var + eps)
    o_ref[...] = (y * g_ref[...] + b_ref[...]).astype(o_ref.dtype)


def layernorm(x, g, b, eps=1e-6, tm=256):
    M, D = x.shape
    if M <= tm:
        TM = Mp = max(_round_up(M, 8), 8)
    else:
        TM, Mp = tm, _round_up(M, tm)
    xp = x if Mp == M else jnp.pad(x, ((0, Mp - M), (0, 0)))
    out = pl.pallas_call(
        functools.partial(_layernorm_kernel, eps=eps),
        out_shape=jax.ShapeDtypeStruct((Mp, D), jnp.float32),
        grid=(Mp // TM,),
        in_specs=[pl.BlockSpec((TM, D), lambda i: (i, 0)),
                  pl.BlockSpec((1, D), lambda i: (0, 0)),
                  pl.BlockSpec((1, D), lambda i: (0, 0))],
        out_specs=pl.BlockSpec((TM, D), lambda i: (i, 0)),
        compiler_params=pltpu.CompilerParams(
            dimension_semantics=("parallel",),
            vmem_limit_bytes=_VMEM_LIMIT),
    )(xp, g.reshape(1, D), b.reshape(1, D))
    return out[:M] if Mp != M else out


# ---------------------------------------------------------------------------
# Multi-head attention over the packed (N, 3*D) QKV slab, one batch per grid
# step.  Heads are sliced inside the kernel; output is emitted directly in
# (B, N, D) token-major order (lane-dense D, no surrounding transposes).
# ---------------------------------------------------------------------------
def _attention_kernel(qkv_ref, o_ref, *, nh, dh, scale):
    D = nh * dh
    qkv = qkv_ref[0]                                    # (N, 3D) lane-dense load
    outs = []
    for h in range(nh):                                 # static head loop
        q = qkv[:, h * dh:(h + 1) * dh] * scale         # fold 1/sqrt(dh) into q
        k = qkv[:, D + h * dh:D + (h + 1) * dh]
        v = qkv[:, 2 * D + h * dh:2 * D + (h + 1) * dh]
        s = jax.lax.dot_general(                         # q @ k.T  (bf16 MXU, f32 acc)
            q.astype(jnp.bfloat16), k.astype(jnp.bfloat16),
            (((1,), (1,)), ((), ())),
            preferred_element_type=jnp.float32)
        m = jnp.max(s, axis=-1, keepdims=True)
        p = jnp.exp(s - m)
        p = p * pl.reciprocal(jnp.sum(p, axis=-1, keepdims=True), approx=True)
        outs.append(jnp.dot(p.astype(jnp.bfloat16), v.astype(jnp.bfloat16),
                            preferred_element_type=jnp.float32))
    o_ref[0] = jnp.concatenate(outs, axis=-1).astype(o_ref.dtype)


def attention(qkv, nh):
    """qkv: (B, N, 3*D) packed [q | k | v].  Returns (B, N, D) float32."""
    B, N, threeD = qkv.shape
    D = threeD // 3
    dh = D // nh
    kern = functools.partial(_attention_kernel, nh=nh, dh=dh,
                             scale=1.0 / (dh ** 0.5))
    return pl.pallas_call(
        kern,
        out_shape=jax.ShapeDtypeStruct((B, N, D), jnp.float32),
        grid=(B,),
        in_specs=[pl.BlockSpec((1, N, threeD), lambda b: (b, 0, 0))],
        out_specs=pl.BlockSpec((1, N, D), lambda b: (b, 0, 0)),
        compiler_params=pltpu.CompilerParams(
            dimension_semantics=("parallel",),
            vmem_limit_bytes=_VMEM_LIMIT),
    )(qkv)


# ---------------------------------------------------------------------------
# ViT forward pass
# ---------------------------------------------------------------------------
def vit_forward(x, params, cfg):
    """x: (B, C, H, W) float32 -> logits (B, num_classes)."""
    B, C, H, W = x.shape
    P, D, nh = cfg["patch"], cfg["dim"], cfg["heads"]
    hp, wp = H // P, W // P

    # Patch extraction == Conv2d(k=P, stride=P) as a matmul over (C,P,P) patches.
    patches = x.reshape(B, C, hp, P, wp, P).transpose(0, 2, 4, 1, 3, 5)
    patches = patches.reshape(B * hp * wp, C * P * P)
    tokens = fused_linear(patches, params["patch_w"], params["patch_b"])
    tokens = tokens.reshape(B, hp * wp, D)

    # TODO(synk): cls-token concat + pos-embed add left as XLA glue (tiny ops).
    cls = jnp.broadcast_to(params["cls_token"], (B, 1, D))
    tokens = jnp.concatenate([cls, tokens], axis=1) + params["pos_embed"]
    N = tokens.shape[1]

    xseq = tokens.reshape(B * N, D)
    for blk in params["blocks"]:
        # Attention sub-block: LN1 fused into the QKV matmul; per-batch MHA with
        # in-kernel head slicing; residual fused into the projection matmul.
        qkv = fused_linear(xseq, blk["qkv_w"], blk["qkv_b"],
                           ln_g=blk["ln1_g"], ln_b=blk["ln1_b"])
        o = attention(qkv.reshape(B, N, 3 * D), nh).reshape(B * N, D)
        xseq = fused_linear(o, blk["proj_w"], blk["proj_b"], residual=xseq)

        # MLP sub-block: LN2 + FC1 + exact GELU fused; residual fused into FC2.
        h = fused_linear(xseq, blk["fc1_w"], blk["fc1_b"],
                         ln_g=blk["ln2_g"], ln_b=blk["ln2_b"], activation="gelu")
        xseq = fused_linear(h, blk["fc2_w"], blk["fc2_b"], residual=xseq)

    xseq = layernorm(xseq, params["ln_g"], params["ln_b"])
    cls_out = xseq.reshape(B, N, D)[:, 0, :]
    # Head: num_classes is lane-sparse; a single XLA dot beats pallas_call overhead.
    return cls_out @ params["head_w"] + params["head_b"]


# ---------------------------------------------------------------------------
# Deterministic params (matmul weights stored bf16; everything else f32).
# ---------------------------------------------------------------------------
def init_params(key, cfg):
    C, P, D = cfg["chans"], cfg["patch"], cfg["dim"]
    depth, hidden, ncls = cfg["depth"], cfg["mlp_hidden"], cfg["num_classes"]
    n_tokens = (cfg["img"] // P) ** 2 + 1

    ks = iter(jax.random.split(key, 8 + depth * 8))

    def nrm(shape, dtype=jnp.bfloat16, scale=0.02):
        return (scale * jax.random.normal(next(ks), shape)).astype(dtype)

    params = {
        "patch_w": nrm((C * P * P, D)),
        "patch_b": jnp.zeros((D,), jnp.float32),
        "cls_token": nrm((1, 1, D), jnp.float32),
        "pos_embed": nrm((1, n_tokens, D), jnp.float32),
        "ln_g": jnp.ones((D,), jnp.float32),
        "ln_b": jnp.zeros((D,), jnp.float32),
        "head_w": nrm((D, ncls), jnp.float32),
        "head_b": jnp.zeros((ncls,), jnp.float32),
        "blocks": [],
    }
    for _ in range(depth):
        params["blocks"].append({
            "ln1_g": jnp.ones((D,), jnp.float32),
            "ln1_b": jnp.zeros((D,), jnp.float32),
            "qkv_w": nrm((D, 3 * D)),
            "qkv_b": jnp.zeros((3 * D,), jnp.float32),
            "proj_w": nrm((D, D)),
            "proj_b": jnp.zeros((D,), jnp.float32),
            "ln2_g": jnp.ones((D,), jnp.float32),
            "ln2_b": jnp.zeros((D,), jnp.float32),
            "fc1_w": nrm((D, hidden)),
            "fc1_b": jnp.zeros((hidden,), jnp.float32),
            "fc2_w": nrm((hidden, D)),
            "fc2_b": jnp.zeros((D,), jnp.float32),
        })
    return params


if __name__ == "__main__":
    # Small ViT consistent with the module's forward (vit_base scaled down):
    # 32x32 image, 8x8 patches -> 16 patches + CLS = 17 tokens, D=128, 2 heads.
    cfg = dict(img=32, patch=8, chans=3, dim=128, heads=2, depth=2,
               mlp_hidden=256, num_classes=10)

    key = jax.random.PRNGKey(0)
    kx, kp = jax.random.split(key)
    x = jax.random.normal(kx, (2, cfg["chans"], cfg["img"], cfg["img"]),
                          dtype=jnp.float32)   # NCHW like PyTorch
    params = init_params(kp, cfg)

    fwd = jax.jit(functools.partial(vit_forward, cfg=cfg))
    logits = fwd(x, params)
    jax.block_until_ready(logits)
    assert logits.shape == (2, cfg["num_classes"])
    print("KERNEL_OK")
</pallas_src>

<mosaic_0001>
module attributes {stable_mosaic.version = 11 : i64} {
  func.func @kernel(%arg0: i32, %arg1: i32, %arg2: i32, %arg3: memref<32x192xf32, #tpu.memory_space<vmem>>, %arg4: memref<192x128xbf16, #tpu.memory_space<vmem>>, %arg5: memref<1x128xf32, #tpu.memory_space<vmem>>, %arg6: memref<32x128xf32, #tpu.memory_space<vmem>>, %arg7: memref<32x128xf32, #tpu.memory_space<vmem>>) attributes {dimension_semantics = [#tpu.dimension_semantics<parallel>, #tpu.dimension_semantics<parallel>, #tpu.dimension_semantics<arbitrary>], iteration_bounds = array<i64: 1, 1, 1>, scalar_prefetch = 0 : i64, scratch_operands = 1 : i64, tpu.core_type = #tpu.core_type<tc>, window_params = [{transform_indices = @transform_0, window_bounds = array<i64: 32, 192>}, {transform_indices = @transform_1, window_bounds = array<i64: 192, 128>}, {transform_indices = @transform_2, window_bounds = array<i64: 1, 128>}, {transform_indices = @transform_3, window_bounds = array<i64: 32, 128>}]} {
    %c0_i32 = arith.constant 0 : i32
    %0 = arith.cmpi eq, %arg2, %c0_i32 : i32
    %1 = arith.extui %0 : i1 to i32
    %c0_i32_0 = arith.constant 0 : i32
    %2 = arith.cmpi ne, %1, %c0_i32_0 : i32
    scf.if %2 {
      %cst_10 = arith.constant 0.000000e+00 : f32
      %13 = vector.broadcast %cst_10 : f32 to vector<32x128xf32>
      %c0_11 = arith.constant 0 : index
      %c0_12 = arith.constant 0 : index
      %14 = vector.load %arg7[%c0_11, %c0_12] : memref<32x128xf32, #tpu.memory_space<vmem>>, vector<32x128xf32>
      tpu.vector_store %arg7[%c0_11, %c0_12], %13 {strides = array<i32>} : memref<32x128xf32, #tpu.memory_space<vmem>>, vector<32x128xf32>,
    } else {
    }
    %c0 = arith.constant 0 : index
    %c0_1 = arith.constant 0 : index
    %3 = vector.load %arg3[%c0, %c0_1] : memref<32x192xf32, #tpu.memory_space<vmem>>, vector<32x192xf32>
    %c0_2 = arith.constant 0 : index
    %c0_3 = arith.constant 0 : index
    %4 = vector.load %arg7[%c0_2, %c0_3] : memref<32x128xf32, #tpu.memory_space<vmem>>, vector<32x128xf32>
    %5 = arith.truncf %3 : vector<32x192xf32> to vector<32x192xbf16>
    %c0_4 = arith.constant 0 : index
    %c0_5 = arith.constant 0 : index
    %6 = vector.load %arg4[%c0_4, %c0_5] : memref<192x128xbf16, #tpu.memory_space<vmem>>, vector<192x128xbf16>
    %cst = arith.constant dense<0.000000e+00> : vector<32x128xf32>
    %7 = tpu.matmul %5, %6, %cst {dimension_numbers = #tpu.dot_dimension_numbers<[1], [0], [0], [1], [0, 0, 1, 1], [], []>} : vector<32x192xbf16>, vector<192x128xbf16>, vector<32x128xf32> -> vector<32x128xf32>
    %8 = arith.addf %4, %7 : vector<32x128xf32>
    %c0_6 = arith.constant 0 : index
    %c0_7 = arith.constant 0 : index
    %9 = vector.load %arg7[%c0_6, %c0_7] : memref<32x128xf32, #tpu.memory_space<vmem>>, vector<32x128xf32>
    tpu.vector_store %arg7[%c0_6, %c0_7], %8 {strides = array<i32>} : memref<32x128xf32, #tpu.memory_space<vmem>>, vector<32x128xf32>,
    %c0_i32_8 = arith.constant 0 : i32
    %10 = arith.cmpi eq, %arg2, %c0_i32_8 : i32
    %11 = arith.extui %10 : i1 to i32
    %c0_i32_9 = arith.constant 0 : i32
    %12 = arith.cmpi ne, %11, %c0_i32_9 : i32
    scf.if %12 {
      %c0_10 = arith.constant 0 : index
      %c0_11 = arith.constant 0 : index
      %13 = vector.load %arg7[%c0_10, %c0_11] : memref<32x128xf32, #tpu.memory_space<vmem>>, vector<32x128xf32>
      %c0_12 = arith.constant 0 : index
      %c0_13 = arith.constant 0 : index
      %14 = vector.load %arg5[%c0_12, %c0_13] : memref<1x128xf32, #tpu.memory_space<vmem>>, vector<1x128xf32>
      %15 = vector.broadcast %14 : vector<1x128xf32> to vector<32x128xf32>
      %16 = arith.addf %13, %15 : vector<32x128xf32>
      %c0_14 = arith.constant 0 : index
      %c0_15 = arith.constant 0 : index
      %17 = vector.load %arg6[%c0_14, %c0_15] : memref<32x128xf32, #tpu.memory_space<vmem>>, vector<32x128xf32>
      tpu.vector_store %arg6[%c0_14, %c0_15], %16 {strides = array<i32>} : memref<32x128xf32, #tpu.memory_space<vmem>>, vector<32x128xf32>,
    } else {
    }
    return
  }
  func.func @transform_0(%arg0: i32, %arg1: i32, %arg2: i32) -> (i32, i32) {
    %c0_i32 = arith.constant 0 : i32
    return %arg0, %arg2 : i32, i32
  }
  func.func @transform_1(%arg0: i32, %arg1: i32, %arg2: i32) -> (i32, i32) {
    %c0_i32 = arith.constant 0 : i32
    return %arg2, %arg1 : i32, i32
  }
  func.func @transform_2(%arg0: i32, %arg1: i32, %arg2: i32) -> (i32, i32) {
    %c0_i32 = arith.constant 0 : i32
    %c0_i32_0 = arith.constant 0 : i32
    return %c0_i32, %arg1 : i32, i32
  }
  func.func @transform_3(%arg0: i32, %arg1: i32, %arg2: i32) -> (i32, i32) {
    %c0_i32 = arith.constant 0 : i32
    return %arg0, %arg1 : i32, i32
  }
}

module attributes {stable_mosaic.version = 11 : i64} {
  func.func @kernel(%arg0: i32, %arg1: i32, %arg2: i32, %arg3: memref<40x128xf32, #tpu.memory_space<vmem>>, %arg4: memref<128x256xbf16, #tpu.memory_space<vmem>>, %arg5: memref<1x256xf32, #tpu.memory_space<vmem>>, %arg6: memref<1x128xf32, #tpu.memory_space<vmem>>, %arg7: memref<1x128xf32, #tpu.memory_space<vmem>>, %arg8: memref<40x256xf32, #tpu.memory_space<vmem>>, %arg9: memref<40x256xf32, #tpu.memory_space<vmem>>) attributes {dimension_semantics = [#tpu.dimension_semantics<parallel>, #tpu.dimension_semantics<parallel>, #tpu.dimension_semantics<arbitrary>], iteration_bounds = array<i64: 1, 2, 1>, scalar_prefetch = 0 : i64, scratch_operands = 1 : i64, tpu.core_type = #tpu.core_type<tc>, window_params = [{transform_indices = @transform_0, window_bounds = array<i64: 40, 128>}, {transform_indices = @transform_1, window_bounds = array<i64: 128, 256>}, {transform_indices = @transform_2, window_bounds = array<i64: 1, 256>}, {transform_indices = @transform_3, window_bounds = array<i64: 1, 128>}, {transform_indices = @transform_4, window_bounds = array<i64: 1, 128>}, {transform_indices = @transform_5, window_bounds = array<i64: 40, 256>}]} {
    %c0_i32 = arith.constant 0 : i32
    %0 = arith.cmpi eq, %arg2, %c0_i32 : i32
    %1 = arith.extui %0 : i1 to i32
    %c0_i32_0 = arith.constant 0 : i32
    %2 = arith.cmpi ne, %1, %c0_i32_0 : i32
    scf.if %2 {
      %cst_19 = arith.constant 0.000000e+00 : f32
      %37 = vector.broadcast %cst_19 : f32 to vector<40x256xf32>
      %c0_20 = arith.constant 0 : index
      %c0_21 = arith.constant 0 : index
      %38 = vector.load %arg9[%c0_20, %c0_21] : memref<40x256xf32, #tpu.memory_space<vmem>>, vector<40x256xf32>
      tpu.vector_store %arg9[%c0_20, %c0_21], %37 {strides = array<i32>} : memref<40x256xf32, #tpu.memory_space<vmem>>, vector<40x256xf32>,
    } else {
    }
    %c0 = arith.constant 0 : index
    %c0_1 = arith.constant 0 : index
    %3 = vector.load %arg3[%c0, %c0_1] : memref<40x128xf32, #tpu.memory_space<vmem>>, vector<40x128xf32>
    %cst = arith.constant dense<0.000000e+00> : vector<40xf32>
    %4 = vector.multi_reduction <add>, %3, %cst [1] : vector<40x128xf32> to vector<40xf32>
    %5 = vector.shape_cast %4 : vector<40xf32> to vector<40x1xf32>
    %cst_2 = arith.constant 1.280000e+02 : f32
    %6 = vector.broadcast %cst_2 : f32 to vector<40x1xf32>
    %7 = arith.divf %5, %6 : vector<40x1xf32>
    %8 = vector.broadcast %7 : vector<40x1xf32> to vector<40x128xf32>
    %9 = arith.subf %3, %8 : vector<40x128xf32>
    %10 = arith.mulf %9, %9 : vector<40x128xf32>
    %cst_3 = arith.constant dense<0.000000e+00> : vector<40xf32>
    %11 = vector.multi_reduction <add>, %10, %cst_3 [1] : vector<40x128xf32> to vector<40xf32>
    %12 = vector.shape_cast %11 : vector<40xf32> to vector<40x1xf32>
    %cst_4 = arith.constant 1.280000e+02 : f32
    %13 = vector.broadcast %cst_4 : f32 to vector<40x1xf32>
    %14 = arith.divf %12, %13 : vector<40x1xf32>
    %15 = vector.broadcast %7 : vector<40x1xf32> to vector<40x128xf32>
    %16 = arith.subf %3, %15 : vector<40x128xf32>
    %cst_5 = arith.constant 9.99999997E-7 : f32
    %17 = vector.broadcast %cst_5 : f32 to vector<40x1xf32>
    %18 = arith.addf %14, %17 : vector<40x1xf32>
    %19 = math.rsqrt %18 : vector<40x1xf32>
    %20 = vector.broadcast %19 : vector<40x1xf32> to vector<40x128xf32>
    %21 = arith.mulf %16, %20 : vector<40x128xf32>
    %c0_6 = arith.constant 0 : index
    %c0_7 = arith.constant 0 : index
    %22 = vector.load %arg6[%c0_6, %c0_7] : memref<1x128xf32, #tpu.memory_space<vmem>>, vector<1x128xf32>
    %23 = vector.broadcast %22 : vector<1x128xf32> to vector<40x128xf32>
    %24 = arith.mulf %21, %23 : vector<40x128xf32>
    %c0_8 = arith.constant 0 : index
    %c0_9 = arith.constant 0 : index
    %25 = vector.load %arg7[%c0_8, %c0_9] : memref<1x128xf32, #tpu.memory_space<vmem>>, vector<1x128xf32>
    %26 = vector.broadcast %25 : vector<1x128xf32> to vector<40x128xf32>
    %27 = arith.addf %24, %26 : vector<40x128xf32>
    %c0_10 = arith.constant 0 : index
    %c0_11 = arith.constant 0 : index
    %28 = vector.load %arg9[%c0_10, %c0_11] : memref<40x256xf32, #tpu.memory_space<vmem>>, vector<40x256xf32>
    %29 = arith.truncf %27 : vector<40x128xf32> to vector<40x128xbf16>
    %c0_12 = arith.constant 0 : index
    %c0_13 = arith.constant 0 : index
    %30 = vector.load %arg4[%c0_12, %c0_13] : memref<128x256xbf16, #tpu.memory_space<vmem>>, vector<128x256xbf16>
    %cst_14 = arith.constant dense<0.000000e+00> : vector<40x256xf32>
    %31 = tpu.matmul %29, %30, %cst_14 {dimension_numbers = #tpu.dot_dimension_numbers<[1], [0], [0], [1], [0, 0, 1, 1], [], []>} : vector<40x128xbf16>, vector<128x256xbf16>, vector<40x256xf32> -> vector<40x256xf32>
    %32 = arith.addf %28, %31 : vector<40x256xf32>
    %c0_15 = arith.constant 0 : index
    %c0_16 = arith.constant 0 : index
    %33 = vector.load %arg9[%c0_15, %c0_16] : memref<40x256xf32, #tpu.memory_space<vmem>>, vector<40x256xf32>
    tpu.vector_store %arg9[%c0_15, %c0_16], %32 {strides = array<i32>} : memref<40x256xf32, #tpu.memory_space<vmem>>, vector<40x256xf32>,
    %c0_i32_17 = arith.constant 0 : i32
    %34 = arith.cmpi eq, %arg2, %c0_i32_17 : i32
    %35 = arith.extui %34 : i1 to i32
    %c0_i32_18 = arith.constant 0 : i32
    %36 = arith.cmpi ne, %35, %c0_i32_18 : i32
    scf.if %36 {
      %c0_19 = arith.constant 0 : index
      %c0_20 = arith.constant 0 : index
      %37 = vector.load %arg9[%c0_19, %c0_20] : memref<40x256xf32, #tpu.memory_space<vmem>>, vector<40x256xf32>
      %c0_21 = arith.constant 0 : index
      %c0_22 = arith.constant 0 : index
      %38 = vector.load %arg5[%c0_21, %c0_22] : memref<1x256xf32, #tpu.memory_space<vmem>>, vector<1x256xf32>
      %39 = vector.broadcast %38 : vector<1x256xf32> to vector<40x256xf32>
      %40 = arith.addf %37, %39 : vector<40x256xf32>
      %c0_23 = arith.constant 0 : index
      %c0_24 = arith.constant 0 : index
      %41 = vector.load %arg8[%c0_23, %c0_24] : memref<40x256xf32, #tpu.memory_space<vmem>>, vector<40x256xf32>
      tpu.vector_store %arg8[%c0_23, %c0_24], %40 {strides = array<i32>} : memref<40x256xf32, #tpu.memory_space<vmem>>, vector<40x256xf32>,
    } else {
    }
    return
  }
  func.func @transform_0(%arg0: i32, %arg1: i32, %arg2: i32) -> (i32, i32) {
    %c0_i32 = arith.constant 0 : i32
    return %arg0, %arg2 : i32, i32
  }
  func.func @transform_1(%arg0: i32, %arg1: i32, %arg2: i32) -> (i32, i32) {
    %c0_i32 = arith.constant 0 : i32
    return %arg2, %arg1 : i32, i32
  }
  func.func @transform_2(%arg0: i32, %arg1: i32, %arg2: i32) -> (i32, i32) {
    %c0_i32 = arith.constant 0 : i32
    %c0_i32_0 = arith.constant 0 : i32
    return %c0_i32, %arg1 : i32, i32
  }
  func.func @transform_3(%arg0: i32, %arg1: i32, %arg2: i32) -> (i32, i32) {
    %c0_i32 = arith.constant 0 : i32
    %c0_i32_0 = arith.constant 0 : i32
    return %c0_i32, %arg2 : i32, i32
  }
  func.func @transform_4(%arg0: i32, %arg1: i32, %arg2: i32) -> (i32, i32) {
    %c0_i32 = arith.constant 0 : i32
    %c0_i32_0 = arith.constant 0 : i32
    return %c0_i32, %arg2 : i32, i32
  }
  func.func @transform_5(%arg0: i32, %arg1: i32, %arg2: i32) -> (i32, i32) {
    %c0_i32 = arith.constant 0 : i32
    return %arg0, %arg1 : i32, i32
  }
}

module attributes {stable_mosaic.version = 11 : i64} {
  func.func @_attention_kernel(%arg0: i32, %arg1: memref<1x17x384xf32, #tpu.memory_space<vmem>>, %arg2: memref<1x17x128xf32, #tpu.memory_space<vmem>>) attributes {dimension_semantics = [#tpu.dimension_semantics<parallel>], iteration_bounds = array<i64: 2>, scalar_prefetch = 0 : i64, scratch_operands = 0 : i64, tpu.core_type = #tpu.core_type<tc>, window_params = [{transform_indices = @transform_0, window_bounds = array<i64: 1, 17, 384>}, {transform_indices = @transform_1, window_bounds = array<i64: 1, 17, 128>}]} {
    %c0 = arith.constant 0 : index
    %c0_0 = arith.constant 0 : index
    %c0_1 = arith.constant 0 : index
    %0 = vector.load %arg1[%c0, %c0_0, %c0_1] : memref<1x17x384xf32, #tpu.memory_space<vmem>>, vector<1x17x384xf32>
    %1 = vector.shape_cast %0 : vector<1x17x384xf32> to vector<17x384xf32>
    %2 = vector.extract_strided_slice %1 {offsets = [0, 0], sizes = [17, 64], strides = [1, 1]} : vector<17x384xf32> to vector<17x64xf32>
    %cst = arith.constant 1.250000e-01 : f32
    %3 = vector.broadcast %cst : f32 to vector<17x64xf32>
    %4 = arith.mulf %2, %3 : vector<17x64xf32>
    %5 = vector.extract_strided_slice %1 {offsets = [0, 128], sizes = [17, 64], strides = [1, 1]} : vector<17x384xf32> to vector<17x64xf32>
    %6 = vector.extract_strided_slice %1 {offsets = [0, 256], sizes = [17, 64], strides = [1, 1]} : vector<17x384xf32> to vector<17x64xf32>
    %7 = arith.truncf %4 : vector<17x64xf32> to vector<17x64xbf16>
    %8 = arith.truncf %5 : vector<17x64xf32> to vector<17x64xbf16>
    %cst_2 = arith.constant dense<0.000000e+00> : vector<17x17xf32>
    %9 = tpu.matmul %7, %8, %cst_2 {dimension_numbers = #tpu.dot_dimension_numbers<[1], [1], [0], [0], [0, 0, 1, 0], [], []>} : vector<17x64xbf16>, vector<17x64xbf16>, vector<17x17xf32> -> vector<17x17xf32>
    %cst_3 = arith.constant dense<0xFF800000> : vector<17xf32>
    %10 = vector.multi_reduction <maximumf>, %9, %cst_3 [1] : vector<17x17xf32> to vector<17xf32>
    %11 = vector.shape_cast %10 : vector<17xf32> to vector<17x1xf32>
    %12 = vector.broadcast %11 : vector<17x1xf32> to vector<17x17xf32>
    %13 = arith.subf %9, %12 : vector<17x17xf32>
    %14 = math.exp %13 : vector<17x17xf32>
    %cst_4 = arith.constant dense<0.000000e+00> : vector<17xf32>
    %15 = vector.multi_reduction <add>, %14, %cst_4 [1] : vector<17x17xf32> to vector<17xf32>
    %16 = vector.shape_cast %15 : vector<17xf32> to vector<17x1xf32>
    %17 = tpu.reciprocal %16 {approx = true} : vector<17x1xf32> -> vector<17x1xf32>
    %18 = vector.broadcast %17 : vector<17x1xf32> to vector<17x17xf32>
    %19 = arith.mulf %14, %18 : vector<17x17xf32>
    %20 = arith.truncf %19 : vector<17x17xf32> to vector<17x17xbf16>
    %21 = arith.truncf %6 : vector<17x64xf32> to vector<17x64xbf16>
    %cst_5 = arith.constant dense<0.000000e+00> : vector<17x64xf32>
    %22 = tpu.matmul %20, %21, %cst_5 {dimension_numbers = #tpu.dot_dimension_numbers<[1], [0], [0], [1], [0, 0, 1, 1], [], []>} : vector<17x17xbf16>, vector<17x64xbf16>, vector<17x64xf32> -> vector<17x64xf32>
    %23 = vector.extract_strided_slice %1 {offsets = [0, 64], sizes = [17, 64], strides = [1, 1]} : vector<17x384xf32> to vector<17x64xf32>
    %cst_6 = arith.constant 1.250000e-01 : f32
    %24 = vector.broadcast %cst_6 : f32 to vector<17x64xf32>
    %25 = arith.mulf %23, %24 : vector<17x64xf32>
    %26 = vector.extract_strided_slice %1 {offsets = [0, 192], sizes = [17, 64], strides = [1, 1]} : vector<17x384xf32> to vector<17x64xf32>
    %27 = vector.extract_strided_slice %1 {offsets = [0, 320], sizes = [17, 64], strides = [1, 1]} : vector<17x384xf32> to vector<17x64xf32>
    %28 = arith.truncf %25 : vector<17x64xf32> to vector<17x64xbf16>
    %29 = arith.truncf %26 : vector<17x64xf32> to vector<17x64xbf16>
    %cst_7 = arith.constant dense<0.000000e+00> : vector<17x17xf32>
    %30 = tpu.matmul %28, %29, %cst_7 {dimension_numbers = #tpu.dot_dimension_numbers<[1], [1], [0], [0], [0, 0, 1, 0], [], []>} : vector<17x64xbf16>, vector<17x64xbf16>, vector<17x17xf32> -> vector<17x17xf32>
    %cst_8 = arith.constant dense<0xFF800000> : vector<17xf32>
    %31 = vector.multi_reduction <maximumf>, %30, %cst_8 [1] : vector<17x17xf32> to vector<17xf32>
    %32 = vector.shape_cast %31 : vector<17xf32> to vector<17x1xf32>
    %33 = vector.broadcast %32 : vector<17x1xf32> to vector<17x17xf32>
    %34 = arith.subf %30, %33 : vector<17x17xf32>
    %35 = math.exp %34 : vector<17x17xf32>
    %cst_9 = arith.constant dense<0.000000e+00> : vector<17xf32>
    %36 = vector.multi_reduction <add>, %35, %cst_9 [1] : vector<17x17xf32> to vector<17xf32>
    %37 = vector.shape_cast %36 : vector<17xf32> to vector<17x1xf32>
    %38 = tpu.reciprocal %37 {approx = true} : vector<17x1xf32> -> vector<17x1xf32>
    %39 = vector.broadcast %38 : vector<17x1xf32> to vector<17x17xf32>
    %40 = arith.mulf %35, %39 : vector<17x17xf32>
    %41 = arith.truncf %40 : vector<17x17xf32> to vector<17x17xbf16>
    %42 = arith.truncf %27 : vector<17x64xf32> to vector<17x64xbf16>
    %cst_10 = arith.constant dense<0.000000e+00> : vector<17x64xf32>
    %43 = tpu.matmul %41, %42, %cst_10 {dimension_numbers = #tpu.dot_dimension_numbers<[1], [0], [0], [1], [0, 0, 1, 1], [], []>} : vector<17x17xbf16>, vector<17x64xbf16>, vector<17x64xf32> -> vector<17x64xf32>
    %44 = tpu.concatenate %22, %43 in 1 : vector<17x64xf32>, vector<17x64xf32> -> vector<17x128xf32>
    %c0_11 = arith.constant 0 : index
    %c0_12 = arith.constant 0 : index
    %c0_13 = arith.constant 0 : index
    %45 = vector.load %arg2[%c0_11, %c0_12, %c0_13] : memref<1x17x128xf32, #tpu.memory_space<vmem>>, vector<1x17x128xf32>
    %46 = vector.shape_cast %45 : vector<1x17x128xf32> to vector<17x128xf32>
    %47 = vector.shape_cast %44 : vector<17x128xf32> to vector<1x17x128xf32>
    tpu.vector_store %arg2[%c0_11, %c0_12, %c0_13], %47 {strides = array<i32>} : memref<1x17x128xf32, #tpu.memory_space<vmem>>, vector<1x17x128xf32>,
    return
  }
  func.func @transform_0(%arg0: i32) -> (i32, i32, i32) {
    %c0_i32 = arith.constant 0 : i32
    %c0_i32_0 = arith.constant 0 : i32
    %c0_i32_1 = arith.constant 0 : i32
    return %arg0, %c0_i32, %c0_i32_0 : i32, i32, i32
  }
  func.func @transform_1(%arg0: i32) -> (i32, i32, i32) {
    %c0_i32 = arith.constant 0 : i32
    %c0_i32_0 = arith.constant 0 : i32
    %c0_i32_1 = arith.constant 0 : i32
    return %arg0, %c0_i32, %c0_i32_0 : i32, i32, i32
  }
}

module attributes {stable_mosaic.version = 11 : i64} {
  func.func @kernel(%arg0: i32, %arg1: i32, %arg2: i32, %arg3: memref<40x128xf32, #tpu.memory_space<vmem>>, %arg4: memref<128x128xbf16, #tpu.memory_space<vmem>>, %arg5: memref<1x128xf32, #tpu.memory_space<vmem>>, %arg6: memref<40x128xf32, #tpu.memory_space<vmem>>, %arg7: memref<40x128xf32, #tpu.memory_space<vmem>>, %arg8: memref<40x128xf32, #tpu.memory_space<vmem>>) attributes {dimension_semantics = [#tpu.dimension_semantics<parallel>, #tpu.dimension_semantics<parallel>, #tpu.dimension_semantics<arbitrary>], iteration_bounds = array<i64: 1, 1, 1>, scalar_prefetch = 0 : i64, scratch_operands = 1 : i64, tpu.core_type = #tpu.core_type<tc>, window_params = [{transform_indices = @transform_0, window_bounds = array<i64: 40, 128>}, {transform_indices = @transform_1, window_bounds = array<i64: 128, 128>}, {transform_indices = @transform_2, window_bounds = array<i64: 1, 128>}, {transform_indices = @transform_3, window_bounds = array<i64: 40, 128>}, {transform_indices = @transform_4, window_bounds = array<i64: 40, 128>}]} {
    %c0_i32 = arith.constant 0 : i32
    %0 = arith.cmpi eq, %arg2, %c0_i32 : i32
    %1 = arith.extui %0 : i1 to i32
    %c0_i32_0 = arith.constant 0 : i32
    %2 = arith.cmpi ne, %1, %c0_i32_0 : i32
    scf.if %2 {
      %cst_10 = arith.constant 0.000000e+00 : f32
      %13 = vector.broadcast %cst_10 : f32 to vector<40x128xf32>
      %c0_11 = arith.constant 0 : index
      %c0_12 = arith.constant 0 : index
      %14 = vector.load %arg8[%c0_11, %c0_12] : memref<40x128xf32, #tpu.memory_space<vmem>>, vector<40x128xf32>
      tpu.vector_store %arg8[%c0_11, %c0_12], %13 {strides = array<i32>} : memref<40x128xf32, #tpu.memory_space<vmem>>, vector<40x128xf32>,
    } else {
    }
    %c0 = arith.constant 0 : index
    %c0_1 = arith.constant 0 : index
    %3 = vector.load %arg3[%c0, %c0_1] : memref<40x128xf32, #tpu.memory_space<vmem>>, vector<40x128xf32>
    %c0_2 = arith.constant 0 : index
    %c0_3 = arith.constant 0 : index
    %4 = vector.load %arg8[%c0_2, %c0_3] : memref<40x128xf32, #tpu.memory_space<vmem>>, vector<40x128xf32>
    %5 = arith.truncf %3 : vector<40x128xf32> to vector<40x128xbf16>
    %c0_4 = arith.constant 0 : index
    %c0_5 = arith.constant 0 : index
    %6 = vector.load %arg4[%c0_4, %c0_5] : memref<128x128xbf16, #tpu.memory_space<vmem>>, vector<128x128xbf16>
    %cst = arith.constant dense<0.000000e+00> : vector<40x128xf32>
    %7 = tpu.matmul %5, %6, %cst {dimension_numbers = #tpu.dot_dimension_numbers<[1], [0], [0], [1], [0, 0, 1, 1], [], []>} : vector<40x128xbf16>, vector<128x128xbf16>, vector<40x128xf32> -> vector<40x128xf32>
    %8 = arith.addf %4, %7 : vector<40x128xf32>
    %c0_6 = arith.constant 0 : index
    %c0_7 = arith.constant 0 : index
    %9 = vector.load %arg8[%c0_6, %c0_7] : memref<40x128xf32, #tpu.memory_space<vmem>>, vector<40x128xf32>
    tpu.vector_store %arg8[%c0_6, %c0_7], %8 {strides = array<i32>} : memref<40x128xf32, #tpu.memory_space<vmem>>, vector<40x128xf32>,
    %c0_i32_8 = arith.constant 0 : i32
    %10 = arith.cmpi eq, %arg2, %c0_i32_8 : i32
    %11 = arith.extui %10 : i1 to i32
    %c0_i32_9 = arith.constant 0 : i32
    %12 = arith.cmpi ne, %11, %c0_i32_9 : i32
    scf.if %12 {
      %c0_10 = arith.constant 0 : index
      %c0_11 = arith.constant 0 : index
      %13 = vector.load %arg8[%c0_10, %c0_11] : memref<40x128xf32, #tpu.memory_space<vmem>>, vector<40x128xf32>
      %c0_12 = arith.constant 0 : index
      %c0_13 = arith.constant 0 : index
      %14 = vector.load %arg5[%c0_12, %c0_13] : memref<1x128xf32, #tpu.memory_space<vmem>>, vector<1x128xf32>
      %15 = vector.broadcast %14 : vector<1x128xf32> to vector<40x128xf32>
      %16 = arith.addf %13, %15 : vector<40x128xf32>
      %c0_14 = arith.constant 0 : index
      %c0_15 = arith.constant 0 : index
      %17 = vector.load %arg6[%c0_14, %c0_15] : memref<40x128xf32, #tpu.memory_space<vmem>>, vector<40x128xf32>
      %18 = arith.addf %16, %17 : vector<40x128xf32>
      %c0_16 = arith.constant 0 : index
      %c0_17 = arith.constant 0 : index
      %19 = vector.load %arg7[%c0_16, %c0_17] : memref<40x128xf32, #tpu.memory_space<vmem>>, vector<40x128xf32>
      tpu.vector_store %arg7[%c0_16, %c0_17], %18 {strides = array<i32>} : memref<40x128xf32, #tpu.memory_space<vmem>>, vector<40x128xf32>,
    } else {
    }
    return
  }
  func.func @transform_0(%arg0: i32, %arg1: i32, %arg2: i32) -> (i32, i32) {
    %c0_i32 = arith.constant 0 : i32
    return %arg0, %arg2 : i32, i32
  }
  func.func @transform_1(%arg0: i32, %arg1: i32, %arg2: i32) -> (i32, i32) {
    %c0_i32 = arith.constant 0 : i32
    return %arg2, %arg1 : i32, i32
  }
  func.func @transform_2(%arg0: i32, %arg1: i32, %arg2: i32) -> (i32, i32) {
    %c0_i32 = arith.constant 0 : i32
    %c0_i32_0 = arith.constant 0 : i32
    return %c0_i32, %arg1 : i32, i32
  }
  func.func @transform_3(%arg0: i32, %arg1: i32, %arg2: i32) -> (i32, i32) {
    %c0_i32 = arith.constant 0 : i32
    return %arg0, %arg1 : i32, i32
  }
  func.func @transform_4(%arg0: i32, %arg1: i32, %arg2: i32) -> (i32, i32) {
    %c0_i32 = arith.constant 0 : i32
    return %arg0, %arg1 : i32, i32
  }
}

module attributes {stable_mosaic.version = 11 : i64} {
  func.func @kernel(%arg0: i32, %arg1: i32, %arg2: i32, %arg3: memref<40x128xf32, #tpu.memory_space<vmem>>, %arg4: memref<128x256xbf16, #tpu.memory_space<vmem>>, %arg5: memref<1x256xf32, #tpu.memory_space<vmem>>, %arg6: memref<1x128xf32, #tpu.memory_space<vmem>>, %arg7: memref<1x128xf32, #tpu.memory_space<vmem>>, %arg8: memref<40x256xf32, #tpu.memory_space<vmem>>, %arg9: memref<40x256xf32, #tpu.memory_space<vmem>>) attributes {dimension_semantics = [#tpu.dimension_semantics<parallel>, #tpu.dimension_semantics<parallel>, #tpu.dimension_semantics<arbitrary>], iteration_bounds = array<i64: 1, 1, 1>, scalar_prefetch = 0 : i64, scratch_operands = 1 : i64, tpu.core_type = #tpu.core_type<tc>, window_params = [{transform_indices = @transform_0, window_bounds = array<i64: 40, 128>}, {transform_indices = @transform_1, window_bounds = array<i64: 128, 256>}, {transform_indices = @transform_2, window_bounds = array<i64: 1, 256>}, {transform_indices = @transform_3, window_bounds = array<i64: 1, 128>}, {transform_indices = @transform_4, window_bounds = array<i64: 1, 128>}, {transform_indices = @transform_5, window_bounds = array<i64: 40, 256>}]} {
    %c0_i32 = arith.constant 0 : i32
    %0 = arith.cmpi eq, %arg2, %c0_i32 : i32
    %1 = arith.extui %0 : i1 to i32
    %c0_i32_0 = arith.constant 0 : i32
    %2 = arith.cmpi ne, %1, %c0_i32_0 : i32
    scf.if %2 {
      %cst_19 = arith.constant 0.000000e+00 : f32
      %37 = vector.broadcast %cst_19 : f32 to vector<40x256xf32>
      %c0_20 = arith.constant 0 : index
      %c0_21 = arith.constant 0 : index
      %38 = vector.load %arg9[%c0_20, %c0_21] : memref<40x256xf32, #tpu.memory_space<vmem>>, vector<40x256xf32>
      tpu.vector_store %arg9[%c0_20, %c0_21], %37 {strides = array<i32>} : memref<40x256xf32, #tpu.memory_space<vmem>>, vector<40x256xf32>,
    } else {
    }
    %c0 = arith.constant 0 : index
    %c0_1 = arith.constant 0 : index
    %3 = vector.load %arg3[%c0, %c0_1] : memref<40x128xf32, #tpu.memory_space<vmem>>, vector<40x128xf32>
    %cst = arith.constant dense<0.000000e+00> : vector<40xf32>
    %4 = vector.multi_reduction <add>, %3, %cst [1] : vector<40x128xf32> to vector<40xf32>
    %5 = vector.shape_cast %4 : vector<40xf32> to vector<40x1xf32>
    %cst_2 = arith.constant 1.280000e+02 : f32
    %6 = vector.broadcast %cst_2 : f32 to vector<40x1xf32>
    %7 = arith.divf %5, %6 : vector<40x1xf32>
    %8 = vector.broadcast %7 : vector<40x1xf32> to vector<40x128xf32>
    %9 = arith.subf %3, %8 : vector<40x128xf32>
    %10 = arith.mulf %9, %9 : vector<40x128xf32>
    %cst_3 = arith.constant dense<0.000000e+00> : vector<40xf32>
    %11 = vector.multi_reduction <add>, %10, %cst_3 [1] : vector<40x128xf32> to vector<40xf32>
    %12 = vector.shape_cast %11 : vector<40xf32> to vector<40x1xf32>
    %cst_4 = arith.constant 1.280000e+02 : f32
    %13 = vector.broadcast %cst_4 : f32 to vector<40x1xf32>
    %14 = arith.divf %12, %13 : vector<40x1xf32>
    %15 = vector.broadcast %7 : vector<40x1xf32> to vector<40x128xf32>
    %16 = arith.subf %3, %15 : vector<40x128xf32>
    %cst_5 = arith.constant 9.99999997E-7 : f32
    %17 = vector.broadcast %cst_5 : f32 to vector<40x1xf32>
    %18 = arith.addf %14, %17 : vector<40x1xf32>
    %19 = math.rsqrt %18 : vector<40x1xf32>
    %20 = vector.broadcast %19 : vector<40x1xf32> to vector<40x128xf32>
    %21 = arith.mulf %16, %20 : vector<40x128xf32>
    %c0_6 = arith.constant 0 : index
    %c0_7 = arith.constant 0 : index
    %22 = vector.load %arg6[%c0_6, %c0_7] : memref<1x128xf32, #tpu.memory_space<vmem>>, vector<1x128xf32>
    %23 = vector.broadcast %22 : vector<1x128xf32> to vector<40x128xf32>
    %24 = arith.mulf %21, %23 : vector<40x128xf32>
    %c0_8 = arith.constant 0 : index
    %c0_9 = arith.constant 0 : index
    %25 = vector.load %arg7[%c0_8, %c0_9] : memref<1x128xf32, #tpu.memory_space<vmem>>, vector<1x128xf32>
    %26 = vector.broadcast %25 : vector<1x128xf32> to vector<40x128xf32>
    %27 = arith.addf %24, %26 : vector<40x128xf32>
    %c0_10 = arith.constant 0 : index
    %c0_11 = arith.constant 0 : index
    %28 = vector.load %arg9[%c0_10, %c0_11] : memref<40x256xf32, #tpu.memory_space<vmem>>, vector<40x256xf32>
    %29 = arith.truncf %27 : vector<40x128xf32> to vector<40x128xbf16>
    %c0_12 = arith.constant 0 : index
    %c0_13 = arith.constant 0 : index
    %30 = vector.load %arg4[%c0_12, %c0_13] : memref<128x256xbf16, #tpu.memory_space<vmem>>, vector<128x256xbf16>
    %cst_14 = arith.constant dense<0.000000e+00> : vector<40x256xf32>
    %31 = tpu.matmul %29, %30, %cst_14 {dimension_numbers = #tpu.dot_dimension_numbers<[1], [0], [0], [1], [0, 0, 1, 1], [], []>} : vector<40x128xbf16>, vector<128x256xbf16>, vector<40x256xf32> -> vector<40x256xf32>
    %32 = arith.addf %28, %31 : vector<40x256xf32>
    %c0_15 = arith.constant 0 : index
    %c0_16 = arith.constant 0 : index
    %33 = vector.load %arg9[%c0_15, %c0_16] : memref<40x256xf32, #tpu.memory_space<vmem>>, vector<40x256xf32>
    tpu.vector_store %arg9[%c0_15, %c0_16], %32 {strides = array<i32>} : memref<40x256xf32, #tpu.memory_space<vmem>>, vector<40x256xf32>,
    %c0_i32_17 = arith.constant 0 : i32
    %34 = arith.cmpi eq, %arg2, %c0_i32_17 : i32
    %35 = arith.extui %34 : i1 to i32
    %c0_i32_18 = arith.constant 0 : i32
    %36 = arith.cmpi ne, %35, %c0_i32_18 : i32
    scf.if %36 {
      %c0_19 = arith.constant 0 : index
      %c0_20 = arith.constant 0 : index
      %37 = vector.load %arg9[%c0_19, %c0_20] : memref<40x256xf32, #tpu.memory_space<vmem>>, vector<40x256xf32>
      %c0_21 = arith.constant 0 : index
      %c0_22 = arith.constant 0 : index
      %38 = vector.load %arg5[%c0_21, %c0_22] : memref<1x256xf32, #tpu.memory_space<vmem>>, vector<1x256xf32>
      %39 = vector.broadcast %38 : vector<1x256xf32> to vector<40x256xf32>
      %40 = arith.addf %37, %39 : vector<40x256xf32>
      %cst_23 = arith.constant 5.000000e-01 : f32
      %41 = vector.broadcast %cst_23 : f32 to vector<40x256xf32>
      %42 = arith.mulf %41, %40 : vector<40x256xf32>
      %cst_24 = arith.constant 0.707106769 : f32
      %43 = vector.broadcast %cst_24 : f32 to vector<40x256xf32>
      %44 = arith.mulf %40, %43 : vector<40x256xf32>
      %45 = math.erf %44 : vector<40x256xf32>
      %cst_25 = arith.constant 1.000000e+00 : f32
      %46 = vector.broadcast %cst_25 : f32 to vector<40x256xf32>
      %47 = arith.addf %46, %45 : vector<40x256xf32>
      %48 = arith.mulf %42, %47 : vector<40x256xf32>
      %c0_26 = arith.constant 0 : index
      %c0_27 = arith.constant 0 : index
      %49 = vector.load %arg8[%c0_26, %c0_27] : memref<40x256xf32, #tpu.memory_space<vmem>>, vector<40x256xf32>
      tpu.vector_store %arg8[%c0_26, %c0_27], %48 {strides = array<i32>} : memref<40x256xf32, #tpu.memory_space<vmem>>, vector<40x256xf32>,
    } else {
    }
    return
  }
  func.func @transform_0(%arg0: i32, %arg1: i32, %arg2: i32) -> (i32, i32) {
    %c0_i32 = arith.constant 0 : i32
    return %arg0, %arg2 : i32, i32
  }
  func.func @transform_1(%arg0: i32, %arg1: i32, %arg2: i32) -> (i32, i32) {
    %c0_i32 = arith.constant 0 : i32
    return %arg2, %arg1 : i32, i32
  }
  func.func @transform_2(%arg0: i32, %arg1: i32, %arg2: i32) -> (i32, i32) {
    %c0_i32 = arith.constant 0 : i32
    %c0_i32_0 = arith.constant 0 : i32
    return %c0_i32, %arg1 : i32, i32
  }
  func.func @transform_3(%arg0: i32, %arg1: i32, %arg2: i32) -> (i32, i32) {
    %c0_i32 = arith.constant 0 : i32
    %c0_i32_0 = arith.constant 0 : i32
    return %c0_i32, %arg2 : i32, i32
  }
  func.func @transform_4(%arg0: i32, %arg1: i32, %arg2: i32) -> (i32, i32) {
    %c0_i32 = arith.constant 0 : i32
    %c0_i32_0 = arith.constant 0 : i32
    return %c0_i32, %arg2 : i32, i32
  }
  func.func @transform_5(%arg0: i32, %arg1: i32, %arg2: i32) -> (i32, i32) {
    %c0_i32 = arith.constant 0 : i32
    return %arg0, %arg1 : i32, i32
  }
}

module attributes {stable_mosaic.version = 11 : i64} {
  func.func @_layernorm_kernel(%arg0: i32, %arg1: memref<40x128xf32, #tpu.memory_space<vmem>>, %arg2: memref<1x128xf32, #tpu.memory_space<vmem>>, %arg3: memref<1x128xf32, #tpu.memory_space<vmem>>, %arg4: memref<40x128xf32, #tpu.memory_space<vmem>>) attributes {dimension_semantics = [#tpu.dimension_semantics<parallel>], iteration_bounds = array<i64: 1>, scalar_prefetch = 0 : i64, scratch_operands = 0 : i64, tpu.core_type = #tpu.core_type<tc>, window_params = [{transform_indices = @transform_0, window_bounds = array<i64: 40, 128>}, {pipeline_mode = #tpu.pipeline_mode<synchronous>, transform_indices = @transform_1, window_bounds = array<i64: 1, 128>}, {pipeline_mode = #tpu.pipeline_mode<synchronous>, transform_indices = @transform_2, window_bounds = array<i64: 1, 128>}, {transform_indices = @transform_3, window_bounds = array<i64: 40, 128>}]} {
    %c0 = arith.constant 0 : index
    %c0_0 = arith.constant 0 : index
    %0 = vector.load %arg1[%c0, %c0_0] : memref<40x128xf32, #tpu.memory_space<vmem>>, vector<40x128xf32>
    %cst = arith.constant dense<0.000000e+00> : vector<40xf32>
    %1 = vector.multi_reduction <add>, %0, %cst [1] : vector<40x128xf32> to vector<40xf32>
    %2 = vector.shape_cast %1 : vector<40xf32> to vector<40x1xf32>
    %cst_1 = arith.constant 1.280000e+02 : f32
    %3 = vector.broadcast %cst_1 : f32 to vector<40x1xf32>
    %4 = arith.divf %2, %3 : vector<40x1xf32>
    %5 = vector.broadcast %4 : vector<40x1xf32> to vector<40x128xf32>
    %6 = arith.subf %0, %5 : vector<40x128xf32>
    %7 = arith.mulf %6, %6 : vector<40x128xf32>
    %cst_2 = arith.constant dense<0.000000e+00> : vector<40xf32>
    %8 = vector.multi_reduction <add>, %7, %cst_2 [1] : vector<40x128xf32> to vector<40xf32>
    %9 = vector.shape_cast %8 : vector<40xf32> to vector<40x1xf32>
    %cst_3 = arith.constant 1.280000e+02 : f32
    %10 = vector.broadcast %cst_3 : f32 to vector<40x1xf32>
    %11 = arith.divf %9, %10 : vector<40x1xf32>
    %12 = vector.broadcast %4 : vector<40x1xf32> to vector<40x128xf32>
    %13 = arith.subf %0, %12 : vector<40x128xf32>
    %cst_4 = arith.constant 9.99999997E-7 : f32
    %14 = vector.broadcast %cst_4 : f32 to vector<40x1xf32>
    %15 = arith.addf %11, %14 : vector<40x1xf32>
    %16 = math.rsqrt %15 : vector<40x1xf32>
    %17 = vector.broadcast %16 : vector<40x1xf32> to vector<40x128xf32>
    %18 = arith.mulf %13, %17 : vector<40x128xf32>
    %c0_5 = arith.constant 0 : index
    %c0_6 = arith.constant 0 : index
    %19 = vector.load %arg2[%c0_5, %c0_6] : memref<1x128xf32, #tpu.memory_space<vmem>>, vector<1x128xf32>
    %20 = vector.broadcast %19 : vector<1x128xf32> to vector<40x128xf32>
    %21 = arith.mulf %18, %20 : vector<40x128xf32>
    %c0_7 = arith.constant 0 : index
    %c0_8 = arith.constant 0 : index
    %22 = vector.load %arg3[%c0_7, %c0_8] : memref<1x128xf32, #tpu.memory_space<vmem>>, vector<1x128xf32>
    %23 = vector.broadcast %22 : vector<1x128xf32> to vector<40x128xf32>
    %24 = arith.addf %21, %23 : vector<40x128xf32>
    %c0_9 = arith.constant 0 : index
    %c0_10 = arith.constant 0 : index
    %25 = vector.load %arg4[%c0_9, %c0_10] : memref<40x128xf32, #tpu.memory_space<vmem>>, vector<40x128xf32>
    tpu.vector_store %arg4[%c0_9, %c0_10], %24 {strides = array<i32>} : memref<40x128xf32, #tpu.memory_space<vmem>>, vector<40x128xf32>,
    return
  }
  func.func @transform_0(%arg0: i32) -> (i32, i32) {
    %c0_i32 = arith.constant 0 : i32
    %c0_i32_0 = arith.constant 0 : i32
    return %arg0, %c0_i32 : i32, i32
  }
  func.func @transform_1(%arg0: i32) -> (i32, i32) {
    %c0_i32 = arith.constant 0 : i32
    %c0_i32_0 = arith.constant 0 : i32
    %c0_i32_1 = arith.constant 0 : i32
    return %c0_i32, %c0_i32_0 : i32, i32
  }
  func.func @transform_2(%arg0: i32) -> (i32, i32) {
    %c0_i32 = arith.constant 0 : i32
    %c0_i32_0 = arith.constant 0 : i32
    %c0_i32_1 = arith.constant 0 : i32
    return %c0_i32, %c0_i32_0 : i32, i32
  }
  func.func @transform_3(%arg0: i32) -> (i32, i32) {
    %c0_i32 = arith.constant 0 : i32
    %c0_i32_0 = arith.constant 0 : i32
    return %arg0, %c0_i32 : i32, i32
  }
}

module attributes {stable_mosaic.version = 11 : i64} {
  func.func @kernel(%arg0: i32, %arg1: i32, %arg2: i32, %arg3: memref<40x256xf32, #tpu.memory_space<vmem>>, %arg4: memref<256x128xbf16, #tpu.memory_space<vmem>>, %arg5: memref<1x128xf32, #tpu.memory_space<vmem>>, %arg6: memref<40x128xf32, #tpu.memory_space<vmem>>, %arg7: memref<40x128xf32, #tpu.memory_space<vmem>>, %arg8: memref<40x128xf32, #tpu.memory_space<vmem>>) attributes {dimension_semantics = [#tpu.dimension_semantics<parallel>, #tpu.dimension_semantics<parallel>, #tpu.dimension_semantics<arbitrary>], iteration_bounds = array<i64: 1, 1, 1>, scalar_prefetch = 0 : i64, scratch_operands = 1 : i64, tpu.core_type = #tpu.core_type<tc>, window_params = [{transform_indices = @transform_0, window_bounds = array<i64: 40, 256>}, {transform_indices = @transform_1, window_bounds = array<i64: 256, 128>}, {transform_indices = @transform_2, window_bounds = array<i64: 1, 128>}, {transform_indices = @transform_3, window_bounds = array<i64: 40, 128>}, {transform_indices = @transform_4, window_bounds = array<i64: 40, 128>}]} {
    %c0_i32 = arith.constant 0 : i32
    %0 = arith.cmpi eq, %arg2, %c0_i32 : i32
    %1 = arith.extui %0 : i1 to i32
    %c0_i32_0 = arith.constant 0 : i32
    %2 = arith.cmpi ne, %1, %c0_i32_0 : i32
    scf.if %2 {
      %cst_10 = arith.constant 0.000000e+00 : f32
      %13 = vector.broadcast %cst_10 : f32 to vector<40x128xf32>
      %c0_11 = arith.constant 0 : index
      %c0_12 = arith.constant 0 : index
      %14 = vector.load %arg8[%c0_11, %c0_12] : memref<40x128xf32, #tpu.memory_space<vmem>>, vector<40x128xf32>
      tpu.vector_store %arg8[%c0_11, %c0_12], %13 {strides = array<i32>} : memref<40x128xf32, #tpu.memory_space<vmem>>, vector<40x128xf32>,
    } else {
    }
    %c0 = arith.constant 0 : index
    %c0_1 = arith.constant 0 : index
    %3 = vector.load %arg3[%c0, %c0_1] : memref<40x256xf32, #tpu.memory_space<vmem>>, vector<40x256xf32>
    %c0_2 = arith.constant 0 : index
    %c0_3 = arith.constant 0 : index
    %4 = vector.load %arg8[%c0_2, %c0_3] : memref<40x128xf32, #tpu.memory_space<vmem>>, vector<40x128xf32>
    %5 = arith.truncf %3 : vector<40x256xf32> to vector<40x256xbf16>
    %c0_4 = arith.constant 0 : index
    %c0_5 = arith.constant 0 : index
    %6 = vector.load %arg4[%c0_4, %c0_5] : memref<256x128xbf16, #tpu.memory_space<vmem>>, vector<256x128xbf16>
    %cst = arith.constant dense<0.000000e+00> : vector<40x128xf32>
    %7 = tpu.matmul %5, %6, %cst {dimension_numbers = #tpu.dot_dimension_numbers<[1], [0], [0], [1], [0, 0, 1, 1], [], []>} : vector<40x256xbf16>, vector<256x128xbf16>, vector<40x128xf32> -> vector<40x128xf32>
    %8 = arith.addf %4, %7 : vector<40x128xf32>
    %c0_6 = arith.constant 0 : index
    %c0_7 = arith.constant 0 : index
    %9 = vector.load %arg8[%c0_6, %c0_7] : memref<40x128xf32, #tpu.memory_space<vmem>>, vector<40x128xf32>
    tpu.vector_store %arg8[%c0_6, %c0_7], %8 {strides = array<i32>} : memref<40x128xf32, #tpu.memory_space<vmem>>, vector<40x128xf32>,
    %c0_i32_8 = arith.constant 0 : i32
    %10 = arith.cmpi eq, %arg2, %c0_i32_8 : i32
    %11 = arith.extui %10 : i1 to i32
    %c0_i32_9 = arith.constant 0 : i32
    %12 = arith.cmpi ne, %11, %c0_i32_9 : i32
    scf.if %12 {
      %c0_10 = arith.constant 0 : index
      %c0_11 = arith.constant 0 : index
      %13 = vector.load %arg8[%c0_10, %c0_11] : memref<40x128xf32, #tpu.memory_space<vmem>>, vector<40x128xf32>
      %c0_12 = arith.constant 0 : index
      %c0_13 = arith.constant 0 : index
      %14 = vector.load %arg5[%c0_12, %c0_13] : memref<1x128xf32, #tpu.memory_space<vmem>>, vector<1x128xf32>
      %15 = vector.broadcast %14 : vector<1x128xf32> to vector<40x128xf32>
      %16 = arith.addf %13, %15 : vector<40x128xf32>
      %c0_14 = arith.constant 0 : index
      %c0_15 = arith.constant 0 : index
      %17 = vector.load %arg6[%c0_14, %c0_15] : memref<40x128xf32, #tpu.memory_space<vmem>>, vector<40x128xf32>
      %18 = arith.addf %16, %17 : vector<40x128xf32>
      %c0_16 = arith.constant 0 : index
      %c0_17 = arith.constant 0 : index
      %19 = vector.load %arg7[%c0_16, %c0_17] : memref<40x128xf32, #tpu.memory_space<vmem>>, vector<40x128xf32>
      tpu.vector_store %arg7[%c0_16, %c0_17], %18 {strides = array<i32>} : memref<40x128xf32, #tpu.memory_space<vmem>>, vector<40x128xf32>,
    } else {
    }
    return
  }
  func.func @transform_0(%arg0: i32, %arg1: i32, %arg2: i32) -> (i32, i32) {
    %c0_i32 = arith.constant 0 : i32
    return %arg0, %arg2 : i32, i32
  }
  func.func @transform_1(%arg0: i32, %arg1: i32, %arg2: i32) -> (i32, i32) {
    %c0_i32 = arith.constant 0 : i32
    return %arg2, %arg1 : i32, i32
  }
  func.func @transform_2(%arg0: i32, %arg1: i32, %arg2: i32) -> (i32, i32) {
    %c0_i32 = arith.constant 0 : i32
    %c0_i32_0 = arith.constant 0 : i32
    return %c0_i32, %arg1 : i32, i32
  }
  func.func @transform_3(%arg0: i32, %arg1: i32, %arg2: i32) -> (i32, i32) {
    %c0_i32 = arith.constant 0 : i32
    return %arg0, %arg1 : i32, i32
  }
  func.func @transform_4(%arg0: i32, %arg1: i32, %arg2: i32) -> (i32, i32) {
    %c0_i32 = arith.constant 0 : i32
    return %arg0, %arg1 : i32, i32
  }
}

</mosaic_0001>

<llo_original>
// kernel: vit_forward.12
$region0: #{vit_forward.12}
  #allocation0 [shape = 'u32[]', space=smem, size = 0x4, offset = 0x4, fixed_abs, tag = 'smem constant byte address 0x4 - core index']
  #allocation1 [shape = 'u32[144,128]{1,0:T(1,128)}', space=vmem, size = 0x12000, scoped, tag = 'internal scratch']
  #allocation2 [shape = 'f32[32,128]{1,0:T(8,128)}', space=vmem, size = 0x4000, scoped, tag = 'scratch operand']
  %s0 = inlined_call_operand.vmem [shape: f32[32,192], index: 0, kind: input, shape index: {}]
  %s1 = inlined_call_operand.vmem [shape: bf16[192,128], index: 1, kind: input, shape index: {}]
  %s2 = inlined_call_operand.vmem [shape: f32[1,128], index: 2, kind: input, shape index: {}]
  %s3 = inlined_call_operand.vmem [shape: f32[32,128], index: 3, kind: output, shape index: {}]
  %s4 = sld [smem:[#allocation0]]
  $region30: #{vit_forward.12} parent=0
    _
  %s6 = ssub.s32 1, %s4
  %s7 = scalar_select 0, %s6, %s4
  // Predicated region
  $region2: #{vit_forward.12} parent=0 // pred_check
    _
  $region3: #{vit_forward.12} parent=0 // pred_check_branch
    %9 = sbr.rel (0) target = $region5
  $region4: #{vit_forward.12} parent=0 // pred_region
    _
  $region5: #{vit_forward.12} parent=0 // pred_fallthru
    _
  // Predicated region
  $region6: #{vit_forward.12} parent=0 // pred_check
    _
  $region7: #{vit_forward.12} parent=0 // pred_check_branch
    %11 = sbr.rel (0) target = $region9
  $region8: #{vit_forward.12} parent=0 // pred_region
    _
  $region9: #{vit_forward.12} parent=0 // pred_fallthru
    _
  // Predicated region
  $region10: #{vit_forward.12} parent=0 // pred_check
    _
  $region11: #{vit_forward.12} parent=0 // pred_check_branch
    %13 = sbr.rel (0) target = $region13
  $region12: #{vit_forward.12} parent=0 // pred_region
    _
  $region13: #{vit_forward.12} parent=0 // pred_fallthru
    _
  %p15 = scmp.eq.s32.totalorder 0, 0
  // Predicated region
  $region14: #{vit_forward.12} parent=0 // pred_check
    %p16 = pneg %p15
  $region15: #{vit_forward.12} parent=0 // pred_check_branch
    %18 = sbr.rel (%p16) target = $region17
  $region16: #{vit_forward.12} parent=0 // pred_region
    %19 = vst [vmem:[#allocation2] sm:$0xff] 0.0
    %20 = vst [vmem:[#allocation2 + $0x8] sm:$0xff] 0.0
    %21 = vst [vmem:[#allocation2 + $0x10] sm:$0xff] 0.0
    %22 = vst [vmem:[#allocation2 + $0x18] sm:$0xff] 0.0
  $region17: #{vit_forward.12} parent=0 // pred_fallthru
    _
  %v23 = vld [vmem:[%s0] sm:$0xff]
  %v24 = vld [vmem:[%s0 + $0x8] sm:$0xff]
  %v25 = vld [vmem:[%s0 + $0x10] sm:$0xff]
  %v26 = vld [vmem:[%s0 + $0x18] sm:$0xff]
  %v27 = vld [vmem:[%s0 + $0x20] sm:$0xff]
  %v28 = vld [vmem:[%s0 + $0x28] sm:$0xff]
  %v29 = vld [vmem:[%s0 + $0x30] sm:$0xff]
  %v30 = vld [vmem:[%s0 + $0x38] sm:$0xff]
  %v31 = vld [vmem:[#allocation2] sm:$0xff]
  %v32 = vld [vmem:[#allocation2 + $0x8] sm:$0xff]
  %v33 = vld [vmem:[#allocation2 + $0x10] sm:$0xff]
  %v34 = vld [vmem:[#allocation2 + $0x18] sm:$0xff]
  %v35 = vpack.c.bf16 %v25, %v23
  %v36 = vpack.c.bf16 %v26, %v24
  %v37 = vpack.c.bf16 %v29, %v27
  %v38 = vpack.c.bf16 %v30, %v28
  %v39 = vld [vmem:[%s1] sm:$0xf]
  %v40 = vld [vmem:[%s1 + $0x4] sm:$0xf]
  %v41 = vld [vmem:[%s1 + $0x8] sm:$0xf]
  %v42 = vld [vmem:[%s1 + $0xc] sm:$0xf]
  %v43 = vld [vmem:[%s1 + $0x10] sm:$0xf]
  %v44 = vld [vmem:[%s1 + $0x14] sm:$0xf]
  %v45 = vld [vmem:[%s1 + $0x18] sm:$0xf]
  %v46 = vld [vmem:[%s1 + $0x1c] sm:$0xf]
  %v47 = vld [vmem:[%s1 + $0x20] sm:$0xf]
  %v48 = vld [vmem:[%s1 + $0x24] sm:$0xf]
  %v49 = vld [vmem:[%s1 + $0x28] sm:$0xf]
  %v50 = vld [vmem:[%s1 + $0x2c] sm:$0xf]
  %v51 = vld [vmem:[%s1 + $0x30] sm:$0xf]
  %v52 = vld [vmem:[%s1 + $0x34] sm:$0xf]
  %v53 = vld [vmem:[%s1 + $0x38] sm:$0xf]
  %v54 = vld [vmem:[%s1 + $0x3c] sm:$0xf]
  %v55 = vld [vmem:[%s1 + $0x40] sm:$0xf]
  %v56 = vld [vmem:[%s1 + $0x44] sm:$0xf]
  %v57 = vld [vmem:[%s1 + $0x48] sm:$0xf]
  %v58 = vld [vmem:[%s1 + $0x4c] sm:$0xf]
  %v59 = vld [vmem:[%s1 + $0x50] sm:$0xf]
  %v60 = vld [vmem:[%s1 + $0x54] sm:$0xf]
  %v61 = vld [vmem:[%s1 + $0x58] sm:$0xf]
  %v62 = vld [vmem:[%s1 + $0x5c] sm:$0xf]
  %v87 = vunpack.c.l.b16 %v39
  %v88 = vunpack.c.l.b16 %v40
  %v89 = vunpack.c.l.b16 %v41
  %v90 = vunpack.c.l.b16 %v42
  %v91 = vunpack.c.l.b16 %v43
  %v92 = vunpack.c.l.b16 %v44
  %v93 = vunpack.c.l.b16 %v45
  %v94 = vunpack.c.l.b16 %v46
  %v95 = vunpack.c.l.b16 %v47
  %v96 = vunpack.c.l.b16 %v48
  %v97 = vunpack.c.l.b16 %v49
  %v98 = vunpack.c.l.b16 %v50
  %v99 = vunpack.c.l.b16 %v51
  %v100 = vunpack.c.l.b16 %v52
  %v101 = vunpack.c.l.b16 %v53
  %v102 = vunpack.c.l.b16 %v54
  %v103 = vunpack.c.l.b16 %v55
  %v104 = vunpack.c.l.b16 %v56
  %v105 = vunpack.c.l.b16 %v57
  %v106 = vunpack.c.l.b16 %v58
  %v107 = vunpack.c.l.b16 %v59
  %v108 = vunpack.c.l.b16 %v60
  %v109 = vunpack.c.l.b16 %v61
  %v110 = vunpack.c.l.b16 %v62
  %v111 = vpack.c.b16 %v88, %v87
  %v112 = vpack.c.b16 %v90, %v89
  %v113 = vpack.c.b16 %v92, %v91
  %v114 = vpack.c.b16 %v94, %v93
  %v115 = vpack.c.b16 %v96, %v95
  %v116 = vpack.c.b16 %v98, %v97
  %v117 = vpack.c.b16 %v100, %v99
  %v118 = vpack.c.b16 %v102, %v101
  %v119 = vpack.c.b16 %v104, %v103
  %v120 = vpack.c.b16 %v106, %v105
  %v121 = vpack.c.b16 %v108, %v107
  %v122 = vpack.c.b16 %v110, %v109
  %vm135 = vcmask 523264
  %v137 = vsel %vm135, %v36, 0
  %v140 = vsel %vm135, %v38, 0
  %142 = vmatprep.subr.bf16.mxu0 0
  %143 = vmatpush1.bf16.msra.mxu0 %v111
  %144 = vmatprep.subr.bf16.mxu0 0
  %145 = vmatpush1.bf16.msra.mxu0 %v112
  %146 = vmatprep.subr.bf16.mxu0 0
  %147 = vmatpush1.bf16.msra.mxu0 %v113
  %148 = vmatprep.subr.bf16.mxu0 0
  %149 = vmatpush1.bf16.msra.mxu0 %v114
  %150 = vmatprep.subr.bf16.mxu0 0
  %151 = vmatpush1.bf16.msra.mxu0 %v115
  %152 = vmatprep.subr.bf16.mxu0 0
  %153 = vmatpush1.bf16.msra.mxu0 %v116
  %154 = vmatprep.subr.bf16.mxu0 0
  %155 = vmatpush1.bf16.msra.mxu0 %v117
  %156 = vmatprep.subr.bf16.mxu0 0
  %157 = vmatpush1.bf16.msra.mxu0 %v118
  %158 = vmatprep.subr.bf16.mxu0 0
  %159 = vmatpush1.bf16.msra.mxu0 %v119
  %160 = vmatprep.subr.bf16.mxu0 0
  %161 = vmatpush1.bf16.msra.mxu0 %v120
  %162 = vmatprep.subr.bf16.mxu0 0
  %163 = vmatpush1.bf16.msra.mxu0 %v121
  %164 = vmatprep.subr.bf16.mxu0 0
  %165 = vmatpush1.bf16.msra.mxu0 %v122
  %166 = vmatprep.subr.bf16.mxu0 0
  %167 = vmatpush1.bf16.msra.mxu0 0
  %168 = vmatprep.subr.bf16.mxu0 0
  %169 = vmatpush1.bf16.msra.mxu0 0
  %170 = vmatprep.subr.bf16.mxu0 0
  %171 = vmatpush1.bf16.msra.mxu0 0
  %172 = vmatprep.subr.bf16.mxu0 0
  %173 = vmatpush1.bf16.msra.mxu0 0
  %174 = vmatprep.mubr.bf16.mxu0 %v137
  %175 = vmatmul.mubr.bf16.gmra.mrb[0].mxu0 %v35
  %v176 = vpop.f32.mrb[0].mxu0
  %v177 = vadd.f32 0.0, %v176
  %v178 = vpop.f32.mrb[0].mxu0
  %v179 = vpop.f32.mrb[0].mxu0
  %v180 = vadd.f32 0.0, %v179
  %v181 = vpop.f32.mrb[0].mxu0
  %182 = vmatprep.mubr.bf16.mxu0 %v140
  %183 = vmatmul.mubr.bf16.gmra.mrb[0].mxu0 %v37
  %v184 = vpop.f32.mrb[0].mxu0
  %v185 = vadd.f32 0.0, %v184
  %v186 = vpop.f32.mrb[0].mxu0
  %v187 = vpop.f32.mrb[0].mxu0
  %v188 = vadd.f32 0.0, %v187
  %v189 = vpop.f32.mrb[0].mxu0
  %190 = vdwg.mxu0
  %v191 = vadd.f32 %v31, %v177
  %v192 = vadd.f32 %v32, %v180
  %v193 = vadd.f32 %v33, %v185
  %v194 = vadd.f32 %v34, %v188
  %195 = vst [vmem:[#allocation2] sm:$0xff] %v191
  %196 = vst [vmem:[#allocation2 + $0x8] sm:$0xff] %v192
  %197 = vst [vmem:[#allocation2 + $0x10] sm:$0xff] %v193
  %198 = vst [vmem:[#allocation2 + $0x18] sm:$0xff] %v194
  // Predicated region
  $region18: #{vit_forward.12} parent=0 // pred_check
    %p199 = pneg %p15
  $region19: #{vit_forward.12} parent=0 // pred_check_branch
    %201 = sbr.rel (%p199) target = $region21
  $region20: #{vit_forward.12} parent=0 // pred_region
    %v202 = vld [vmem:[#allocation2] sm:$0xff]
    %v203 = vld [vmem:[#allocation2 + $0x8] sm:$0xff]
    %v204 = vld [vmem:[#allocation2 + $0x10] sm:$0xff]
    %v205 = vld [vmem:[#allocation2 + $0x18] sm:$0xff]
    %v206 = vld [vmem:[%s2] sm:$0x1]
    %v208 = vlaneseq
    %v209 = vshrl.u32 %v208, 7
    %v210 = vsub.s32 0, %v209
    %v211 = vrot.slane %v206, %v210
    %v213 = vadd.f32 %v202, %v211
    %v214 = vadd.f32 %v203, %v211
    %v215 = vadd.f32 %v204, %v211
    %v216 = vadd.f32 %v205, %v211
    %217 = vst [vmem:[%s3] sm:$0xff] %v213
    %218 = vst [vmem:[%s3 + $0x8] sm:$0xff] %v214
    %219 = vst [vmem:[%s3 + $0x10] sm:$0xff] %v215
    %220 = vst [vmem:[%s3 + $0x18] sm:$0xff] %v216
  $region21: #{vit_forward.12} parent=0 // pred_fallthru
    _
  // Predicated region
  $region22: #{vit_forward.12} parent=0 // pred_check
    _
  $region23: #{vit_forward.12} parent=0 // pred_check_branch
    %222 = sbr.rel (0) target = $region25
  $region24: #{vit_forward.12} parent=0 // pred_region
    _
  $region25: #{vit_forward.12} parent=0 // pred_fallthru
    _
  // Predicated region
  $region26: #{vit_forward.12} parent=0 // pred_check
    _
  $region27: #{vit_forward.12} parent=0 // pred_check_branch
    %224 = sbr.rel (0) target = $region29
  $region28: #{vit_forward.12} parent=0 // pred_region
    _
  $region29: #{vit_forward.12} parent=0 // pred_fallthru
    _

// kernel: vit_forward.14
$region0: #{vit_forward.14}
  #allocation0 [shape = 'u32[]', space=smem, size = 0x4, offset = 0x4, fixed_abs, tag = 'smem constant byte address 0x4 - core index']
  #allocation1 [shape = 'u32[144,128]{1,0:T(1,128)}', space=vmem, size = 0x12000, scoped, tag = 'internal scratch']
  %s0 = inlined_call_operand.vmem [shape: f32[2,17,384], index: 0, kind: input, shape index: {}]
  %s1 = inlined_call_operand.vmem [shape: f32[2,17,128], index: 1, kind: output, shape index: {}]
  %s2 = sld [smem:[#allocation0]]
  $region37: #{vit_forward.14} parent=0
    _
  %s4 = ssub.s32 1, %s2
  %s5 = scalar_select 0, %s4, %s2
  loop: start=0, step=1, limit=4
  $region2: #{vit_forward.14} parent=0 // loop_pre_header
    _
  $region3: #{vit_forward.14} parent=0 // loop_header
    %s7 = sphi 0, %s11
    %p8 = scmp.ge.s32.totalorder %s7, 4
    %s17 = sphi 0, %s19
    %s20 = sphi 0, %s17
    %s21 = sphi 0, %s20
    %s37 = sphi 0, %s21
    %s43 = sphi 0, %s45
    %s46 = sphi 0, %s43
    %s47 = sphi 0, %s46
    %s63 = sphi 0, %s47
  $region4: #{vit_forward.14} parent=0 // loop_header_branch
    %10 = sbr.rel (%p8) target = $region8
  $region5: #{vit_forward.14} parent=0 // loop_body
    %s12 = ssub.s32 %s7, 1
    %s13 = ssub.s32 %s7, 2
    %s14 = sadd.s32 %s7, 1
    %s15 = ssub.s32 %s7, %s14
    %p16 = scmp.eq.s32.totalorder %s15, 0
    %s18 = sadd.s32 %s17, 1
    %s19 = scalar_select %p16, %s17, %s18
    %p22 = pneg %p16
    %p23 = scmp.eq.s32.totalorder %s7, 1
    %p24 = por %p22, %p23
    %p25 = scmp.ne.s32.totalorder %s17, %s20
    %p26 = scmp.eq.s32.totalorder %s7, 0
    %p27 = por %p25, %p26
    %p28 = scmp.ne.s32.totalorder %s17, %s20
    %p29 = scmp.eq.s32.totalorder %s12, 1
    %p30 = por %p28, %p29
    %p31 = scmp.ne.s32.totalorder %s20, %s21
    %p32 = scmp.eq.s32.totalorder %s12, 0
    %p33 = por %p31, %p32
    %p34 = scmp.ne.s32.totalorder %s20, %s21
    %p35 = scmp.eq.s32.totalorder %s13, 1
    %p36 = por %p34, %p35
    %p38 = scmp.ne.s32.totalorder %s21, %s37
    %p39 = scmp.eq.s32.totalorder %s13, 0
    %p40 = por %p38, %p39
    %s41 = ssub.s32 %s7, %s14
    %p42 = scmp.eq.s32.totalorder %s41, 0
    %s44 = sadd.s32 %s43, 1
    %s45 = scalar_select %p42, %s43, %s44
    %p48 = pneg %p42
    %p49 = scmp.eq.s32.totalorder %s7, 1
    %p50 = por %p48, %p49
    %p51 = scmp.ne.s32.totalorder %s43, %s46
    %p52 = scmp.eq.s32.totalorder %s7, 0
    %p53 = por %p51, %p52
    %p54 = scmp.ne.s32.totalorder %s43, %s46
    %p55 = scmp.eq.s32.totalorder %s12, 1
    %p56 = por %p54, %p55
    %p57 = scmp.ne.s32.totalorder %s46, %s47
    %p58 = scmp.eq.s32.totalorder %s12, 0
    %p59 = por %p57, %p58
    %p60 = scmp.ne.s32.totalorder %s46, %s47
    %p61 = scmp.eq.s32.totalorder %s13, 1
    %p62 = por %p60, %p61
    %p64 = scmp.ne.s32.totalorder %s47, %s63
    %p65 = scmp.eq.s32.totalorder %s13, 0
    %p66 = por %p64, %p65
    %p67 = scmp.le.s32.totalorder 1, %s7
    %p68 = scmp.lt.s32.totalorder %s7, 3
    %p69 = pnand %p67, %p68
    %p70 = pneg %p69
    // Predicated region
    $region9: #{vit_forward.14} parent=5 // pred_check
      _
    $region10: #{vit_forward.14} parent=5 // pred_check_branch
      %72 = sbr.rel (%p69) target = $region12
    $region11: #{vit_forward.14} parent=5 // pred_region
      %s73 = ssub.s32 %s7, 1
    $region12: #{vit_forward.14} parent=5 // pred_fallthru
      _
    %p74 = scmp.lt.s32.totalorder %s7, 2
    // Predicated region
    $region13: #{vit_forward.14} parent=5 // pred_check
      %p75 = pneg %p74
    $region14: #{vit_forward.14} parent=5 // pred_check_branch
      %77 = sbr.rel (%p75) target = $region16
    $region15: #{vit_forward.14} parent=5 // pred_region
      // Predicated region
      $region17: #{vit_forward.14} parent=15 // pred_check
        %p78 = pneg %p27
      $region18: #{vit_forward.14} parent=15 // pred_check_branch
        %80 = sbr.rel (%p78) target = $region20
      $region19: #{vit_forward.14} parent=15 // pred_region
        %p81 = scmp.lt.s32.totalorder %s7, 1
        %s82 = scalar_select %p81, %s7, 1
        %s83 = smul.addr %s82, 9
        %s84 = smul.addr %s83, 8
        %s85 = scalar_lea.vmem %s0, %s84
      $region20: #{vit_forward.14} parent=15 // pred_fallthru
        _
    $region16: #{vit_forward.14} parent=5 // pred_fallthru
      _
    %p86 = scmp.le.s32.totalorder 1, %s7
    %p87 = scmp.lt.s32.totalorder %s7, 3
    %p88 = pnand %p86, %p87
    %p89 = pneg %p88
    // Predicated region
    $region21: #{vit_forward.14} parent=5 // pred_check
      _
    $region22: #{vit_forward.14} parent=5 // pred_check_branch
      %91 = sbr.rel (%p88) target = $region24
    $region23: #{vit_forward.14} parent=5 // pred_region
      %s92 = ssub.s32 %s7, 1
      %p93 = scmp.lt.s32.totalorder %s12, 1
      %s94 = scalar_select %p93, %s12, 1
      %s95 = smul.addr %s94, 9
      %s96 = smul.addr %s95, 8
      %s97 = scalar_lea.vmem %s0, %s96
      %p98 = pneg %p33
      %p99 = pneg %p30
      %p100 = pneg %p59
      %p101 = pneg %p56
      %p102 = scmp.lt.s32.totalorder %s12, 1
      %s103 = scalar_select %p102, %s12, 1
      %s104 = smul.addr %s103, 3
      %s105 = smul.addr %s104, 8
      %s106 = scalar_lea.vmem %s1, %s105
      %p107 = scmp.lt.s32.totalorder %s12, 1
      %s108 = scalar_select %p107, %s12, 1
      %s109 = smul.addr %s108, 9
      %s110 = smul.addr %s109, 8
      %s111 = scalar_lea.vmem %s0, %s110
      %p112 = scmp.lt.s32.totalorder %s12, 1
      %s113 = scalar_select %p112, %s12, 1
      %s114 = smul.addr %s113, 3
      %s115 = smul.addr %s114, 8
      %s116 = scalar_lea.vmem %s1, %s115
      %v118 = vld [vmem:[%s111] sm:$0xff]
      %v119 = vld [vmem:[%s111 + $0x8] sm:$0xff]
      %v120 = vld [vmem:[%s111 + $0x10] sm:$0xff]
      %v121 = vld [vmem:[%s111 + $0x18] sm:$0xff]
      %v122 = vld [vmem:[%s111 + $0x20] sm:$0xff]
      %v123 = vld [vmem:[%s111 + $0x28] sm:$0xff]
      %v124 = vld [vmem:[%s111 + $0x30] sm:$0x1]
      %v125 = vld [vmem:[%s111 + $0x38] sm:$0x1]
      %v126 = vld [vmem:[%s111 + $0x40] sm:$0x1]
      %v127 = vmul.f32 %v118, 0.125
      %v128 = vmul.f32 %v121, 0.125
      %v129 = vmul.f32 %v124, 0.125
      %v130 = vpack.c.bf16 %v128, %v127
      %v131 = vpack.c.bf16 %v129, %v129
      %v132 = vpack.c.bf16 %v122, %v119
      %v133 = vpack.c.bf16 %v125, %v125
      %vm134 = vcmask 523264
      %v136 = vsel %vm134, %v130, 0
      %v139 = vsel %vm134, %v131, 0
      %v142 = vsel %vm134, %v132, 0
      %v145 = vsel %vm134, %v133, 0
      %147 = vmatprep.subr.bf16.mxu0 0
      %148 = vmatpush1.bf16.xpose.msra.mxu0 %v142
      %149 = vmatprep.subr.bf16.mxu0 0
      %150 = vmatpush1.bf16.xpose.msra.mxu0 %v145
      %151 = vmatprep.subr.bf16.mxu0 0
      %152 = vmatpush1.bf16.xpose.msra.mxu0 0
      %153 = vmatprep.subr.bf16.mxu0 0
      %154 = vmatpush1.bf16.xpose.msra.mxu0 0
      %155 = vmatprep.subr.bf16.mxu0 0
      %156 = vmatpush1.bf16.xpose.msra.mxu0 0
      %157 = vmatprep.subr.bf16.mxu0 0
      %158 = vmatpush1.bf16.xpose.msra.mxu0 0
      %159 = vmatprep.subr.bf16.mxu0 0
      %160 = vmatpush1.bf16.xpose.msra.mxu0 0
      %161 = vmatprep.subr.bf16.mxu0 0
      %162 = vmatpush1.bf16.xpose.msra.mxu0 0
      %163 = vmatprep.subr.bf16.mxu0 0
      %164 = vmatpush1.bf16.xpose.msra.mxu0 0
      %165 = vmatprep.subr.bf16.mxu0 0
      %166 = vmatpush1.bf16.xpose.msra.mxu0 0
      %167 = vmatprep.subr.bf16.mxu0 0
      %168 = vmatpush1.bf16.xpose.msra.mxu0 0
      %169 = vmatprep.subr.bf16.mxu0 0
      %170 = vmatpush1.bf16.xpose.msra.mxu0 0
      %171 = vmatprep.subr.bf16.mxu0 0
      %172 = vmatpush1.bf16.xpose.msra.mxu0 0
      %173 = vmatprep.subr.bf16.mxu0 0
      %174 = vmatpush1.bf16.xpose.msra.mxu0 0
      %175 = vmatprep.subr.bf16.mxu0 0
      %176 = vmatpush1.bf16.xpose.msra.mxu0 0
      %177 = vmatprep.subr.bf16.mxu0 0
      %178 = vmatpush1.bf16.xpose.msra.mxu0 0
      %179 = vmatprep.mubr.bf16.mxu0 0
      %180 = vmatmul.mubr.bf16.gmra.mrb[0].mxu0 %v136
      %v181 = vpop.f32.mrb[0].mxu0
      %v182 = vadd.f32 0.0, %v181
      %v183 = vpop.f32.mrb[0].mxu0
      %v184 = vpop.f32.mrb[0].mxu0
      %v185 = vadd.f32 0.0, %v184
      %v186 = vpop.f32.mrb[0].mxu0
      %187 = vmatprep.mubr.bf16.mxu0 0
      %188 = vmatmul.mubr.bf16.gmra.mrb[0].mxu0 %v139
      %v189 = vpop.f32.mrb[0].mxu0
      %v190 = vadd.f32 0.0, %v189
      %v191 = vpop.f32.mrb[0].mxu0
      %v192 = vpop.f32.mrb[0].mxu0
      %v193 = vpop.f32.mrb[0].mxu0
      %194 = vdwg.mxu0
      %vm195 = vcmask 138240
      %v196 = vsel %vm195, %v182, -inf
      %197 = vmax.xlane.f32.xlu0 %v196
      %v198 = vpop.xlane.xlu0 %197
      %v199 = vsel %vm195, %v185, -inf
      %200 = vmax.xlane.f32.xlu0 %v199
      %v201 = vpop.xlane.xlu0 %200
      %vm202 = vcmask 131072
      %v203 = vsel %vm202, %v190, -inf
      %204 = vmax.xlane.f32.xlu0 %v203
      %v205 = vpop.xlane.xlu0 %204
      %v206 = vsub.f32 %v182, %v198
      %v207 = vsub.f32 %v185, %v201
      %v208 = vsub.f32 %v190, %v205
      %v209 = vmul.f32 %v206, 1.442695
      %v210 = vpow.pop %v209
      %v211 = vmul.f32 %v207, 1.442695
      %v212 = vpow.pop %v211
      %v213 = vmul.f32 %v208, 1.442695
      %v214 = vpow.pop %v213
      %v215 = vsel %vm195, %v210, 0.0
      %216 = vadd.xlane.f32.xlu0 %v215
      %v217 = vpop.xlane.xlu0 %216
      %v218 = vsel %vm195, %v212, 0.0
      %219 = vadd.xlane.f32.xlu0 %v218
      %v220 = vpop.xlane.xlu0 %219
      %v221 = vsel %vm202, %v214, 0.0
      %222 = vadd.xlane.f32.xlu0 %v221
      %v223 = vpop.xlane.xlu0 %222
      %v224 = vrcp.pop %v217
      %v225 = vrcp.pop %v220
      %v226 = vrcp.pop %v223
      %v227 = vmul.f32 %v210, %v224
      %v228 = vmul.f32 %v212, %v225
      %v229 = vmul.f32 %v214, %v226
      %v230 = vpack.c.bf16 %v228, %v227
      %v231 = vpack.c.bf16 %v229, %v229
      %v232 = vpack.c.bf16 %v123, %v120
      %v233 = vpack.c.bf16 %v126, %v126
      %v235 = vsel %vm195, %v230, 0
      %v238 = vsel %vm195, %v231, 0
      %vm240 = vcmask 1040384
      %v241 = vsel 0, 4294967295, 65535
      %v242 = vsel %vm240, %v241, 0
      %v244 = vand.u32 %v233, %v242
      %246 = vmatprep.subr.bf16.mxu0 0
      %247 = vmatpush1.bf16.msra.mxu0 %v232
      %248 = vmatprep.subr.bf16.mxu0 0
      %249 = vmatpush1.bf16.msra.mxu0 %v244
      %250 = vmatprep.subr.bf16.mxu0 0
      %251 = vmatpush1.bf16.msra.mxu0 0
      %252 = vmatprep.subr.bf16.mxu0 0
      %253 = vmatpush1.bf16.msra.mxu0 0
      %254 = vmatprep.subr.bf16.mxu0 0
      %255 = vmatpush1.bf16.msra.mxu0 0
      %256 = vmatprep.subr.bf16.mxu0 0
      %257 = vmatpush1.bf16.msra.mxu0 0
      %258 = vmatprep.subr.bf16.mxu0 0
      %259 = vmatpush1.bf16.msra.mxu0 0
      %260 = vmatprep.subr.bf16.mxu0 0
      %261 = vmatpush1.bf16.msra.mxu0 0
      %262 = vmatprep.subr.bf16.mxu0 0
      %263 = vmatpush1.bf16.msra.mxu0 0
      %264 = vmatprep.subr.bf16.mxu0 0
      %265 = vmatpush1.bf16.msra.mxu0 0
      %266 = vmatprep.subr.bf16.mxu0 0
      %267 = vmatpush1.bf16.msra.mxu0 0
      %268 = vmatprep.subr.bf16.mxu0 0
      %269 = vmatpush1.bf16.msra.mxu0 0
      %270 = vmatprep.subr.bf16.mxu0 0
      %271 = vmatpush1.bf16.msra.mxu0 0
      %272 = vmatprep.subr.bf16.mxu0 0
      %273 = vmatpush1.bf16.msra.mxu0 0
      %274 = vmatprep.subr.bf16.mxu0 0
      %275 = vmatpush1.bf16.msra.mxu0 0
      %276 = vmatprep.subr.bf16.mxu0 0
      %277 = vmatpush1.bf16.msra.mxu0 0
      %278 = vmatprep.mubr.bf16.mxu0 0
      %279 = vmatmul.mubr.bf16.gmra.mrb[0].mxu0 %v235
      %v280 = vpop.f32.mrb[0].mxu0
      %v281 = vadd.f32 0.0, %v280
      %v282 = vpop.f32.mrb[0].mxu0
      %v283 = vpop.f32.mrb[0].mxu0
      %v284 = vadd.f32 0.0, %v283
      %v285 = vpop.f32.mrb[0].mxu0
      %286 = vmatprep.mubr.bf16.mxu0 0
      %287 = vmatmul.mubr.bf16.gmra.mrb[0].mxu0 %v238
      %v288 = vpop.f32.mrb[0].mxu0
      %v289 = vadd.f32 0.0, %v288
      %v290 = vpop.f32.mrb[0].mxu0
      %v291 = vpop.f32.mrb[0].mxu0
      %v292 = vpop.f32.mrb[0].mxu0
      %293 = vdwg.mxu0
      %296 = vrot.lane.b32.xlu0 %v130, 64
      %v297 = vpop.permute.xlu0 %296
      %298 = vrot.lane.b32.xlu0 %v131, 64
      %v299 = vpop.permute.xlu0 %298
      %302 = vrot.lane.b32.xlu0 %v132, 64
      %v303 = vpop.permute.xlu0 %302
      %304 = vrot.lane.b32.xlu0 %v133, 64
      %v305 = vpop.permute.xlu0 %304
      %v307 = vsel %vm134, %v297, 0
      %v310 = vsel %vm134, %v299, 0
      %v313 = vsel %vm134, %v303, 0
      %v316 = vsel %vm134, %v305, 0
      %318 = vmatprep.subr.bf16.mxu0 0
      %319 = vmatpush1.bf16.xpose.msra.mxu0 %v313
      %320 = vmatprep.subr.bf16.mxu0 0
      %321 = vmatpush1.bf16.xpose.msra.mxu0 %v316
      %322 = vmatprep.subr.bf16.mxu0 0
      %323 = vmatpush1.bf16.xpose.msra.mxu0 0
      %324 = vmatprep.subr.bf16.mxu0 0
      %325 = vmatpush1.bf16.xpose.msra.mxu0 0
      %326 = vmatprep.subr.bf16.mxu0 0
      %327 = vmatpush1.bf16.xpose.msra.mxu0 0
      %328 = vmatprep.subr.bf16.mxu0 0
      %329 = vmatpush1.bf16.xpose.msra.mxu0 0
      %330 = vmatprep.subr.bf16.mxu0 0
      %331 = vmatpush1.bf16.xpose.msra.mxu0 0
      %332 = vmatprep.subr.bf16.mxu0 0
      %333 = vmatpush1.bf16.xpose.msra.mxu0 0
      %334 = vmatprep.subr.bf16.mxu0 0
      %335 = vmatpush1.bf16.xpose.msra.mxu0 0
      %336 = vmatprep.subr.bf16.mxu0 0
      %337 = vmatpush1.bf16.xpose.msra.mxu0 0
      %338 = vmatprep.subr.bf16.mxu0 0
      %339 = vmatpush1.bf16.xpose.msra.mxu0 0
      %340 = vmatprep.subr.bf16.mxu0 0
      %341 = vmatpush1.bf16.xpose.msra.mxu0 0
      %342 = vmatprep.subr.bf16.mxu0 0
      %343 = vmatpush1.bf16.xpose.msra.mxu0 0
      %344 = vmatprep.subr.bf16.mxu0 0
      %345 = vmatpush1.bf16.xpose.msra.mxu0 0
      %346 = vmatprep.subr.bf16.mxu0 0
      %347 = vmatpush1.bf16.xpose.msra.mxu0 0
      %348 = vmatprep.subr.bf16.mxu0 0
      %349 = vmatpush1.bf16.xpose.msra.mxu0 0
      %350 = vmatprep.mubr.bf16.mxu0 0
      %351 = vmatmul.mubr.bf16.gmra.mrb[0].mxu0 %v307
      %v352 = vpop.f32.mrb[0].mxu0
      %v353 = vadd.f32 0.0, %v352
      %v354 = vpop.f32.mrb[0].mxu0
      %v355 = vpop.f32.mrb[0].mxu0
      %v356 = vadd.f32 0.0, %v355
      %v357 = vpop.f32.mrb[0].mxu0
      %358 = vmatprep.mubr.bf16.mxu0 0
      %359 = vmatmul.mubr.bf16.gmra.mrb[0].mxu0 %v310
      %v360 = vpop.f32.mrb[0].mxu0
      %v361 = vadd.f32 0.0, %v360
      %v362 = vpop.f32.mrb[0].mxu0
      %v363 = vpop.f32.mrb[0].mxu0
      %v364 = vpop.f32.mrb[0].mxu0
      %365 = vdwg.mxu0
      %v366 = vsel %vm195, %v353, -inf
      %367 = vmax.xlane.f32.xlu0 %v366
      %v368 = vpop.xlane.xlu0 %367
      %v369 = vsel %vm195, %v356, -inf
      %370 = vmax.xlane.f32.xlu0 %v369
      %v371 = vpop.xlane.xlu0 %370
      %v372 = vsel %vm202, %v361, -inf
      %373 = vmax.xlane.f32.xlu0 %v372
      %v374 = vpop.xlane.xlu0 %373
      %v375 = vsub.f32 %v353, %v368
      %v376 = vsub.f32 %v356, %v371
      %v377 = vsub.f32 %v361, %v374
      %v378 = vmul.f32 %v375, 1.442695
      %v379 = vpow.pop %v378
      %v380 = vmul.f32 %v376, 1.442695
      %v381 = vpow.pop %v380
      %v382 = vmul.f32 %v377, 1.442695
      %v383 = vpow.pop %v382
      %v384 = vsel %vm195, %v379, 0.0
      %385 = vadd.xlane.f32.xlu0 %v384
      %v386 = vpop.xlane.xlu0 %385
      %v387 = vsel %vm195, %v381, 0.0
      %388 = vadd.xlane.f32.xlu0 %v387
      %v389 = vpop.xlane.xlu0 %388
      %v390 = vsel %vm202, %v383, 0.0
      %391 = vadd.xlane.f32.xlu0 %v390
      %v392 = vpop.xlane.xlu0 %391
      %v393 = vrcp.pop %v386
      %v394 = vrcp.pop %v389
      %v395 = vrcp.pop %v392
      %v396 = vmul.f32 %v379, %v393
      %v397 = vmul.f32 %v381, %v394
      %v398 = vmul.f32 %v383, %v395
      %v399 = vpack.c.bf16 %v397, %v396
      %v400 = vpack.c.bf16 %v398, %v398
      %403 = vrot.lane.b32.xlu0 %v232, 64
      %v404 = vpop.permute.xlu0 %403
      %405 = vrot.lane.b32.xlu0 %v233, 64
      %v406 = vpop.permute.xlu0 %405
      %v409 = vsel %vm195, %v399, 0
      %v412 = vsel %vm195, %v400, 0
      %v415 = vand.u32 %v406, %v242
      %417 = vmatprep.subr.bf16.mxu0 0
      %418 = vmatpush1.bf16.msra.mxu0 %v404
      %419 = vmatprep.subr.bf16.mxu0 0
      %420 = vmatpush1.bf16.msra.mxu0 %v415
      %421 = vmatprep.subr.bf16.mxu0 0
      %422 = vmatpush1.bf16.msra.mxu0 0
      %423 = vmatprep.subr.bf16.mxu0 0
      %424 = vmatpush1.bf16.msra.mxu0 0
      %425 = vmatprep.subr.bf16.mxu0 0
      %426 = vmatpush1.bf16.msra.mxu0 0
      %427 = vmatprep.subr.bf16.mxu0 0
      %428 = vmatpush1.bf16.msra.mxu0 0
      %429 = vmatprep.subr.bf16.mxu0 0
      %430 = vmatpush1.bf16.msra.mxu0 0
      %431 = vmatprep.subr.bf16.mxu0 0
      %432 = vmatpush1.bf16.msra.mxu0 0
      %433 = vmatprep.subr.bf16.mxu0 0
      %434 = vmatpush1.bf16.msra.mxu0 0
      %435 = vmatprep.subr.bf16.mxu0 0
      %436 = vmatpush1.bf16.msra.mxu0 0
      %437 = vmatprep.subr.bf16.mxu0 0
      %438 = vmatpush1.bf16.msra.mxu0 0
      %439 = vmatprep.subr.bf16.mxu0 0
      %440 = vmatpush1.bf16.msra.mxu0 0
      %441 = vmatprep.subr.bf16.mxu0 0
      %442 = vmatpush1.bf16.msra.mxu0 0
      %443 = vmatprep.subr.bf16.mxu0 0
      %444 = vmatpush1.bf16.msra.mxu0 0
      %445 = vmatprep.subr.bf16.mxu0 0
      %446 = vmatpush1.bf16.msra.mxu0 0
      %447 = vmatprep.subr.bf16.mxu0 0
      %448 = vmatpush1.bf16.msra.mxu0 0
      %449 = vmatprep.mubr.bf16.mxu0 0
      %450 = vmatmul.mubr.bf16.gmra.mrb[0].mxu0 %v409
      %v451 = vpop.f32.mrb[0].mxu0
      %v452 = vadd.f32 0.0, %v451
      %v453 = vpop.f32.mrb[0].mxu0
      %v454 = vpop.f32.mrb[0].mxu0
      %v455 = vadd.f32 0.0, %v454
      %v456 = vpop.f32.mrb[0].mxu0
      %457 = vmatprep.mubr.bf16.mxu0 0
      %458 = vmatmul.mubr.bf16.gmra.mrb[0].mxu0 %v412
      %v459 = vpop.f32.mrb[0].mxu0
      %v460 = vadd.f32 0.0, %v459
      %v461 = vpop.f32.mrb[0].mxu0
      %v462 = vpop.f32.mrb[0].mxu0
      %v463 = vpop.f32.mrb[0].mxu0
      %464 = vdwg.mxu0
      %468 = vrot.lane.b32.xlu0 %v452, 64
      %v469 = vpop.permute.xlu0 %468
      %470 = vrot.lane.b32.xlu0 %v455, 64
      %v471 = vpop.permute.xlu0 %470
      %472 = vrot.lane.b32.xlu0 %v460, 64
      %v473 = vpop.permute.xlu0 %472
      %v477 = vsel %vm134, %v281, %v469
      %v478 = vsel %vm134, %v284, %v471
      %v479 = vsel %vm134, %v289, %v473
      %480 = vst [vmem:[%s116] sm:$0xff] %v477
      %481 = vst [vmem:[%s116 + $0x8] sm:$0xff] %v478
      %482 = vst [vmem:[%s116 + $0x10] sm:$0x1] %v479
      %p483 = scmp.lt.s32.totalorder %s12, 1
      %s484 = scalar_select %p483, %s12, 1
      %s485 = smul.addr %s484, 3
      %s486 = smul.addr %s485, 8
      %s487 = scalar_lea.vmem %s1, %s486
      // Predicated region
      $region25: #{vit_forward.14} parent=23 // pred_check
        %p488 = pneg %p56
      $region26: #{vit_forward.14} parent=23 // pred_check_branch
        %490 = sbr.rel (%p488) target = $region28
      $region27: #{vit_forward.14} parent=23 // pred_region
        _
      $region28: #{vit_forward.14} parent=23 // pred_fallthru
        _
    $region24: #{vit_forward.14} parent=5 // pred_fallthru
      _
    %p491 = scmp.le.s32.totalorder 2, %s7
    // Predicated region
    $region29: #{vit_forward.14} parent=5 // pred_check
      %p492 = pneg %p491
    $region30: #{vit_forward.14} parent=5 // pred_check_branch
      %494 = sbr.rel (%p492) target = $region32
    $region31: #{vit_forward.14} parent=5 // pred_region
      %s495 = ssub.s32 %s7, 2
      // Predicated region
      $region33: #{vit_forward.14} parent=31 // pred_check
        %p496 = pneg %p62
      $region34: #{vit_forward.14} parent=31 // pred_check_branch
        %498 = sbr.rel (%p496) target = $region36
      $region35: #{vit_forward.14} parent=31 // pred_region
        %p499 = scmp.lt.s32.totalorder %s13, 1
        %s500 = scalar_select %p499, %s13, 1
        %s501 = smul.addr %s500, 3
        %s502 = smul.addr %s501, 8
        %s503 = scalar_lea.vmem %s1, %s502
      $region36: #{vit_forward.14} parent=31 // pred_fallthru
        _
    $region32: #{vit_forward.14} parent=5 // pred_fallthru
      _
  $region6: #{vit_forward.14} parent=0 // loop_footer
    %s11 = sadd.s32 1, %s7
  $region7: #{vit_forward.14} parent=0 // loop_footer_branch
    %6 = sbr.rel target = $region3
  $region8: #{vit_forward.14} parent=0 // loop_exit
    _

// kernel: vit_forward.13
$region0: #{vit_forward.13}
  #allocation0 [shape = 'u32[]', space=smem, size = 0x4, offset = 0x4, fixed_abs, tag = 'smem constant byte address 0x4 - core index']
  #allocation1 [shape = 'u32[144,128]{1,0:T(1,128)}', space=vmem, size = 0x12000, scoped, tag = 'internal scratch']
  #allocation2 [shape = 'f32[40,256]{1,0:T(8,128)}', space=vmem, size = 0xa000, scoped, tag = 'scratch operand']
  %s0 = inlined_call_operand.vmem [shape: f32[40,128], index: 0, kind: input, shape index: {}]
  %s1 = inlined_call_operand.vmem [shape: bf16[128,512], index: 1, kind: input, shape index: {}]
  %s2 = inlined_call_operand.vmem [shape: f32[1,512], index: 2, kind: input, shape index: {}]
  %s3 = inlined_call_operand.vmem [shape: f32[1,128], index: 3, kind: input, shape index: {}]
  %s4 = inlined_call_operand.vmem [shape: f32[1,128], index: 4, kind: input, shape index: {}]
  %s5 = inlined_call_operand.vmem [shape: f32[40,512], index: 5, kind: output, shape index: {}]
  %s6 = sld [smem:[#allocation0]]
  $region118: #{vit_forward.13} parent=0
    _
  %s8 = ssub.s32 1, %s6
  %s9 = scalar_select 0, %s8, %s6
  $region1: #{vit_forward.13} parent=0
    #allocation3 [shape = 'u8[131072]{0}', space=vmem, size = 0x20000, scoped, tag = 'input window, operand 1']
    #allocation4 [shape = 'u8[81920]{0}', space=vmem, size = 0x14000, scoped, tag = 'output window, operand 0']
    loop: start=0, step=1, limit=4
    $region2: #{vit_forward.13} parent=1 // loop_pre_header
      _
    $region3: #{vit_forward.13} parent=1 // loop_header
      %s11 = sphi 0, %s15
      %p12 = scmp.ge.s32.totalorder %s11, 4
      %s18 = sphi 0, %s37
      %s19 = sphi 0, %s33
      %s20 = sphi 0, %s29
      %s21 = sphi 0, %s18
      %s22 = sphi 0, %s19
      %s23 = sphi 0, %s20
      %s24 = sphi 0, %s21
      %s25 = sphi 0, %s22
      %s26 = sphi 0, %s23
      %s42 = sphi 0, %s44
      %s45 = sphi 0, %s42
      %s46 = sphi 0, %s45
      %s62 = sphi 0, %s46
      %s70 = sphi 0, %s72
      %s73 = sphi 0, %s70
      %s74 = sphi 0, %s73
      %s90 = sphi 0, %s74
      %s96 = sphi 0, %s98
      %s99 = sphi 0, %s96
      %s100 = sphi 0, %s99
      %s116 = sphi 0, %s100
      %s122 = sphi 0, %s124
      %s125 = sphi 0, %s122
      %s126 = sphi 0, %s125
      %s142 = sphi 0, %s126
      %s148 = sphi 0, %s150
      %s151 = sphi 0, %s148
      %s152 = sphi 0, %s151
      %s168 = sphi 0, %s152
      %s176 = sphi 0, %s178
      %s179 = sphi 0, %s176
      %s180 = sphi 0, %s179
      %s196 = sphi 0, %s180
    $region4: #{vit_forward.13} parent=1 // loop_header_branch
      %14 = sbr.rel (%p12) target = $region8
    $region5: #{vit_forward.13} parent=1 // loop_body
      %s16 = ssub.s32 %s11, 1
      %s17 = ssub.s32 %s11, 2
      %s27 = sadd.s32 1, %s20
      %p28 = scmp.ge.s32.totalorder %s27, 1
      %s29 = scalar_select %p28, 0, %s27
      %s30 = sadd.s32 1, %s19
      %s31 = scalar_select %p28, %s30, %s19
      %p32 = scmp.ge.s32.totalorder %s31, 2
      %s33 = scalar_select %p32, 0, %s31
      %s34 = sadd.s32 1, %s18
      %s35 = scalar_select %p32, %s34, %s18
      %p36 = scmp.ge.s32.totalorder %s35, 1
      %s37 = scalar_select %p36, 0, %s35
      %s38 = ssub.s32 %s18, %s37
      %s39 = ssub.s32 %s20, %s29
      %s40 = sor.u32 %s38, %s39
      %p41 = scmp.eq.s32.totalorder %s40, 0
      %s43 = sadd.s32 %s42, 1
      %s44 = scalar_select %p41, %s42, %s43
      %p47 = pneg %p41
      %p48 = scmp.eq.s32.totalorder %s11, 1
      %p49 = por %p47, %p48
      %p50 = scmp.ne.s32.totalorder %s42, %s45
      %p51 = scmp.eq.s32.totalorder %s11, 0
      %p52 = por %p50, %p51
      %p53 = scmp.ne.s32.totalorder %s42, %s45
      %p54 = scmp.eq.s32.totalorder %s16, 1
      %p55 = por %p53, %p54
      %p56 = scmp.ne.s32.totalorder %s45, %s46
      %p57 = scmp.eq.s32.totalorder %s16, 0
      %p58 = por %p56, %p57
      %p59 = scmp.ne.s32.totalorder %s45, %s46
      %p60 = scmp.eq.s32.totalorder %s17, 1
      %p61 = por %p59, %p60
      %p63 = scmp.ne.s32.totalorder %s46, %s62
      %p64 = scmp.eq.s32.totalorder %s17, 0
      %p65 = por %p63, %p64
      %s66 = ssub.s32 %s20, %s29
      %s67 = ssub.s32 %s19, %s33
      %s68 = sor.u32 %s66, %s67
      %p69 = scmp.eq.s32.totalorder %s68, 0
      %s71 = sadd.s32 %s70, 1
      %s72 = scalar_select %p69, %s70, %s71
      %p75 = pneg %p69
      %p76 = scmp.eq.s32.totalorder %s11, 1
      %p77 = por %p75, %p76
      %p78 = scmp.ne.s32.totalorder %s70, %s73
      %p79 = scmp.eq.s32.totalorder %s11, 0
      %p80 = por %p78, %p79
      %p81 = scmp.ne.s32.totalorder %s70, %s73
      %p82 = scmp.eq.s32.totalorder %s16, 1
      %p83 = por %p81, %p82
      %p84 = scmp.ne.s32.totalorder %s73, %s74
      %p85 = scmp.eq.s32.totalorder %s16, 0
      %p86 = por %p84, %p85
      %p87 = scmp.ne.s32.totalorder %s73, %s74
      %p88 = scmp.eq.s32.totalorder %s17, 1
      %p89 = por %p87, %p88
      %p91 = scmp.ne.s32.totalorder %s74, %s90
      %p92 = scmp.eq.s32.totalorder %s17, 0
      %p93 = por %p91, %p92
      %s94 = ssub.s32 %s19, %s33
      %p95 = scmp.eq.s32.totalorder %s94, 0
      %s97 = sadd.s32 %s96, 1
      %s98 = scalar_select %p95, %s96, %s97
      %p101 = pneg %p95
      %p102 = scmp.eq.s32.totalorder %s11, 1
      %p103 = por %p101, %p102
      %p104 = scmp.ne.s32.totalorder %s96, %s99
      %p105 = scmp.eq.s32.totalorder %s11, 0
      %p106 = por %p104, %p105
      %p107 = scmp.ne.s32.totalorder %s96, %s99
      %p108 = scmp.eq.s32.totalorder %s16, 1
      %p109 = por %p107, %p108
      %p110 = scmp.ne.s32.totalorder %s99, %s100
      %p111 = scmp.eq.s32.totalorder %s16, 0
      %p112 = por %p110, %p111
      %p113 = scmp.ne.s32.totalorder %s99, %s100
      %p114 = scmp.eq.s32.totalorder %s17, 1
      %p115 = por %p113, %p114
      %p117 = scmp.ne.s32.totalorder %s100, %s116
      %p118 = scmp.eq.s32.totalorder %s17, 0
      %p119 = por %p117, %p118
      %s120 = ssub.s32 %s20, %s29
      %p121 = scmp.eq.s32.totalorder %s120, 0
      %s123 = sadd.s32 %s122, 1
      %s124 = scalar_select %p121, %s122, %s123
      %p127 = pneg %p121
      %p128 = scmp.eq.s32.totalorder %s11, 1
      %p129 = por %p127, %p128
      %p130 = scmp.ne.s32.totalorder %s122, %s125
      %p131 = scmp.eq.s32.totalorder %s11, 0
      %p132 = por %p130, %p131
      %p133 = scmp.ne.s32.totalorder %s122, %s125
      %p134 = scmp.eq.s32.totalorder %s16, 1
      %p135 = por %p133, %p134
      %p136 = scmp.ne.s32.totalorder %s125, %s126
      %p137 = scmp.eq.s32.totalorder %s16, 0
      %p138 = por %p136, %p137
      %p139 = scmp.ne.s32.totalorder %s125, %s126
      %p140 = scmp.eq.s32.totalorder %s17, 1
      %p141 = por %p139, %p140
      %p143 = scmp.ne.s32.totalorder %s126, %s142
      %p144 = scmp.eq.s32.totalorder %s17, 0
      %p145 = por %p143, %p144
      %s146 = ssub.s32 %s20, %s29
      %p147 = scmp.eq.s32.totalorder %s146, 0
      %s149 = sadd.s32 %s148, 1
      %s150 = scalar_select %p147, %s148, %s149
      %p153 = pneg %p147
      %p154 = scmp.eq.s32.totalorder %s11, 1
      %p155 = por %p153, %p154
      %p156 = scmp.ne.s32.totalorder %s148, %s151
      %p157 = scmp.eq.s32.totalorder %s11, 0
      %p158 = por %p156, %p157
      %p159 = scmp.ne.s32.totalorder %s148, %s151
      %p160 = scmp.eq.s32.totalorder %s16, 1
      %p161 = por %p159, %p160
      %p162 = scmp.ne.s32.totalorder %s151, %s152
      %p163 = scmp.eq.s32.totalorder %s16, 0
      %p164 = por %p162, %p163
      %p165 = scmp.ne.s32.totalorder %s151, %s152
      %p166 = scmp.eq.s32.totalorder %s17, 1
      %p167 = por %p165, %p166
      %p169 = scmp.ne.s32.totalorder %s152, %s168
      %p170 = scmp.eq.s32.totalorder %s17, 0
      %p171 = por %p169, %p170
      %s172 = ssub.s32 %s18, %s37
      %s173 = ssub.s32 %s19, %s33
      %s174 = sor.u32 %s172, %s173
      %p175 = scmp.eq.s32.totalorder %s174, 0
      %s177 = sadd.s32 %s176, 1
      %s178 = scalar_select %p175, %s176, %s177
      %p181 = pneg %p175
      %p182 = scmp.eq.s32.totalorder %s11, 1
      %p183 = por %p181, %p182
      %p184 = scmp.ne.s32.totalorder %s176, %s179
      %p185 = scmp.eq.s32.totalorder %s11, 0
      %p186 = por %p184, %p185
      %p187 = scmp.ne.s32.totalorder %s176, %s179
      %p188 = scmp.eq.s32.totalorder %s16, 1
      %p189 = por %p187, %p188
      %p190 = scmp.ne.s32.totalorder %s179, %s180
      %p191 = scmp.eq.s32.totalorder %s16, 0
      %p192 = por %p190, %p191
      %p193 = scmp.ne.s32.totalorder %s179, %s180
      %p194 = scmp.eq.s32.totalorder %s17, 1
      %p195 = por %p193, %p194
      %p197 = scmp.ne.s32.totalorder %s180, %s196
      %p198 = scmp.eq.s32.totalorder %s17, 0
      %p199 = por %p197, %p198
      %p200 = scmp.le.s32.totalorder 1, %s11
      %p201 = scmp.lt.s32.totalorder %s11, 3
      %p202 = pnand %p200, %p201
      %p203 = pneg %p202
      // Predicated region
      $region9: #{vit_forward.13} parent=5 // pred_check
        _
      $region10: #{vit_forward.13} parent=5 // pred_check_branch
        %205 = sbr.rel (%p202) target = $region12
      $region11: #{vit_forward.13} parent=5 // pred_region
        %s206 = ssub.s32 %s11, 1
        // Predicated region
        $region13: #{vit_forward.13} parent=11 // pred_check
          %p207 = pneg %p58
        $region14: #{vit_forward.13} parent=11 // pred_check_branch
          %209 = sbr.rel (%p207) target = $region16
        $region15: #{vit_forward.13} parent=11 // pred_region
          %s210 = smul.u32 5, %s21
          %p211 = scmp.lt.s32.totalorder %s210, 4
          %s212 = scalar_select %p211, %s210, 4
          %p213 = scmp.lt.s32.totalorder %s23, 0
          %s214 = scalar_select %p213, %s23, 0
          %s215 = sadd.s32 %s214, %s212
          %s216 = smul.addr %s215, 8
          %s217 = scalar_lea.vmem %s0, %s216
          %s218 = smul.u32 5, %s21
        $region16: #{vit_forward.13} parent=11 // pred_fallthru
          _
        // Predicated region
        $region17: #{vit_forward.13} parent=11 // pred_check
          %p219 = pneg %p138
        $region18: #{vit_forward.13} parent=11 // pred_check_branch
          %221 = sbr.rel (%p219) target = $region20
        $region19: #{vit_forward.13} parent=11 // pred_region
          %p222 = scmp.lt.s32.totalorder %s23, 0
          %s223 = scalar_select %p222, %s23, 0
          %s224 = scalar_lea.vmem %s3, %s223
        $region20: #{vit_forward.13} parent=11 // pred_fallthru
          _
        // Predicated region
        $region21: #{vit_forward.13} parent=11 // pred_check
          %p225 = pneg %p164
        $region22: #{vit_forward.13} parent=11 // pred_check_branch
          %227 = sbr.rel (%p225) target = $region24
        $region23: #{vit_forward.13} parent=11 // pred_region
          %p228 = scmp.lt.s32.totalorder %s23, 0
          %s229 = scalar_select %p228, %s23, 0
          %s230 = scalar_lea.vmem %s4, %s229
        $region24: #{vit_forward.13} parent=11 // pred_fallthru
          _
      $region12: #{vit_forward.13} parent=5 // pred_fallthru
        _
      %p231 = scmp.lt.s32.totalorder %s11, 2
      // Predicated region
      $region25: #{vit_forward.13} parent=5 // pred_check
        %p232 = pneg %p231
      $region26: #{vit_forward.13} parent=5 // pred_check_branch
        %234 = sbr.rel (%p232) target = $region28
      $region27: #{vit_forward.13} parent=5 // pred_region
        // Predicated region
        $region29: #{vit_forward.13} parent=27 // pred_check
          %p235 = pneg %p80
        $region30: #{vit_forward.13} parent=27 // pred_check_branch
          %237 = sbr.rel (%p235) target = $region32
        $region31: #{vit_forward.13} parent=27 // pred_region
          %s238 = sand.u32 %s70, 1
          %s239 = sand.u32 %s70, 1
          %s240 = smul.addr %s239, 128
          %s241 = scalar_lea.vmem [#allocation3], %s240
          %s242 = smul.u32 16, %s20
          %s243 = smul.u32 2, %s19
          %s244 = smul.addr %s242, 4
          %s245 = sadd.s32 %s243, %s244
          %s246 = smul.addr %s245, 4
          %s247 = scalar_lea.vmem %s1, %s246
          // Predicated region
          $region33: #{vit_forward.13} parent=31 // pred_check
            _
          $region34: #{vit_forward.13} parent=31 // pred_check_branch
            %249 = sbr.rel (0) target = $region36
          $region35: #{vit_forward.13} parent=31 // pred_region
            // Predicated region
            $region37: #{vit_forward.13} parent=35 // pred_check
              _
            $region38: #{vit_forward.13} parent=35 // pred_check_branch
              %251 = sbr.rel (0) target = $region40
            $region39: #{vit_forward.13} parent=35 // pred_region
              // Predicated region
              $region52: #{vit_forward.13} parent=39 // pred_check
                _
              $region53: #{vit_forward.13} parent=39 // pred_check_branch
                %296 = sbr.rel (0) target = $region55
              $region54: #{vit_forward.13} parent=39 // pred_region
                loop: start=0, step=1, limit=1
                $region56: #{vit_forward.13} parent=54 // loop_pre_header
                  _
                $region57: #{vit_forward.13} parent=54 // loop_header
                  %s298 = sphi 0, %s302
                  %p299 = scmp.ge.s32.totalorder %s298, 1
                  %s303 = sphi %s247, %s247
                  %s304 = sphi %s241, %s241
                $region58: #{vit_forward.13} parent=54 // loop_header_branch
                  %301 = sbr.rel (%p299) target = $region62
                $region59: #{vit_forward.13} parent=54 // loop_body
                  %v305 = vld [vmem:[%s303] sm:$0xff]
                  %306 = vst [vmem:[%s304] sm:$0xff] %v305
                  %v307 = vld [vmem:[%s303 + $0x10] sm:$0xff]
                  %308 = vst [vmem:[%s304 + $0x8] sm:$0xff] %v307
                  %v309 = vld [vmem:[%s303 + $0x20] sm:$0xff]
                  %310 = vst [vmem:[%s304 + $0x10] sm:$0xff] %v309
                  %v311 = vld [vmem:[%s303 + $0x30] sm:$0xff]
                  %312 = vst [vmem:[%s304 + $0x18] sm:$0xff] %v311
                  %v313 = vld [vmem:[%s303 + $0x40] sm:$0xff]
                  %314 = vst [vmem:[%s304 + $0x20] sm:$0xff] %v313
                  %v315 = vld [vmem:[%s303 + $0x50] sm:$0xff]
                  %316 = vst [vmem:[%s304 + $0x28] sm:$0xff] %v315
                  %v317 = vld [vmem:[%s303 + $0x60] sm:$0xff]
                  %318 = vst [vmem:[%s304 + $0x30] sm:$0xff] %v317
                  %v319 = vld [vmem:[%s303 + $0x70] sm:$0xff]
                  %320 = vst [vmem:[%s304 + $0x38] sm:$0xff] %v319
                  %v321 = vld [vmem:[%s303 + $0x80] sm:$0xff]
                  %322 = vst [vmem:[%s304 + $0x40] sm:$0xff] %v321
                  %v323 = vld [vmem:[%s303 + $0x90] sm:$0xff]
                  %324 = vst [vmem:[%s304 + $0x48] sm:$0xff] %v323
                  %v325 = vld [vmem:[%s303 + $0xa0] sm:$0xff]
                  %326 = vst [vmem:[%s304 + $0x50] sm:$0xff] %v325
                  %v327 = vld [vmem:[%s303 + $0xb0] sm:$0xff]
                  %328 = vst [vmem:[%s304 + $0x58] sm:$0xff] %v327
                  %v329 = vld [vmem:[%s303 + $0xc0] sm:$0xff]
                  %330 = vst [vmem:[%s304 + $0x60] sm:$0xff] %v329
                  %v331 = vld [vmem:[%s303 + $0xd0] sm:$0xff]
                  %332 = vst [vmem:[%s304 + $0x68] sm:$0xff] %v331
                  %v333 = vld [vmem:[%s303 + $0xe0] sm:$0xff]
                  %334 = vst [vmem:[%s304 + $0x70] sm:$0xff] %v333
                  %v335 = vld [vmem:[%s303 + $0xf0] sm:$0xff]
                  %336 = vst [vmem:[%s304 + $0x78] sm:$0xff] %v335
                $region60: #{vit_forward.13} parent=54 // loop_footer
                  %s302 = sadd.s32 1, %s298
                $region61: #{vit_forward.13} parent=54 // loop_footer_branch
                  %297 = sbr.rel target = $region57
                $region62: #{vit_forward.13} parent=54 // loop_exit
                  _
              $region55: #{vit_forward.13} parent=39 // pred_fallthru
                _
              // Predicated region
              $region63: #{vit_forward.13} parent=39 // pred_check
                _
              $region64: #{vit_forward.13} parent=39 // pred_check_branch
                %338 = sbr.rel target = $region66
              $region65: #{vit_forward.13} parent=39 // pred_region
                _
              $region66: #{vit_forward.13} parent=39 // pred_fallthru
                _
            $region40: #{vit_forward.13} parent=35 // pred_fallthru
              _
            // Predicated region
            $region41: #{vit_forward.13} parent=35 // pred_check
              _
            $region42: #{vit_forward.13} parent=35 // pred_check_branch
              %253 = sbr.rel target = $region44
            $region43: #{vit_forward.13} parent=35 // pred_region
              loop: start=0, step=1, limit=1
              $region45: #{vit_forward.13} parent=43 // loop_pre_header
                _
              $region46: #{vit_forward.13} parent=43 // loop_header
                %s256 = sphi 0, %s260
                %p257 = scmp.ge.s32.totalorder %s256, 1
                %s261 = sphi %s247, %s247
                %s262 = sphi %s241, %s241
              $region47: #{vit_forward.13} parent=43 // loop_header_branch
                %259 = sbr.rel (%p257) target = $region51
              $region48: #{vit_forward.13} parent=43 // loop_body
                %v263 = vld [vmem:[%s261] sm:$0xff]
                %264 = vst [vmem:[%s262] sm:$0xff] %v263
                %v265 = vld [vmem:[%s261 + $0x10] sm:$0xff]
                %266 = vst [vmem:[%s262 + $0x8] sm:$0xff] %v265
                %v267 = vld [vmem:[%s261 + $0x20] sm:$0xff]
                %268 = vst [vmem:[%s262 + $0x10] sm:$0xff] %v267
                %v269 = vld [vmem:[%s261 + $0x30] sm:$0xff]
                %270 = vst [vmem:[%s262 + $0x18] sm:$0xff] %v269
                %v271 = vld [vmem:[%s261 + $0x40] sm:$0xff]
                %272 = vst [vmem:[%s262 + $0x20] sm:$0xff] %v271
                %v273 = vld [vmem:[%s261 + $0x50] sm:$0xff]
                %274 = vst [vmem:[%s262 + $0x28] sm:$0xff] %v273
                %v275 = vld [vmem:[%s261 + $0x60] sm:$0xff]
                %276 = vst [vmem:[%s262 + $0x30] sm:$0xff] %v275
                %v277 = vld [vmem:[%s261 + $0x70] sm:$0xff]
                %278 = vst [vmem:[%s262 + $0x38] sm:$0xff] %v277
                %v279 = vld [vmem:[%s261 + $0x80] sm:$0xff]
                %280 = vst [vmem:[%s262 + $0x40] sm:$0xff] %v279
                %v281 = vld [vmem:[%s261 + $0x90] sm:$0xff]
                %282 = vst [vmem:[%s262 + $0x48] sm:$0xff] %v281
                %v283 = vld [vmem:[%s261 + $0xa0] sm:$0xff]
                %284 = vst [vmem:[%s262 + $0x50] sm:$0xff] %v283
                %v285 = vld [vmem:[%s261 + $0xb0] sm:$0xff]
                %286 = vst [vmem:[%s262 + $0x58] sm:$0xff] %v285
                %v287 = vld [vmem:[%s261 + $0xc0] sm:$0xff]
                %288 = vst [vmem:[%s262 + $0x60] sm:$0xff] %v287
                %v289 = vld [vmem:[%s261 + $0xd0] sm:$0xff]
                %290 = vst [vmem:[%s262 + $0x68] sm:$0xff] %v289
                %v291 = vld [vmem:[%s261 + $0xe0] sm:$0xff]
                %292 = vst [vmem:[%s262 + $0x70] sm:$0xff] %v291
                %v293 = vld [vmem:[%s261 + $0xf0] sm:$0xff]
                %294 = vst [vmem:[%s262 + $0x78] sm:$0xff] %v293
              $region49: #{vit_forward.13} parent=43 // loop_footer
                %s260 = sadd.s32 1, %s256
              $region50: #{vit_forward.13} parent=43 // loop_footer_branch
                %255 = sbr.rel target = $region46
              $region51: #{vit_forward.13} parent=43 // loop_exit
                _
            $region44: #{vit_forward.13} parent=35 // pred_fallthru
              _
          $region36: #{vit_forward.13} parent=31 // pred_fallthru
            _
          %339 = vnop
        $region32: #{vit_forward.13} parent=27 // pred_fallthru
          _
        // Predicated region
        $region67: #{vit_forward.13} parent=27 // pred_check
          %p340 = pneg %p106
        $region68: #{vit_forward.13} parent=27 // pred_check_branch
          %342 = sbr.rel (%p340) target = $region70
        $region69: #{vit_forward.13} parent=27 // pred_region
          %s343 = smul.u32 2, %s19
          %p344 = scmp.lt.s32.totalorder %s343, 3
          %s345 = scalar_select %p344, %s343, 3
          %s346 = scalar_lea.vmem %s2, %s345
          %s347 = smul.u32 2, %s19
        $region70: #{vit_forward.13} parent=27 // pred_fallthru
          _
      $region28: #{vit_forward.13} parent=5 // pred_fallthru
        _
      %p348 = scmp.le.s32.totalorder 1, %s11
      %p349 = scmp.lt.s32.totalorder %s11, 3
      %p350 = pnand %p348, %p349
      %p351 = pneg %p350
      // Predicated region
      $region71: #{vit_forward.13} parent=5 // pred_check
        _
      $region72: #{vit_forward.13} parent=5 // pred_check_branch
        %353 = sbr.rel (%p350) target = $region74
      $region73: #{vit_forward.13} parent=5 // pred_region
        %s354 = ssub.s32 %s11, 1
        %s355 = sand.u32 %s73, 1
        %s356 = sand.u32 %s73, 1
        %s357 = smul.addr %s356, 128
        %s358 = scalar_lea.vmem [#allocation3], %s357
        // Predicated region
        $region75: #{vit_forward.13} parent=73 // pred_check
          %p359 = pneg %p86
        $region76: #{vit_forward.13} parent=73 // pred_check_branch
          %361 = sbr.rel (%p359) target = $region78
        $region77: #{vit_forward.13} parent=73 // pred_region
          _
        $region78: #{vit_forward.13} parent=73 // pred_fallthru
          _
        %s362 = smul.u32 5, %s21
        %p363 = scmp.lt.s32.totalorder %s362, 4
        %s364 = scalar_select %p363, %s362, 4
        %p365 = scmp.lt.s32.totalorder %s23, 0
        %s366 = scalar_select %p365, %s23, 0
        %s367 = sadd.s32 %s366, %s364
        %s368 = smul.addr %s367, 8
        %s369 = scalar_lea.vmem %s0, %s368
        %p370 = pneg %p58
        %p371 = pneg %p55
        %s372 = sand.u32 %s73, 1
        %s373 = sand.u32 %s73, 1
        %s374 = smul.addr %s373, 128
        %s375 = scalar_lea.vmem [#allocation3], %s374
        %p376 = pneg %p86
        %p377 = pneg %p83
        %s378 = smul.u32 2, %s22
        %p379 = scmp.lt.s32.totalorder %s378, 3
        %s380 = scalar_select %p379, %s378, 3
        %s381 = scalar_lea.vmem %s2, %s380
        %p382 = pneg %p112
        %p383 = pneg %p109
        %p384 = scmp.lt.s32.totalorder %s23, 0
        %s385 = scalar_select %p384, %s23, 0
        %s386 = scalar_lea.vmem %s3, %s385
        %p387 = pneg %p138
        %p388 = pneg %p135
        %p389 = scmp.lt.s32.totalorder %s23, 0
        %s390 = scalar_select %p389, %s23, 0
        %s391 = scalar_lea.vmem %s4, %s390
        %p392 = pneg %p164
        %p393 = pneg %p161
        %p394 = pneg %p192
        %p395 = pneg %p189
        %s396 = sand.u32 %s179, 1
        %s397 = sand.u32 %s179, 1
        %s398 = smul.addr %s397, 80
        %s399 = scalar_lea.vmem [#allocation4], %s398
        %s400 = smul.u32 5, %s21
        %p401 = scmp.lt.s32.totalorder %s400, 4
        %s402 = scalar_select %p401, %s400, 4
        %p403 = scmp.lt.s32.totalorder %s23, 0
        %s404 = scalar_select %p403, %s23, 0
        %s405 = sadd.s32 %s404, %s402
        %s406 = smul.addr %s405, 8
        %s407 = scalar_lea.vmem %s0, %s406
        %s408 = smul.u32 5, %s21
        %s409 = smul.u32 16, %s23
        %s410 = smul.u32 2, %s22
        %s411 = smul.u32 2, %s22
        %p412 = scmp.lt.s32.totalorder %s411, 3
        %s413 = scalar_select %p412, %s411, 3
        %s414 = scalar_lea.vmem %s2, %s413
        %s415 = smul.u32 2, %s22
        %p416 = scmp.lt.s32.totalorder %s23, 0
        %s417 = scalar_select %p416, %s23, 0
        %s418 = scalar_lea.vmem %s3, %s417
        %p419 = scmp.lt.s32.totalorder %s23, 0
        %s420 = scalar_select %p419, %s23, 0
        %s421 = scalar_lea.vmem %s4, %s420
        %s422 = smul.u32 5, %s21
        %s423 = smul.u32 2, %s22
        %p425 = scmp.eq.s32.totalorder %s23, 0
        // Predicated region
        $region79: #{vit_forward.13} parent=73 // pred_check
          %p426 = pneg %p425
        $region80: #{vit_forward.13} parent=73 // pred_check_branch
          %428 = sbr.rel (%p426) target = $region82
        $region81: #{vit_forward.13} parent=73 // pred_region
          %429 = vst [vmem:[#allocation2] sm:$0xff] 0.0
          %430 = vst [vmem:[#allocation2 + $0x8] sm:$0xff] 0.0
          %431 = vst [vmem:[#allocation2 + $0x10] sm:$0xff] 0.0
          %432 = vst [vmem:[#allocation2 + $0x18] sm:$0xff] 0.0
          %433 = vst [vmem:[#allocation2 + $0x20] sm:$0xff] 0.0
          %434 = vst [vmem:[#allocation2 + $0x28] sm:$0xff] 0.0
          %435 = vst [vmem:[#allocation2 + $0x30] sm:$0xff] 0.0
          %436 = vst [vmem:[#allocation2 + $0x38] sm:$0xff] 0.0
          %437 = vst [vmem:[#allocation2 + $0x40] sm:$0xff] 0.0
          %438 = vst [vmem:[#allocation2 + $0x48] sm:$0xff] 0.0
        $region82: #{vit_forward.13} parent=73 // pred_fallthru
          _
        %v439 = vld [vmem:[%s407] sm:$0xff]
        %v440 = vld [vmem:[%s407 + $0x8] sm:$0xff]
        %v441 = vld [vmem:[%s407 + $0x10] sm:$0xff]
        %v442 = vld [vmem:[%s407 + $0x18] sm:$0xff]
        %v443 = vld [vmem:[%s407 + $0x20] sm:$0xff]
        %444 = vadd.xlane.f32.xlu0 %v439
        %v445 = vpop.xlane.xlu0 %444
        %446 = vadd.xlane.f32.xlu0 %v440
        %v447 = vpop.xlane.xlu0 %446
        %448 = vadd.xlane.f32.xlu0 %v441
        %v449 = vpop.xlane.xlu0 %448
        %450 = vadd.xlane.f32.xlu0 %v442
        %v451 = vpop.xlane.xlu0 %450
        %452 = vadd.xlane.f32.xlu0 %v443
        %v453 = vpop.xlane.xlu0 %452
        %v454 = vrcp.pop 128.0
        %v455 = vmul.f32 %v445, %v454
        %v456 = vmul.f32 %v447, %v454
        %v457 = vmul.f32 %v449, %v454
        %v458 = vmul.f32 %v451, %v454
        %v459 = vmul.f32 %v453, %v454
        %v460 = vsub.f32 %v439, %v455
        %v461 = vsub.f32 %v440, %v456
        %v462 = vsub.f32 %v441, %v457
        %v463 = vsub.f32 %v442, %v458
        %v464 = vsub.f32 %v443, %v459
        %v465 = vmul.f32 %v460, %v460
        %v466 = vmul.f32 %v461, %v461
        %v467 = vmul.f32 %v462, %v462
        %v468 = vmul.f32 %v463, %v463
        %v469 = vmul.f32 %v464, %v464
        %470 = vadd.xlane.f32.xlu0 %v465
        %v471 = vpop.xlane.xlu0 %470
        %472 = vadd.xlane.f32.xlu0 %v466
        %v473 = vpop.xlane.xlu0 %472
        %474 = vadd.xlane.f32.xlu0 %v467
        %v475 = vpop.xlane.xlu0 %474
        %476 = vadd.xlane.f32.xlu0 %v468
        %v477 = vpop.xlane.xlu0 %476
        %478 = vadd.xlane.f32.xlu0 %v469
        %v479 = vpop.xlane.xlu0 %478
        %v480 = vmul.f32 %v471, %v454
        %v481 = vmul.f32 %v473, %v454
        %v482 = vmul.f32 %v475, %v454
        %v483 = vmul.f32 %v477, %v454
        %v484 = vmul.f32 %v479, %v454
        %v485 = vadd.f32 %v480, 1e-06
        %v486 = vadd.f32 %v481, 1e-06
        %v487 = vadd.f32 %v482, 1e-06
        %v488 = vadd.f32 %v483, 1e-06
        %v489 = vadd.f32 %v484, 1e-06
        %v490 = vrsqrt.pop %v485
        %v491 = vrsqrt.pop %v486
        %v492 = vrsqrt.pop %v487
        %v493 = vrsqrt.pop %v488
        %v494 = vrsqrt.pop %v489
        %v495 = vmul.f32 %v460, %v490
        %v496 = vmul.f32 %v461, %v491
        %v497 = vmul.f32 %v462, %v492
        %v498 = vmul.f32 %v463, %v493
        %v499 = vmul.f32 %v464, %v494
        %v500 = vld [vmem:[%s418] sm:$0x1]
        %v502 = vlaneseq
        %v503 = vshrl.u32 %v502, 7
        %v504 = vsub.s32 0, %v503
        %v505 = vrot.slane %v500, %v504
        %v507 = vmul.f32 %v495, %v505
        %v508 = vmul.f32 %v496, %v505
        %v509 = vmul.f32 %v497, %v505
        %v510 = vmul.f32 %v498, %v505
        %v511 = vmul.f32 %v499, %v505
        %v512 = vld [vmem:[%s421] sm:$0x1]
        %v514 = vlaneseq
        %v515 = vshrl.u32 %v514, 7
        %v516 = vsub.s32 0, %v515
        %v517 = vrot.slane %v512, %v516
        %v519 = vadd.f32 %v507, %v517
        %v520 = vadd.f32 %v508, %v517
        %v521 = vadd.f32 %v509, %v517
        %v522 = vadd.f32 %v510, %v517
        %v523 = vadd.f32 %v511, %v517
        %v524 = vld [vmem:[#allocation2] sm:$0xff]
        %v525 = vld [vmem:[#allocation2 + $0x8] sm:$0xff]
        %v526 = vld [vmem:[#allocation2 + $0x10] sm:$0xff]
        %v527 = vld [vmem:[#allocation2 + $0x18] sm:$0xff]
        %v528 = vld [vmem:[#allocation2 + $0x20] sm:$0xff]
        %v529 = vld [vmem:[#allocation2 + $0x28] sm:$0xff]
        %v530 = vld [vmem:[#allocation2 + $0x30] sm:$0xff]
        %v531 = vld [vmem:[#allocation2 + $0x38] sm:$0xff]
        %v532 = vld [vmem:[#allocation2 + $0x40] sm:$0xff]
        %v533 = vld [vmem:[#allocation2 + $0x48] sm:$0xff]
        %v534 = vpack.c.bf16 %v520, %v519
        %v535 = vpack.c.bf16 %v522, %v521
        %v536 = vpack.c.bf16 %v523, %v523
        %v537 = vld [vmem:[%s358] sm:$0xff]
        %v538 = vld [vmem:[%s358 + $0x8] sm:$0xff]
        %v539 = vld [vmem:[%s358 + $0x10] sm:$0xff]
        %v540 = vld [vmem:[%s358 + $0x18] sm:$0xff]
        %v541 = vld [vmem:[%s358 + $0x20] sm:$0xff]
        %v542 = vld [vmem:[%s358 + $0x28] sm:$0xff]
        %v543 = vld [vmem:[%s358 + $0x30] sm:$0xff]
        %v544 = vld [vmem:[%s358 + $0x38] sm:$0xff]
        %v545 = vld [vmem:[%s358 + $0x40] sm:$0xff]
        %v546 = vld [vmem:[%s358 + $0x48] sm:$0xff]
        %v547 = vld [vmem:[%s358 + $0x50] sm:$0xff]
        %v548 = vld [vmem:[%s358 + $0x58] sm:$0xff]
        %v549 = vld [vmem:[%s358 + $0x60] sm:$0xff]
        %v550 = vld [vmem:[%s358 + $0x68] sm:$0xff]
        %v551 = vld [vmem:[%s358 + $0x70] sm:$0xff]
        %v552 = vld [vmem:[%s358 + $0x78] sm:$0xff]
        %v569 = vunpack.c.l.b16 %v537
        %v570 = vunpack.c.h.b16 %v537
        %v571 = vunpack.c.l.b16 %v538
        %v572 = vunpack.c.h.b16 %v538
        %v573 = vunpack.c.l.b16 %v539
        %v574 = vunpack.c.h.b16 %v539
        %v575 = vunpack.c.l.b16 %v540
        %v576 = vunpack.c.h.b16 %v540
        %v577 = vunpack.c.l.b16 %v541
        %v578 = vunpack.c.h.b16 %v541
        %v579 = vunpack.c.l.b16 %v542
        %v580 = vunpack.c.h.b16 %v542
        %v581 = vunpack.c.l.b16 %v543
        %v582 = vunpack.c.h.b16 %v543
        %v583 = vunpack.c.l.b16 %v544
        %v584 = vunpack.c.h.b16 %v544
        %v585 = vunpack.c.l.b16 %v545
        %v586 = vunpack.c.h.b16 %v545
        %v587 = vunpack.c.l.b16 %v546
        %v588 = vunpack.c.h.b16 %v546
        %v589 = vunpack.c.l.b16 %v547
        %v590 = vunpack.c.h.b16 %v547
        %v591 = vunpack.c.l.b16 %v548
        %v592 = vunpack.c.h.b16 %v548
        %v593 = vunpack.c.l.b16 %v549
        %v594 = vunpack.c.h.b16 %v549
        %v595 = vunpack.c.l.b16 %v550
        %v596 = vunpack.c.h.b16 %v550
        %v597 = vunpack.c.l.b16 %v551
        %v598 = vunpack.c.h.b16 %v551
        %v599 = vunpack.c.l.b16 %v552
        %v600 = vunpack.c.h.b16 %v552
        %v601 = vpack.c.b16 %v571, %v569
        %v602 = vpack.c.b16 %v572, %v570
        %v603 = vpack.c.b16 %v575, %v573
        %v604 = vpack.c.b16 %v576, %v574
        %v605 = vpack.c.b16 %v579, %v577
        %v606 = vpack.c.b16 %v580, %v578
        %v607 = vpack.c.b16 %v583, %v581
        %v608 = vpack.c.b16 %v584, %v582
        %v609 = vpack.c.b16 %v587, %v585
        %v610 = vpack.c.b16 %v588, %v586
        %v611 = vpack.c.b16 %v591, %v589
        %v612 = vpack.c.b16 %v592, %v590
        %v613 = vpack.c.b16 %v595, %v593
        %v614 = vpack.c.b16 %v596, %v594
        %v615 = vpack.c.b16 %v599, %v597
        %v616 = vpack.c.b16 %v600, %v598
        %633 = vmatprep.subr.bf16.mxu0 %v602
        %634 = vmatpush1.bf16.msra.mxu0 %v601
        %635 = vmatprep.subr.bf16.mxu0 %v604
        %636 = vmatpush1.bf16.msra.mxu0 %v603
        %637 = vmatprep.subr.bf16.mxu0 %v606
        %638 = vmatpush1.bf16.msra.mxu0 %v605
        %639 = vmatprep.subr.bf16.mxu0 %v608
        %640 = vmatpush1.bf16.msra.mxu0 %v607
        %641 = vmatprep.subr.bf16.mxu0 %v610
        %642 = vmatpush1.bf16.msra.mxu0 %v609
        %643 = vmatprep.subr.bf16.mxu0 %v612
        %644 = vmatpush1.bf16.msra.mxu0 %v611
        %645 = vmatprep.subr.bf16.mxu0 %v614
        %646 = vmatpush1.bf16.msra.mxu0 %v613
        %647 = vmatprep.subr.bf16.mxu0 %v616
        %648 = vmatpush1.bf16.msra.mxu0 %v615
        %649 = vmatprep.subr.bf16.mxu0 0
        %650 = vmatpush1.bf16.msra.mxu0 0
        %651 = vmatprep.subr.bf16.mxu0 0
        %652 = vmatpush1.bf16.msra.mxu0 0
        %653 = vmatprep.subr.bf16.mxu0 0
        %654 = vmatpush1.bf16.msra.mxu0 0
        %655 = vmatprep.subr.bf16.mxu0 0
        %656 = vmatpush1.bf16.msra.mxu0 0
        %657 = vmatprep.subr.bf16.mxu0 0
        %658 = vmatpush1.bf16.msra.mxu0 0
        %659 = vmatprep.subr.bf16.mxu0 0
        %660 = vmatpush1.bf16.msra.mxu0 0
        %661 = vmatprep.subr.bf16.mxu0 0
        %662 = vmatpush1.bf16.msra.mxu0 0
        %663 = vmatprep.subr.bf16.mxu0 0
        %664 = vmatpush1.bf16.msra.mxu0 0
        %665 = vmatprep.mubr.bf16.mxu0 0
        %666 = vmatmul.mubr.bf16.gmra.mrb[0].mxu0 %v534
        %v667 = vpop.f32.mrb[0].mxu0
        %v668 = vadd.f32 0.0, %v667
        %v669 = vpop.f32.mrb[0].mxu0
        %v670 = vadd.f32 0.0, %v669
        %v671 = vpop.f32.mrb[0].mxu0
        %v672 = vadd.f32 0.0, %v671
        %v673 = vpop.f32.mrb[0].mxu0
        %v674 = vadd.f32 0.0, %v673
        %675 = vmatprep.mubr.bf16.mxu0 0
        %676 = vmatmul.mubr.bf16.gmra.mrb[0].mxu0 %v535
        %v677 = vpop.f32.mrb[0].mxu0
        %v678 = vadd.f32 0.0, %v677
        %v679 = vpop.f32.mrb[0].mxu0
        %v680 = vadd.f32 0.0, %v679
        %v681 = vpop.f32.mrb[0].mxu0
        %v682 = vadd.f32 0.0, %v681
        %v683 = vpop.f32.mrb[0].mxu0
        %v684 = vadd.f32 0.0, %v683
        %685 = vmatprep.mubr.bf16.mxu0 0
        %686 = vmatmul.mubr.bf16.gmra.mrb[0].mxu0 %v536
        %v687 = vpop.f32.mrb[0].mxu0
        %v688 = vadd.f32 0.0, %v687
        %v689 = vpop.f32.mrb[0].mxu0
        %v690 = vadd.f32 0.0, %v689
        %v691 = vpop.f32.mrb[0].mxu0
        %v692 = vpop.f32.mrb[0].mxu0
        %693 = vdwg.mxu0
        %v694 = vadd.f32 %v524, %v668
        %v695 = vadd.f32 %v525, %v670
        %v696 = vadd.f32 %v526, %v672
        %v697 = vadd.f32 %v527, %v674
        %v698 = vadd.f32 %v528, %v678
        %v699 = vadd.f32 %v529, %v680
        %v700 = vadd.f32 %v530, %v682
        %v701 = vadd.f32 %v531, %v684
        %v702 = vadd.f32 %v532, %v688
        %v703 = vadd.f32 %v533, %v690
        %704 = vst [vmem:[#allocation2] sm:$0xff] %v694
        %705 = vst [vmem:[#allocation2 + $0x8] sm:$0xff] %v695
        %706 = vst [vmem:[#allocation2 + $0x10] sm:$0xff] %v696
        %707 = vst [vmem:[#allocation2 + $0x18] sm:$0xff] %v697
        %708 = vst [vmem:[#allocation2 + $0x20] sm:$0xff] %v698
        %709 = vst [vmem:[#allocation2 + $0x28] sm:$0xff] %v699
        %710 = vst [vmem:[#allocation2 + $0x30] sm:$0xff] %v700
        %711 = vst [vmem:[#allocation2 + $0x38] sm:$0xff] %v701
        %712 = vst [vmem:[#allocation2 + $0x40] sm:$0xff] %v702
        %713 = vst [vmem:[#allocation2 + $0x48] sm:$0xff] %v703
        // Predicated region
        $region83: #{vit_forward.13} parent=73 // pred_check
          %p714 = pneg %p425
        $region84: #{vit_forward.13} parent=73 // pred_check_branch
          %716 = sbr.rel (%p714) target = $region86
        $region85: #{vit_forward.13} parent=73 // pred_region
          %v717 = vld [vmem:[#allocation2] sm:$0xff]
          %v718 = vld [vmem:[#allocation2 + $0x8] sm:$0xff]
          %v719 = vld [vmem:[#allocation2 + $0x10] sm:$0xff]
          %v720 = vld [vmem:[#allocation2 + $0x18] sm:$0xff]
          %v721 = vld [vmem:[#allocation2 + $0x20] sm:$0xff]
          %v722 = vld [vmem:[#allocation2 + $0x28] sm:$0xff]
          %v723 = vld [vmem:[#allocation2 + $0x30] sm:$0xff]
          %v724 = vld [vmem:[#allocation2 + $0x38] sm:$0xff]
          %v725 = vld [vmem:[#allocation2 + $0x40] sm:$0xff]
          %v726 = vld [vmem:[#allocation2 + $0x48] sm:$0xff]
          %v727 = vld [vmem:[%s414] sm:$0x3]
          %v729 = vlaneseq
          %v730 = vshrl.u32 %v729, 7
          %v731 = vsub.s32 0, %v730
          %v732 = vrot.slane %v727, %v731
          %v733 = vlaneseq
          %v734 = vshrl.u32 %v733, 7
          %v735 = vsub.s32 1, %v734
          %v736 = vrot.slane %v727, %v735
          %v739 = vadd.f32 %v717, %v732
          %v740 = vadd.f32 %v718, %v736
          %v741 = vadd.f32 %v719, %v732
          %v742 = vadd.f32 %v720, %v736
          %v743 = vadd.f32 %v721, %v732
          %v744 = vadd.f32 %v722, %v736
          %v745 = vadd.f32 %v723, %v732
          %v746 = vadd.f32 %v724, %v736
          %v747 = vadd.f32 %v725, %v732
          %v748 = vadd.f32 %v726, %v736
          %749 = vst [vmem:[%s399] sm:$0xff] %v739
          %750 = vst [vmem:[%s399 + $0x8] sm:$0xff] %v740
          %751 = vst [vmem:[%s399 + $0x10] sm:$0xff] %v741
          %752 = vst [vmem:[%s399 + $0x18] sm:$0xff] %v742
          %753 = vst [vmem:[%s399 + $0x20] sm:$0xff] %v743
          %754 = vst [vmem:[%s399 + $0x28] sm:$0xff] %v744
          %755 = vst [vmem:[%s399 + $0x30] sm:$0xff] %v745
          %756 = vst [vmem:[%s399 + $0x38] sm:$0xff] %v746
          %757 = vst [vmem:[%s399 + $0x40] sm:$0xff] %v747
          %758 = vst [vmem:[%s399 + $0x48] sm:$0xff] %v748
        $region86: #{vit_forward.13} parent=73 // pred_fallthru
          _
        %s759 = sand.u32 %s179, 1
        %s760 = sand.u32 %s179, 1
        %s761 = smul.addr %s760, 80
        %s762 = scalar_lea.vmem [#allocation4], %s761
        // Predicated region
        $region87: #{vit_forward.13} parent=73 // pred_check
          %p763 = pneg %p189
        $region88: #{vit_forward.13} parent=73 // pred_check_branch
          %765 = sbr.rel (%p763) target = $region90
        $region89: #{vit_forward.13} parent=73 // pred_region
          %s766 = smul.u32 5, %s21
          %s767 = smul.u32 2, %s22
          %s768 = smul.addr %s766, 4
          %s769 = sadd.s32 %s767, %s768
          %s770 = smul.addr %s769, 8
          %s771 = scalar_lea.vmem %s5, %s770
          // Predicated region
          $region91: #{vit_forward.13} parent=89 // pred_check
            _
          $region92: #{vit_forward.13} parent=89 // pred_check_branch
            %773 = sbr.rel (0) target = $region94
          $region93: #{vit_forward.13} parent=89 // pred_region
            // Predicated region
            $region95: #{vit_forward.13} parent=93 // pred_check
              _
            $region96: #{vit_forward.13} parent=93 // pred_check_branch
              %775 = sbr.rel (0) target = $region98
            $region97: #{vit_forward.13} parent=93 // pred_region
              loop: start=0, step=1, limit=1
              $region99: #{vit_forward.13} parent=97 // loop_pre_header
                _
              $region100: #{vit_forward.13} parent=97 // loop_header
                %s777 = sphi 0, %s781
                %p778 = scmp.ge.s32.totalorder %s777, 1
                %s782 = sphi %s762, %s762
                %s783 = sphi %s771, %s771
              $region101: #{vit_forward.13} parent=97 // loop_header_branch
                %780 = sbr.rel (%p778) target = $region105
              $region102: #{vit_forward.13} parent=97 // loop_body
                %v784 = vld [vmem:[%s782] sm:$0xff]
                %785 = vst [vmem:[%s783] sm:$0xff] %v784
                %v786 = vld [vmem:[%s782 + $0x8] sm:$0xff]
                %787 = vst [vmem:[%s783 + $0x8] sm:$0xff] %v786
                %v788 = vld [vmem:[%s782 + $0x10] sm:$0xff]
                %789 = vst [vmem:[%s783 + $0x20] sm:$0xff] %v788
                %v790 = vld [vmem:[%s782 + $0x18] sm:$0xff]
                %791 = vst [vmem:[%s783 + $0x28] sm:$0xff] %v790
                %v792 = vld [vmem:[%s782 + $0x20] sm:$0xff]
                %793 = vst [vmem:[%s783 + $0x40] sm:$0xff] %v792
                %v794 = vld [vmem:[%s782 + $0x28] sm:$0xff]
                %795 = vst [vmem:[%s783 + $0x48] sm:$0xff] %v794
                %v796 = vld [vmem:[%s782 + $0x30] sm:$0xff]
                %797 = vst [vmem:[%s783 + $0x60] sm:$0xff] %v796
                %v798 = vld [vmem:[%s782 + $0x38] sm:$0xff]
                %799 = vst [vmem:[%s783 + $0x68] sm:$0xff] %v798
                %v800 = vld [vmem:[%s782 + $0x40] sm:$0xff]
                %801 = vst [vmem:[%s783 + $0x80] sm:$0xff] %v800
                %v802 = vld [vmem:[%s782 + $0x48] sm:$0xff]
                %803 = vst [vmem:[%s783 + $0x88] sm:$0xff] %v802
              $region103: #{vit_forward.13} parent=97 // loop_footer
                %s781 = sadd.s32 1, %s777
              $region104: #{vit_forward.13} parent=97 // loop_footer_branch
                %776 = sbr.rel target = $region100
              $region105: #{vit_forward.13} parent=97 // loop_exit
                _
            $region98: #{vit_forward.13} parent=93 // pred_fallthru
              _
            // Predicated region
            $region106: #{vit_forward.13} parent=93 // pred_check
              _
            $region107: #{vit_forward.13} parent=93 // pred_check_branch
              %805 = sbr.rel target = $region109
            $region108: #{vit_forward.13} parent=93 // pred_region
              _
            $region109: #{vit_forward.13} parent=93 // pred_fallthru
              _
          $region94: #{vit_forward.13} parent=89 // pred_fallthru
            _
          %806 = vnop
        $region90: #{vit_forward.13} parent=73 // pred_fallthru
          _
      $region74: #{vit_forward.13} parent=5 // pred_fallthru
        _
      %p807 = scmp.le.s32.totalorder 2, %s11
      // Predicated region
      $region110: #{vit_forward.13} parent=5 // pred_check
        %p808 = pneg %p807
      $region111: #{vit_forward.13} parent=5 // pred_check_branch
        %810 = sbr.rel (%p808) target = $region113
      $region112: #{vit_forward.13} parent=5 // pred_region
        %s811 = ssub.s32 %s11, 2
        // Predicated region
        $region114: #{vit_forward.13} parent=112 // pred_check
          %p812 = pneg %p195
        $region115: #{vit_forward.13} parent=112 // pred_check_branch
          %814 = sbr.rel (%p812) target = $region117
        $region116: #{vit_forward.13} parent=112 // pred_region
          %s815 = sand.u32 %s180, 1
          %s816 = sand.u32 %s180, 1
          %s817 = smul.addr %s816, 80
          %s818 = scalar_lea.vmem [#allocation4], %s817
        $region117: #{vit_forward.13} parent=112 // pred_fallthru
          _
      $region113: #{vit_forward.13} parent=5 // pred_fallthru
        _
    $region6: #{vit_forward.13} parent=1 // loop_footer
      %s15 = sadd.s32 1, %s11
    $region7: #{vit_forward.13} parent=1 // loop_footer_branch
      %10 = sbr.rel target = $region3
    $region8: #{vit_forward.13} parent=1 // loop_exit
      _

// kernel: vit_forward.15
$region0: #{vit_forward.15}
  #allocation0 [shape = 'u32[]', space=smem, size = 0x4, offset = 0x4, fixed_abs, tag = 'smem constant byte address 0x4 - core index']
  #allocation1 [shape = 'u32[144,128]{1,0:T(1,128)}', space=vmem, size = 0x12000, scoped, tag = 'internal scratch']
  #allocation2 [shape = 'f32[40,128]{1,0:T(8,128)}', space=vmem, size = 0x5000, scoped, tag = 'scratch operand']
  %s0 = inlined_call_operand.vmem [shape: f32[40,128], index: 0, kind: input, shape index: {}]
  %s1 = inlined_call_operand.vmem [shape: bf16[128,128], index: 1, kind: input, shape index: {}]
  %s2 = inlined_call_operand.vmem [shape: f32[1,128], index: 2, kind: input, shape index: {}]
  %s3 = inlined_call_operand.vmem [shape: f32[40,128], index: 3, kind: input, shape index: {}]
  %s4 = inlined_call_operand.vmem [shape: f32[40,128], index: 4, kind: output, shape index: {}]
  %s5 = sld [smem:[#allocation0]]
  $region34: #{vit_forward.15} parent=0
    _
  %s7 = ssub.s32 1, %s5
  %s8 = scalar_select 0, %s7, %s5
  // Predicated region
  $region2: #{vit_forward.15} parent=0 // pred_check
    _
  $region3: #{vit_forward.15} parent=0 // pred_check_branch
    %10 = sbr.rel (0) target = $region5
  $region4: #{vit_forward.15} parent=0 // pred_region
    _
  $region5: #{vit_forward.15} parent=0 // pred_fallthru
    _
  // Predicated region
  $region6: #{vit_forward.15} parent=0 // pred_check
    _
  $region7: #{vit_forward.15} parent=0 // pred_check_branch
    %12 = sbr.rel (0) target = $region9
  $region8: #{vit_forward.15} parent=0 // pred_region
    _
  $region9: #{vit_forward.15} parent=0 // pred_fallthru
    _
  // Predicated region
  $region10: #{vit_forward.15} parent=0 // pred_check
    _
  $region11: #{vit_forward.15} parent=0 // pred_check_branch
    %14 = sbr.rel (0) target = $region13
  $region12: #{vit_forward.15} parent=0 // pred_region
    _
  $region13: #{vit_forward.15} parent=0 // pred_fallthru
    _
  // Predicated region
  $region14: #{vit_forward.15} parent=0 // pred_check
    _
  $region15: #{vit_forward.15} parent=0 // pred_check_branch
    %16 = sbr.rel (0) target = $region17
  $region16: #{vit_forward.15} parent=0 // pred_region
    _
  $region17: #{vit_forward.15} parent=0 // pred_fallthru
    _
  %p18 = scmp.eq.s32.totalorder 0, 0
  // Predicated region
  $region18: #{vit_forward.15} parent=0 // pred_check
    %p19 = pneg %p18
  $region19: #{vit_forward.15} parent=0 // pred_check_branch
    %21 = sbr.rel (%p19) target = $region21
  $region20: #{vit_forward.15} parent=0 // pred_region
    %22 = vst [vmem:[#allocation2] sm:$0xff] 0.0
    %23 = vst [vmem:[#allocation2 + $0x8] sm:$0xff] 0.0
    %24 = vst [vmem:[#allocation2 + $0x10] sm:$0xff] 0.0
    %25 = vst [vmem:[#allocation2 + $0x18] sm:$0xff] 0.0
    %26 = vst [vmem:[#allocation2 + $0x20] sm:$0xff] 0.0
  $region21: #{vit_forward.15} parent=0 // pred_fallthru
    _
  %v27 = vld [vmem:[%s0] sm:$0xff]
  %v28 = vld [vmem:[%s0 + $0x8] sm:$0xff]
  %v29 = vld [vmem:[%s0 + $0x10] sm:$0xff]
  %v30 = vld [vmem:[%s0 + $0x18] sm:$0xff]
  %v31 = vld [vmem:[%s0 + $0x20] sm:$0xff]
  %v32 = vld [vmem:[#allocation2] sm:$0xff]
  %v33 = vld [vmem:[#allocation2 + $0x8] sm:$0xff]
  %v34 = vld [vmem:[#allocation2 + $0x10] sm:$0xff]
  %v35 = vld [vmem:[#allocation2 + $0x18] sm:$0xff]
  %v36 = vld [vmem:[#allocation2 + $0x20] sm:$0xff]
  %v37 = vpack.c.bf16 %v28, %v27
  %v38 = vpack.c.bf16 %v30, %v29
  %v39 = vpack.c.bf16 %v31, %v31
  %v40 = vld [vmem:[%s1] sm:$0xf]
  %v41 = vld [vmem:[%s1 + $0x4] sm:$0xf]
  %v42 = vld [vmem:[%s1 + $0x8] sm:$0xf]
  %v43 = vld [vmem:[%s1 + $0xc] sm:$0xf]
  %v44 = vld [vmem:[%s1 + $0x10] sm:$0xf]
  %v45 = vld [vmem:[%s1 + $0x14] sm:$0xf]
  %v46 = vld [vmem:[%s1 + $0x18] sm:$0xf]
  %v47 = vld [vmem:[%s1 + $0x1c] sm:$0xf]
  %v48 = vld [vmem:[%s1 + $0x20] sm:$0xf]
  %v49 = vld [vmem:[%s1 + $0x24] sm:$0xf]
  %v50 = vld [vmem:[%s1 + $0x28] sm:$0xf]
  %v51 = vld [vmem:[%s1 + $0x2c] sm:$0xf]
  %v52 = vld [vmem:[%s1 + $0x30] sm:$0xf]
  %v53 = vld [vmem:[%s1 + $0x34] sm:$0xf]
  %v54 = vld [vmem:[%s1 + $0x38] sm:$0xf]
  %v55 = vld [vmem:[%s1 + $0x3c] sm:$0xf]
  %v72 = vunpack.c.l.b16 %v40
  %v73 = vunpack.c.l.b16 %v41
  %v74 = vunpack.c.l.b16 %v42
  %v75 = vunpack.c.l.b16 %v43
  %v76 = vunpack.c.l.b16 %v44
  %v77 = vunpack.c.l.b16 %v45
  %v78 = vunpack.c.l.b16 %v46
  %v79 = vunpack.c.l.b16 %v47
  %v80 = vunpack.c.l.b16 %v48
  %v81 = vunpack.c.l.b16 %v49
  %v82 = vunpack.c.l.b16 %v50
  %v83 = vunpack.c.l.b16 %v51
  %v84 = vunpack.c.l.b16 %v52
  %v85 = vunpack.c.l.b16 %v53
  %v86 = vunpack.c.l.b16 %v54
  %v87 = vunpack.c.l.b16 %v55
  %v88 = vpack.c.b16 %v73, %v72
  %v89 = vpack.c.b16 %v75, %v74
  %v90 = vpack.c.b16 %v77, %v76
  %v91 = vpack.c.b16 %v79, %v78
  %v92 = vpack.c.b16 %v81, %v80
  %v93 = vpack.c.b16 %v83, %v82
  %v94 = vpack.c.b16 %v85, %v84
  %v95 = vpack.c.b16 %v87, %v86
  %104 = vmatprep.subr.bf16.mxu0 0
  %105 = vmatpush1.bf16.msra.mxu0 %v88
  %106 = vmatprep.subr.bf16.mxu0 0
  %107 = vmatpush1.bf16.msra.mxu0 %v89
  %108 = vmatprep.subr.bf16.mxu0 0
  %109 = vmatpush1.bf16.msra.mxu0 %v90
  %110 = vmatprep.subr.bf16.mxu0 0
  %111 = vmatpush1.bf16.msra.mxu0 %v91
  %112 = vmatprep.subr.bf16.mxu0 0
  %113 = vmatpush1.bf16.msra.mxu0 %v92
  %114 = vmatprep.subr.bf16.mxu0 0
  %115 = vmatpush1.bf16.msra.mxu0 %v93
  %116 = vmatprep.subr.bf16.mxu0 0
  %117 = vmatpush1.bf16.msra.mxu0 %v94
  %118 = vmatprep.subr.bf16.mxu0 0
  %119 = vmatpush1.bf16.msra.mxu0 %v95
  %120 = vmatprep.subr.bf16.mxu0 0
  %121 = vmatpush1.bf16.msra.mxu0 0
  %122 = vmatprep.subr.bf16.mxu0 0
  %123 = vmatpush1.bf16.msra.mxu0 0
  %124 = vmatprep.subr.bf16.mxu0 0
  %125 = vmatpush1.bf16.msra.mxu0 0
  %126 = vmatprep.subr.bf16.mxu0 0
  %127 = vmatpush1.bf16.msra.mxu0 0
  %128 = vmatprep.subr.bf16.mxu0 0
  %129 = vmatpush1.bf16.msra.mxu0 0
  %130 = vmatprep.subr.bf16.mxu0 0
  %131 = vmatpush1.bf16.msra.mxu0 0
  %132 = vmatprep.subr.bf16.mxu0 0
  %133 = vmatpush1.bf16.msra.mxu0 0
  %134 = vmatprep.subr.bf16.mxu0 0
  %135 = vmatpush1.bf16.msra.mxu0 0
  %136 = vmatprep.mubr.bf16.mxu0 0
  %137 = vmatmul.mubr.bf16.gmra.mrb[0].mxu0 %v37
  %v138 = vpop.f32.mrb[0].mxu0
  %v139 = vadd.f32 0.0, %v138
  %v140 = vpop.f32.mrb[0].mxu0
  %v141 = vpop.f32.mrb[0].mxu0
  %v142 = vadd.f32 0.0, %v141
  %v143 = vpop.f32.mrb[0].mxu0
  %144 = vmatprep.mubr.bf16.mxu0 0
  %145 = vmatmul.mubr.bf16.gmra.mrb[0].mxu0 %v38
  %v146 = vpop.f32.mrb[0].mxu0
  %v147 = vadd.f32 0.0, %v146
  %v148 = vpop.f32.mrb[0].mxu0
  %v149 = vpop.f32.mrb[0].mxu0
  %v150 = vadd.f32 0.0, %v149
  %v151 = vpop.f32.mrb[0].mxu0
  %152 = vmatprep.mubr.bf16.mxu0 0
  %153 = vmatmul.mubr.bf16.gmra.mrb[0].mxu0 %v39
  %v154 = vpop.f32.mrb[0].mxu0
  %v155 = vadd.f32 0.0, %v154
  %v156 = vpop.f32.mrb[0].mxu0
  %v157 = vpop.f32.mrb[0].mxu0
  %v158 = vpop.f32.mrb[0].mxu0
  %159 = vdwg.mxu0
  %v160 = vadd.f32 %v32, %v139
  %v161 = vadd.f32 %v33, %v142
  %v162 = vadd.f32 %v34, %v147
  %v163 = vadd.f32 %v35, %v150
  %v164 = vadd.f32 %v36, %v155
  %165 = vst [vmem:[#allocation2] sm:$0xff] %v160
  %166 = vst [vmem:[#allocation2 + $0x8] sm:$0xff] %v161
  %167 = vst [vmem:[#allocation2 + $0x10] sm:$0xff] %v162
  %168 = vst [vmem:[#allocation2 + $0x18] sm:$0xff] %v163
  %169 = vst [vmem:[#allocation2 + $0x20] sm:$0xff] %v164
  // Predicated region
  $region22: #{vit_forward.15} parent=0 // pred_check
    %p170 = pneg %p18
  $region23: #{vit_forward.15} parent=0 // pred_check_branch
    %172 = sbr.rel (%p170) target = $region25
  $region24: #{vit_forward.15} parent=0 // pred_region
    %v173 = vld [vmem:[#allocation2] sm:$0xff]
    %v174 = vld [vmem:[#allocation2 + $0x8] sm:$0xff]
    %v175 = vld [vmem:[#allocation2 + $0x10] sm:$0xff]
    %v176 = vld [vmem:[#allocation2 + $0x18] sm:$0xff]
    %v177 = vld [vmem:[#allocation2 + $0x20] sm:$0xff]
    %v178 = vld [vmem:[%s2] sm:$0x1]
    %v180 = vlaneseq
    %v181 = vshrl.u32 %v180, 7
    %v182 = vsub.s32 0, %v181
    %v183 = vrot.slane %v178, %v182
    %v185 = vadd.f32 %v173, %v183
    %v186 = vadd.f32 %v174, %v183
    %v187 = vadd.f32 %v175, %v183
    %v188 = vadd.f32 %v176, %v183
    %v189 = vadd.f32 %v177, %v183
    %v190 = vld [vmem:[%s3] sm:$0xff]
    %v191 = vld [vmem:[%s3 + $0x8] sm:$0xff]
    %v192 = vld [vmem:[%s3 + $0x10] sm:$0xff]
    %v193 = vld [vmem:[%s3 + $0x18] sm:$0xff]
    %v194 = vld [vmem:[%s3 + $0x20] sm:$0xff]
    %v195 = vadd.f32 %v185, %v190
    %v196 = vadd.f32 %v186, %v191
    %v197 = vadd.f32 %v187, %v192
    %v198 = vadd.f32 %v188, %v193
    %v199 = vadd.f32 %v189, %v194
    %200 = vst [vmem:[%s4] sm:$0xff] %v195
    %201 = vst [vmem:[%s4 + $0x8] sm:$0xff] %v196
    %202 = vst [vmem:[%s4 + $0x10] sm:$0xff] %v197
    %203 = vst [vmem:[%s4 + $0x18] sm:$0xff] %v198
    %204 = vst [vmem:[%s4 + $0x20] sm:$0xff] %v199
  $region25: #{vit_forward.15} parent=0 // pred_fallthru
    _
  // Predicated region
  $region26: #{vit_forward.15} parent=0 // pred_check
    _
  $region27: #{vit_forward.15} parent=0 // pred_check_branch
    %206 = sbr.rel (0) target = $region29
  $region28: #{vit_forward.15} parent=0 // pred_region
    _
  $region29: #{vit_forward.15} parent=0 // pred_fallthru
    _
  // Predicated region
  $region30: #{vit_forward.15} parent=0 // pred_check
    _
  $region31: #{vit_forward.15} parent=0 // pred_check_branch
    %208 = sbr.rel (0) target = $region33
  $region32: #{vit_forward.15} parent=0 // pred_region
    _
  $region33: #{vit_forward.15} parent=0 // pred_fallthru
    _

// kernel: vit_forward.16
$region0: #{vit_forward.16}
  #allocation0 [shape = 'u32[]', space=smem, size = 0x4, offset = 0x4, fixed_abs, tag = 'smem constant byte address 0x4 - core index']
  #allocation1 [shape = 'u32[144,128]{1,0:T(1,128)}', space=vmem, size = 0x12000, scoped, tag = 'internal scratch']
  #allocation2 [shape = 'f32[40,256]{1,0:T(8,128)}', space=vmem, size = 0xa000, scoped, tag = 'scratch operand']
  %s0 = inlined_call_operand.vmem [shape: f32[40,128], index: 0, kind: input, shape index: {}]
  %s1 = inlined_call_operand.vmem [shape: bf16[128,256], index: 1, kind: input, shape index: {}]
  %s2 = inlined_call_operand.vmem [shape: f32[1,256], index: 2, kind: input, shape index: {}]
  %s3 = inlined_call_operand.vmem [shape: f32[1,128], index: 3, kind: input, shape index: {}]
  %s4 = inlined_call_operand.vmem [shape: f32[1,128], index: 4, kind: input, shape index: {}]
  %s5 = inlined_call_operand.vmem [shape: f32[40,256], index: 5, kind: output, shape index: {}]
  %s6 = sld [smem:[#allocation0]]
  $region38: #{vit_forward.16} parent=0
    _
  %s8 = ssub.s32 1, %s6
  %s9 = scalar_select 0, %s8, %s6
  // Predicated region
  $region2: #{vit_forward.16} parent=0 // pred_check
    _
  $region3: #{vit_forward.16} parent=0 // pred_check_branch
    %11 = sbr.rel (0) target = $region5
  $region4: #{vit_forward.16} parent=0 // pred_region
    _
  $region5: #{vit_forward.16} parent=0 // pred_fallthru
    _
  // Predicated region
  $region6: #{vit_forward.16} parent=0 // pred_check
    _
  $region7: #{vit_forward.16} parent=0 // pred_check_branch
    %13 = sbr.rel (0) target = $region9
  $region8: #{vit_forward.16} parent=0 // pred_region
    _
  $region9: #{vit_forward.16} parent=0 // pred_fallthru
    _
  // Predicated region
  $region10: #{vit_forward.16} parent=0 // pred_check
    _
  $region11: #{vit_forward.16} parent=0 // pred_check_branch
    %15 = sbr.rel (0) target = $region13
  $region12: #{vit_forward.16} parent=0 // pred_region
    _
  $region13: #{vit_forward.16} parent=0 // pred_fallthru
    _
  // Predicated region
  $region14: #{vit_forward.16} parent=0 // pred_check
    _
  $region15: #{vit_forward.16} parent=0 // pred_check_branch
    %17 = sbr.rel (0) target = $region17
  $region16: #{vit_forward.16} parent=0 // pred_region
    _
  $region17: #{vit_forward.16} parent=0 // pred_fallthru
    _
  // Predicated region
  $region18: #{vit_forward.16} parent=0 // pred_check
    _
  $region19: #{vit_forward.16} parent=0 // pred_check_branch
    %19 = sbr.rel (0) target = $region21
  $region20: #{vit_forward.16} parent=0 // pred_region
    _
  $region21: #{vit_forward.16} parent=0 // pred_fallthru
    _
  %p21 = scmp.eq.s32.totalorder 0, 0
  // Predicated region
  $region22: #{vit_forward.16} parent=0 // pred_check
    %p22 = pneg %p21
  $region23: #{vit_forward.16} parent=0 // pred_check_branch
    %24 = sbr.rel (%p22) target = $region25
  $region24: #{vit_forward.16} parent=0 // pred_region
    %25 = vst [vmem:[#allocation2] sm:$0xff] 0.0
    %26 = vst [vmem:[#allocation2 + $0x8] sm:$0xff] 0.0
    %27 = vst [vmem:[#allocation2 + $0x10] sm:$0xff] 0.0
    %28 = vst [vmem:[#allocation2 + $0x18] sm:$0xff] 0.0
    %29 = vst [vmem:[#allocation2 + $0x20] sm:$0xff] 0.0
    %30 = vst [vmem:[#allocation2 + $0x28] sm:$0xff] 0.0
    %31 = vst [vmem:[#allocation2 + $0x30] sm:$0xff] 0.0
    %32 = vst [vmem:[#allocation2 + $0x38] sm:$0xff] 0.0
    %33 = vst [vmem:[#allocation2 + $0x40] sm:$0xff] 0.0
    %34 = vst [vmem:[#allocation2 + $0x48] sm:$0xff] 0.0
  $region25: #{vit_forward.16} parent=0 // pred_fallthru
    _
  %v35 = vld [vmem:[%s0] sm:$0xff]
  %v36 = vld [vmem:[%s0 + $0x8] sm:$0xff]
  %v37 = vld [vmem:[%s0 + $0x10] sm:$0xff]
  %v38 = vld [vmem:[%s0 + $0x18] sm:$0xff]
  %v39 = vld [vmem:[%s0 + $0x20] sm:$0xff]
  %40 = vadd.xlane.f32.xlu0 %v35
  %v41 = vpop.xlane.xlu0 %40
  %42 = vadd.xlane.f32.xlu0 %v36
  %v43 = vpop.xlane.xlu0 %42
  %44 = vadd.xlane.f32.xlu0 %v37
  %v45 = vpop.xlane.xlu0 %44
  %46 = vadd.xlane.f32.xlu0 %v38
  %v47 = vpop.xlane.xlu0 %46
  %48 = vadd.xlane.f32.xlu0 %v39
  %v49 = vpop.xlane.xlu0 %48
  %v50 = vrcp.pop 128.0
  %v51 = vmul.f32 %v41, %v50
  %v52 = vmul.f32 %v43, %v50
  %v53 = vmul.f32 %v45, %v50
  %v54 = vmul.f32 %v47, %v50
  %v55 = vmul.f32 %v49, %v50
  %v56 = vsub.f32 %v35, %v51
  %v57 = vsub.f32 %v36, %v52
  %v58 = vsub.f32 %v37, %v53
  %v59 = vsub.f32 %v38, %v54
  %v60 = vsub.f32 %v39, %v55
  %v61 = vmul.f32 %v56, %v56
  %v62 = vmul.f32 %v57, %v57
  %v63 = vmul.f32 %v58, %v58
  %v64 = vmul.f32 %v59, %v59
  %v65 = vmul.f32 %v60, %v60
  %66 = vadd.xlane.f32.xlu0 %v61
  %v67 = vpop.xlane.xlu0 %66
  %68 = vadd.xlane.f32.xlu0 %v62
  %v69 = vpop.xlane.xlu0 %68
  %70 = vadd.xlane.f32.xlu0 %v63
  %v71 = vpop.xlane.xlu0 %70
  %72 = vadd.xlane.f32.xlu0 %v64
  %v73 = vpop.xlane.xlu0 %72
  %74 = vadd.xlane.f32.xlu0 %v65
  %v75 = vpop.xlane.xlu0 %74
  %v76 = vmul.f32 %v67, %v50
  %v77 = vmul.f32 %v69, %v50
  %v78 = vmul.f32 %v71, %v50
  %v79 = vmul.f32 %v73, %v50
  %v80 = vmul.f32 %v75, %v50
  %v81 = vadd.f32 %v76, 1e-06
  %v82 = vadd.f32 %v77, 1e-06
  %v83 = vadd.f32 %v78, 1e-06
  %v84 = vadd.f32 %v79, 1e-06
  %v85 = vadd.f32 %v80, 1e-06
  %v86 = vrsqrt.pop %v81
  %v87 = vrsqrt.pop %v82
  %v88 = vrsqrt.pop %v83
  %v89 = vrsqrt.pop %v84
  %v90 = vrsqrt.pop %v85
  %v91 = vmul.f32 %v56, %v86
  %v92 = vmul.f32 %v57, %v87
  %v93 = vmul.f32 %v58, %v88
  %v94 = vmul.f32 %v59, %v89
  %v95 = vmul.f32 %v60, %v90
  %v96 = vld [vmem:[%s3] sm:$0x1]
  %v98 = vlaneseq
  %v99 = vshrl.u32 %v98, 7
  %v100 = vsub.s32 0, %v99
  %v101 = vrot.slane %v96, %v100
  %v103 = vmul.f32 %v91, %v101
  %v104 = vmul.f32 %v92, %v101
  %v105 = vmul.f32 %v93, %v101
  %v106 = vmul.f32 %v94, %v101
  %v107 = vmul.f32 %v95, %v101
  %v108 = vld [vmem:[%s4] sm:$0x1]
  %v110 = vlaneseq
  %v111 = vshrl.u32 %v110, 7
  %v112 = vsub.s32 0, %v111
  %v113 = vrot.slane %v108, %v112
  %v115 = vadd.f32 %v103, %v113
  %v116 = vadd.f32 %v104, %v113
  %v117 = vadd.f32 %v105, %v113
  %v118 = vadd.f32 %v106, %v113
  %v119 = vadd.f32 %v107, %v113
  %v120 = vld [vmem:[#allocation2] sm:$0xff]
  %v121 = vld [vmem:[#allocation2 + $0x8] sm:$0xff]
  %v122 = vld [vmem:[#allocation2 + $0x10] sm:$0xff]
  %v123 = vld [vmem:[#allocation2 + $0x18] sm:$0xff]
  %v124 = vld [vmem:[#allocation2 + $0x20] sm:$0xff]
  %v125 = vld [vmem:[#allocation2 + $0x28] sm:$0xff]
  %v126 = vld [vmem:[#allocation2 + $0x30] sm:$0xff]
  %v127 = vld [vmem:[#allocation2 + $0x38] sm:$0xff]
  %v128 = vld [vmem:[#allocation2 + $0x40] sm:$0xff]
  %v129 = vld [vmem:[#allocation2 + $0x48] sm:$0xff]
  %v130 = vpack.c.bf16 %v116, %v115
  %v131 = vpack.c.bf16 %v118, %v117
  %v132 = vpack.c.bf16 %v119, %v119
  %v133 = vld [vmem:[%s1] sm:$0xff]
  %v134 = vld [vmem:[%s1 + $0x8] sm:$0xff]
  %v135 = vld [vmem:[%s1 + $0x10] sm:$0xff]
  %v136 = vld [vmem:[%s1 + $0x18] sm:$0xff]
  %v137 = vld [vmem:[%s1 + $0x20] sm:$0xff]
  %v138 = vld [vmem:[%s1 + $0x28] sm:$0xff]
  %v139 = vld [vmem:[%s1 + $0x30] sm:$0xff]
  %v140 = vld [vmem:[%s1 + $0x38] sm:$0xff]
  %v141 = vld [vmem:[%s1 + $0x40] sm:$0xff]
  %v142 = vld [vmem:[%s1 + $0x48] sm:$0xff]
  %v143 = vld [vmem:[%s1 + $0x50] sm:$0xff]
  %v144 = vld [vmem:[%s1 + $0x58] sm:$0xff]
  %v145 = vld [vmem:[%s1 + $0x60] sm:$0xff]
  %v146 = vld [vmem:[%s1 + $0x68] sm:$0xff]
  %v147 = vld [vmem:[%s1 + $0x70] sm:$0xff]
  %v148 = vld [vmem:[%s1 + $0x78] sm:$0xff]
  %v165 = vunpack.c.l.b16 %v133
  %v166 = vunpack.c.h.b16 %v133
  %v167 = vunpack.c.l.b16 %v134
  %v168 = vunpack.c.h.b16 %v134
  %v169 = vunpack.c.l.b16 %v135
  %v170 = vunpack.c.h.b16 %v135
  %v171 = vunpack.c.l.b16 %v136
  %v172 = vunpack.c.h.b16 %v136
  %v173 = vunpack.c.l.b16 %v137
  %v174 = vunpack.c.h.b16 %v137
  %v175 = vunpack.c.l.b16 %v138
  %v176 = vunpack.c.h.b16 %v138
  %v177 = vunpack.c.l.b16 %v139
  %v178 = vunpack.c.h.b16 %v139
  %v179 = vunpack.c.l.b16 %v140
  %v180 = vunpack.c.h.b16 %v140
  %v181 = vunpack.c.l.b16 %v141
  %v182 = vunpack.c.h.b16 %v141
  %v183 = vunpack.c.l.b16 %v142
  %v184 = vunpack.c.h.b16 %v142
  %v185 = vunpack.c.l.b16 %v143
  %v186 = vunpack.c.h.b16 %v143
  %v187 = vunpack.c.l.b16 %v144
  %v188 = vunpack.c.h.b16 %v144
  %v189 = vunpack.c.l.b16 %v145
  %v190 = vunpack.c.h.b16 %v145
  %v191 = vunpack.c.l.b16 %v146
  %v192 = vunpack.c.h.b16 %v146
  %v193 = vunpack.c.l.b16 %v147
  %v194 = vunpack.c.h.b16 %v147
  %v195 = vunpack.c.l.b16 %v148
  %v196 = vunpack.c.h.b16 %v148
  %v197 = vpack.c.b16 %v167, %v165
  %v198 = vpack.c.b16 %v168, %v166
  %v199 = vpack.c.b16 %v171, %v169
  %v200 = vpack.c.b16 %v172, %v170
  %v201 = vpack.c.b16 %v175, %v173
  %v202 = vpack.c.b16 %v176, %v174
  %v203 = vpack.c.b16 %v179, %v177
  %v204 = vpack.c.b16 %v180, %v178
  %v205 = vpack.c.b16 %v183, %v181
  %v206 = vpack.c.b16 %v184, %v182
  %v207 = vpack.c.b16 %v187, %v185
  %v208 = vpack.c.b16 %v188, %v186
  %v209 = vpack.c.b16 %v191, %v189
  %v210 = vpack.c.b16 %v192, %v190
  %v211 = vpack.c.b16 %v195, %v193
  %v212 = vpack.c.b16 %v196, %v194
  %229 = vmatprep.subr.bf16.mxu0 %v198
  %230 = vmatpush1.bf16.msra.mxu0 %v197
  %231 = vmatprep.subr.bf16.mxu0 %v200
  %232 = vmatpush1.bf16.msra.mxu0 %v199
  %233 = vmatprep.subr.bf16.mxu0 %v202
  %234 = vmatpush1.bf16.msra.mxu0 %v201
  %235 = vmatprep.subr.bf16.mxu0 %v204
  %236 = vmatpush1.bf16.msra.mxu0 %v203
  %237 = vmatprep.subr.bf16.mxu0 %v206
  %238 = vmatpush1.bf16.msra.mxu0 %v205
  %239 = vmatprep.subr.bf16.mxu0 %v208
  %240 = vmatpush1.bf16.msra.mxu0 %v207
  %241 = vmatprep.subr.bf16.mxu0 %v210
  %242 = vmatpush1.bf16.msra.mxu0 %v209
  %243 = vmatprep.subr.bf16.mxu0 %v212
  %244 = vmatpush1.bf16.msra.mxu0 %v211
  %245 = vmatprep.subr.bf16.mxu0 0
  %246 = vmatpush1.bf16.msra.mxu0 0
  %247 = vmatprep.subr.bf16.mxu0 0
  %248 = vmatpush1.bf16.msra.mxu0 0
  %249 = vmatprep.subr.bf16.mxu0 0
  %250 = vmatpush1.bf16.msra.mxu0 0
  %251 = vmatprep.subr.bf16.mxu0 0
  %252 = vmatpush1.bf16.msra.mxu0 0
  %253 = vmatprep.subr.bf16.mxu0 0
  %254 = vmatpush1.bf16.msra.mxu0 0
  %255 = vmatprep.subr.bf16.mxu0 0
  %256 = vmatpush1.bf16.msra.mxu0 0
  %257 = vmatprep.subr.bf16.mxu0 0
  %258 = vmatpush1.bf16.msra.mxu0 0
  %259 = vmatprep.subr.bf16.mxu0 0
  %260 = vmatpush1.bf16.msra.mxu0 0
  %261 = vmatprep.mubr.bf16.mxu0 0
  %262 = vmatmul.mubr.bf16.gmra.mrb[0].mxu0 %v130
  %v263 = vpop.f32.mrb[0].mxu0
  %v264 = vadd.f32 0.0, %v263
  %v265 = vpop.f32.mrb[0].mxu0
  %v266 = vadd.f32 0.0, %v265
  %v267 = vpop.f32.mrb[0].mxu0
  %v268 = vadd.f32 0.0, %v267
  %v269 = vpop.f32.mrb[0].mxu0
  %v270 = vadd.f32 0.0, %v269
  %271 = vmatprep.mubr.bf16.mxu0 0
  %272 = vmatmul.mubr.bf16.gmra.mrb[0].mxu0 %v131
  %v273 = vpop.f32.mrb[0].mxu0
  %v274 = vadd.f32 0.0, %v273
  %v275 = vpop.f32.mrb[0].mxu0
  %v276 = vadd.f32 0.0, %v275
  %v277 = vpop.f32.mrb[0].mxu0
  %v278 = vadd.f32 0.0, %v277
  %v279 = vpop.f32.mrb[0].mxu0
  %v280 = vadd.f32 0.0, %v279
  %281 = vmatprep.mubr.bf16.mxu0 0
  %282 = vmatmul.mubr.bf16.gmra.mrb[0].mxu0 %v132
  %v283 = vpop.f32.mrb[0].mxu0
  %v284 = vadd.f32 0.0, %v283
  %v285 = vpop.f32.mrb[0].mxu0
  %v286 = vadd.f32 0.0, %v285
  %v287 = vpop.f32.mrb[0].mxu0
  %v288 = vpop.f32.mrb[0].mxu0
  %289 = vdwg.mxu0
  %v290 = vadd.f32 %v120, %v264
  %v291 = vadd.f32 %v121, %v266
  %v292 = vadd.f32 %v122, %v268
  %v293 = vadd.f32 %v123, %v270
  %v294 = vadd.f32 %v124, %v274
  %v295 = vadd.f32 %v125, %v276
  %v296 = vadd.f32 %v126, %v278
  %v297 = vadd.f32 %v127, %v280
  %v298 = vadd.f32 %v128, %v284
  %v299 = vadd.f32 %v129, %v286
  %300 = vst [vmem:[#allocation2] sm:$0xff] %v290
  %301 = vst [vmem:[#allocation2 + $0x8] sm:$0xff] %v291
  %302 = vst [vmem:[#allocation2 + $0x10] sm:$0xff] %v292
  %303 = vst [vmem:[#allocation2 + $0x18] sm:$0xff] %v293
  %304 = vst [vmem:[#allocation2 + $0x20] sm:$0xff] %v294
  %305 = vst [vmem:[#allocation2 + $0x28] sm:$0xff] %v295
  %306 = vst [vmem:[#allocation2 + $0x30] sm:$0xff] %v296
  %307 = vst [vmem:[#allocation2 + $0x38] sm:$0xff] %v297
  %308 = vst [vmem:[#allocation2 + $0x40] sm:$0xff] %v298
  %309 = vst [vmem:[#allocation2 + $0x48] sm:$0xff] %v299
  // Predicated region
  $region26: #{vit_forward.16} parent=0 // pred_check
    %p310 = pneg %p21
  $region27: #{vit_forward.16} parent=0 // pred_check_branch
    %312 = sbr.rel (%p310) target = $region29
  $region28: #{vit_forward.16} parent=0 // pred_region
    %v313 = vld [vmem:[#allocation2] sm:$0xff]
    %v314 = vld [vmem:[#allocation2 + $0x8] sm:$0xff]
    %v315 = vld [vmem:[#allocation2 + $0x10] sm:$0xff]
    %v316 = vld [vmem:[#allocation2 + $0x18] sm:$0xff]
    %v317 = vld [vmem:[#allocation2 + $0x20] sm:$0xff]
    %v318 = vld [vmem:[#allocation2 + $0x28] sm:$0xff]
    %v319 = vld [vmem:[#allocation2 + $0x30] sm:$0xff]
    %v320 = vld [vmem:[#allocation2 + $0x38] sm:$0xff]
    %v321 = vld [vmem:[#allocation2 + $0x40] sm:$0xff]
    %v322 = vld [vmem:[#allocation2 + $0x48] sm:$0xff]
    %v323 = vld [vmem:[%s2] sm:$0x3]
    %v325 = vlaneseq
    %v326 = vshrl.u32 %v325, 7
    %v327 = vsub.s32 0, %v326
    %v328 = vrot.slane %v323, %v327
    %v329 = vlaneseq
    %v330 = vshrl.u32 %v329, 7
    %v331 = vsub.s32 1, %v330
    %v332 = vrot.slane %v323, %v331
    %v335 = vadd.f32 %v313, %v328
    %v336 = vadd.f32 %v314, %v332
    %v337 = vadd.f32 %v315, %v328
    %v338 = vadd.f32 %v316, %v332
    %v339 = vadd.f32 %v317, %v328
    %v340 = vadd.f32 %v318, %v332
    %v341 = vadd.f32 %v319, %v328
    %v342 = vadd.f32 %v320, %v332
    %v343 = vadd.f32 %v321, %v328
    %v344 = vadd.f32 %v322, %v332
    %v345 = vmul.f32 %v335, 0.5
    %v346 = vmul.f32 %v336, 0.5
    %v347 = vmul.f32 %v337, 0.5
    %v348 = vmul.f32 %v338, 0.5
    %v349 = vmul.f32 %v339, 0.5
    %v350 = vmul.f32 %v340, 0.5
    %v351 = vmul.f32 %v341, 0.5
    %v352 = vmul.f32 %v342, 0.5
    %v353 = vmul.f32 %v343, 0.5
    %v354 = vmul.f32 %v344, 0.5
    %v355 = vmul.f32 %v335, 0.70710677
    %v356 = vmul.f32 %v336, 0.70710677
    %v357 = vmul.f32 %v337, 0.70710677
    %v358 = vmul.f32 %v338, 0.70710677
    %v359 = vmul.f32 %v339, 0.70710677
    %v360 = vmul.f32 %v340, 0.70710677
    %v361 = vmul.f32 %v341, 0.70710677
    %v362 = vmul.f32 %v342, 0.70710677
    %v363 = vmul.f32 %v343, 0.70710677
    %v364 = vmul.f32 %v344, 0.70710677
    %v365 = verf.f32.pop %v355
    %v366 = verf.f32.pop %v356
    %v367 = verf.f32.pop %v357
    %v368 = verf.f32.pop %v358
    %v369 = verf.f32.pop %v359
    %v370 = verf.f32.pop %v360
    %v371 = verf.f32.pop %v361
    %v372 = verf.f32.pop %v362
    %v373 = verf.f32.pop %v363
    %v374 = verf.f32.pop %v364
    %v375 = vadd.f32 %v365, 1.0
    %v376 = vadd.f32 %v366, 1.0
    %v377 = vadd.f32 %v367, 1.0
    %v378 = vadd.f32 %v368, 1.0
    %v379 = vadd.f32 %v369, 1.0
    %v380 = vadd.f32 %v370, 1.0
    %v381 = vadd.f32 %v371, 1.0
    %v382 = vadd.f32 %v372, 1.0
    %v383 = vadd.f32 %v373, 1.0
    %v384 = vadd.f32 %v374, 1.0
    %v385 = vmul.f32 %v345, %v375
    %v386 = vmul.f32 %v346, %v376
    %v387 = vmul.f32 %v347, %v377
    %v388 = vmul.f32 %v348, %v378
    %v389 = vmul.f32 %v349, %v379
    %v390 = vmul.f32 %v350, %v380
    %v391 = vmul.f32 %v351, %v381
    %v392 = vmul.f32 %v352, %v382
    %v393 = vmul.f32 %v353, %v383
    %v394 = vmul.f32 %v354, %v384
    %395 = vst [vmem:[%s5] sm:$0xff] %v385
    %396 = vst [vmem:[%s5 + $0x8] sm:$0xff] %v386
    %397 = vst [vmem:[%s5 + $0x10] sm:$0xff] %v387
    %398 = vst [vmem:[%s5 + $0x18] sm:$0xff] %v388
    %399 = vst [vmem:[%s5 + $0x20] sm:$0xff] %v389
    %400 = vst [vmem:[%s5 + $0x28] sm:$0xff] %v390
    %401 = vst [vmem:[%s5 + $0x30] sm:$0xff] %v391
    %402 = vst [vmem:[%s5 + $0x38] sm:$0xff] %v392
    %403 = vst [vmem:[%s5 + $0x40] sm:$0xff] %v393
    %404 = vst [vmem:[%s5 + $0x48] sm:$0xff] %v394
  $region29: #{vit_forward.16} parent=0 // pred_fallthru
    _
  // Predicated region
  $region30: #{vit_forward.16} parent=0 // pred_check
    _
  $region31: #{vit_forward.16} parent=0 // pred_check_branch
    %406 = sbr.rel (0) target = $region33
  $region32: #{vit_forward.16} parent=0 // pred_region
    _
  $region33: #{vit_forward.16} parent=0 // pred_fallthru
    _
  // Predicated region
  $region34: #{vit_forward.16} parent=0 // pred_check
    _
  $region35: #{vit_forward.16} parent=0 // pred_check_branch
    %408 = sbr.rel (0) target = $region37
  $region36: #{vit_forward.16} parent=0 // pred_region
    _
  $region37: #{vit_forward.16} parent=0 // pred_fallthru
    _

// kernel: vit_forward.23
$region0: #{vit_forward.23}
  #allocation0 [shape = 'u32[]', space=smem, size = 0x4, offset = 0x4, fixed_abs, tag = 'smem constant byte address 0x4 - core index']
  #allocation1 [shape = 'u32[144,128]{1,0:T(1,128)}', space=vmem, size = 0x12000, scoped, tag = 'internal scratch']
  %s0 = inlined_call_operand.vmem [shape: f32[40,128], index: 0, kind: input, shape index: {}]
  %s1 = inlined_call_operand.vmem [shape: f32[1,128], index: 1, kind: input, shape index: {}]
  %s2 = inlined_call_operand.vmem [shape: f32[1,128], index: 2, kind: input, shape index: {}]
  %s3 = inlined_call_operand.vmem [shape: f32[40,128], index: 3, kind: output, shape index: {}]
  %s4 = sld [smem:[#allocation0]]
  $region22: #{vit_forward.23} parent=0
    _
  %s6 = ssub.s32 1, %s4
  %s7 = scalar_select 0, %s6, %s4
  // Predicated region
  $region2: #{vit_forward.23} parent=0 // pred_check
    _
  $region3: #{vit_forward.23} parent=0 // pred_check_branch
    %9 = sbr.rel (0) target = $region5
  $region4: #{vit_forward.23} parent=0 // pred_region
    _
  $region5: #{vit_forward.23} parent=0 // pred_fallthru
    _
  // Predicated region
  $region6: #{vit_forward.23} parent=0 // pred_check
    _
  $region7: #{vit_forward.23} parent=0 // pred_check_branch
    %11 = sbr.rel (0) target = $region9
  $region8: #{vit_forward.23} parent=0 // pred_region
    _
  $region9: #{vit_forward.23} parent=0 // pred_fallthru
    _
  // Predicated region
  $region10: #{vit_forward.23} parent=0 // pred_check
    _
  $region11: #{vit_forward.23} parent=0 // pred_check_branch
    %13 = sbr.rel (0) target = $region13
  $region12: #{vit_forward.23} parent=0 // pred_region
    _
  $region13: #{vit_forward.23} parent=0 // pred_fallthru
    _
  %v14 = vld [vmem:[%s0] sm:$0xff]
  %v15 = vld [vmem:[%s0 + $0x8] sm:$0xff]
  %v16 = vld [vmem:[%s0 + $0x10] sm:$0xff]
  %v17 = vld [vmem:[%s0 + $0x18] sm:$0xff]
  %v18 = vld [vmem:[%s0 + $0x20] sm:$0xff]
  %19 = vadd.xlane.f32.xlu0 %v14
  %v20 = vpop.xlane.xlu0 %19
  %21 = vadd.xlane.f32.xlu0 %v15
  %v22 = vpop.xlane.xlu0 %21
  %23 = vadd.xlane.f32.xlu0 %v16
  %v24 = vpop.xlane.xlu0 %23
  %25 = vadd.xlane.f32.xlu0 %v17
  %v26 = vpop.xlane.xlu0 %25
  %27 = vadd.xlane.f32.xlu0 %v18
  %v28 = vpop.xlane.xlu0 %27
  %v29 = vrcp.pop 128.0
  %v30 = vmul.f32 %v20, %v29
  %v31 = vmul.f32 %v22, %v29
  %v32 = vmul.f32 %v24, %v29
  %v33 = vmul.f32 %v26, %v29
  %v34 = vmul.f32 %v28, %v29
  %v35 = vsub.f32 %v14, %v30
  %v36 = vsub.f32 %v15, %v31
  %v37 = vsub.f32 %v16, %v32
  %v38 = vsub.f32 %v17, %v33
  %v39 = vsub.f32 %v18, %v34
  %v40 = vmul.f32 %v35, %v35
  %v41 = vmul.f32 %v36, %v36
  %v42 = vmul.f32 %v37, %v37
  %v43 = vmul.f32 %v38, %v38
  %v44 = vmul.f32 %v39, %v39
  %45 = vadd.xlane.f32.xlu0 %v40
  %v46 = vpop.xlane.xlu0 %45
  %47 = vadd.xlane.f32.xlu0 %v41
  %v48 = vpop.xlane.xlu0 %47
  %49 = vadd.xlane.f32.xlu0 %v42
  %v50 = vpop.xlane.xlu0 %49
  %51 = vadd.xlane.f32.xlu0 %v43
  %v52 = vpop.xlane.xlu0 %51
  %53 = vadd.xlane.f32.xlu0 %v44
  %v54 = vpop.xlane.xlu0 %53
  %v55 = vmul.f32 %v46, %v29
  %v56 = vmul.f32 %v48, %v29
  %v57 = vmul.f32 %v50, %v29
  %v58 = vmul.f32 %v52, %v29
  %v59 = vmul.f32 %v54, %v29
  %v60 = vadd.f32 %v55, 1e-06
  %v61 = vadd.f32 %v56, 1e-06
  %v62 = vadd.f32 %v57, 1e-06
  %v63 = vadd.f32 %v58, 1e-06
  %v64 = vadd.f32 %v59, 1e-06
  %v65 = vrsqrt.pop %v60
  %v66 = vrsqrt.pop %v61
  %v67 = vrsqrt.pop %v62
  %v68 = vrsqrt.pop %v63
  %v69 = vrsqrt.pop %v64
  %v70 = vmul.f32 %v35, %v65
  %v71 = vmul.f32 %v36, %v66
  %v72 = vmul.f32 %v37, %v67
  %v73 = vmul.f32 %v38, %v68
  %v74 = vmul.f32 %v39, %v69
  %v75 = vld [vmem:[%s1] sm:$0x1]
  %v77 = vlaneseq
  %v78 = vshrl.u32 %v77, 7
  %v79 = vsub.s32 0, %v78
  %v80 = vrot.slane %v75, %v79
  %v82 = vmul.f32 %v70, %v80
  %v83 = vmul.f32 %v71, %v80
  %v84 = vmul.f32 %v72, %v80
  %v85 = vmul.f32 %v73, %v80
  %v86 = vmul.f32 %v74, %v80
  %v87 = vld [vmem:[%s2] sm:$0x1]
  %v89 = vlaneseq
  %v90 = vshrl.u32 %v89, 7
  %v91 = vsub.s32 0, %v90
  %v92 = vrot.slane %v87, %v91
  %v94 = vadd.f32 %v82, %v92
  %v95 = vadd.f32 %v83, %v92
  %v96 = vadd.f32 %v84, %v92
  %v97 = vadd.f32 %v85, %v92
  %v98 = vadd.f32 %v86, %v92
  %99 = vst [vmem:[%s3] sm:$0xff] %v94
  %100 = vst [vmem:[%s3 + $0x8] sm:$0xff] %v95
  %101 = vst [vmem:[%s3 + $0x10] sm:$0xff] %v96
  %102 = vst [vmem:[%s3 + $0x18] sm:$0xff] %v97
  %103 = vst [vmem:[%s3 + $0x20] sm:$0xff] %v98
  // Predicated region
  $region14: #{vit_forward.23} parent=0 // pred_check
    _
  $region15: #{vit_forward.23} parent=0 // pred_check_branch
    %105 = sbr.rel (0) target = $region17
  $region16: #{vit_forward.23} parent=0 // pred_region
    _
  $region17: #{vit_forward.23} parent=0 // pred_fallthru
    _
  // Predicated region
  $region18: #{vit_forward.23} parent=0 // pred_check
    _
  $region19: #{vit_forward.23} parent=0 // pred_check_branch
    %107 = sbr.rel (0) target = $region21
  $region20: #{vit_forward.23} parent=0 // pred_region
    _
  $region21: #{vit_forward.23} parent=0 // pred_fallthru
    _

// kernel: vit_forward.17
$region0: #{vit_forward.17}
  #allocation0 [shape = 'u32[]', space=smem, size = 0x4, offset = 0x4, fixed_abs, tag = 'smem constant byte address 0x4 - core index']
  #allocation1 [shape = 'u32[144,128]{1,0:T(1,128)}', space=vmem, size = 0x12000, scoped, tag = 'internal scratch']
  #allocation2 [shape = 'f32[40,128]{1,0:T(8,128)}', space=vmem, size = 0x5000, scoped, tag = 'scratch operand']
  %s0 = inlined_call_operand.vmem [shape: f32[40,256], index: 0, kind: input, shape index: {}]
  %s1 = inlined_call_operand.vmem [shape: bf16[256,128], index: 1, kind: input, shape index: {}]
  %s2 = inlined_call_operand.vmem [shape: f32[1,128], index: 2, kind: input, shape index: {}]
  %s3 = inlined_call_operand.vmem [shape: f32[40,128], index: 3, kind: input, shape index: {}]
  %s4 = inlined_call_operand.vmem [shape: f32[40,128], index: 4, kind: output, shape index: {}]
  %s5 = sld [smem:[#allocation0]]
  $region34: #{vit_forward.17} parent=0
    _
  %s7 = ssub.s32 1, %s5
  %s8 = scalar_select 0, %s7, %s5
  // Predicated region
  $region2: #{vit_forward.17} parent=0 // pred_check
    _
  $region3: #{vit_forward.17} parent=0 // pred_check_branch
    %10 = sbr.rel (0) target = $region5
  $region4: #{vit_forward.17} parent=0 // pred_region
    _
  $region5: #{vit_forward.17} parent=0 // pred_fallthru
    _
  // Predicated region
  $region6: #{vit_forward.17} parent=0 // pred_check
    _
  $region7: #{vit_forward.17} parent=0 // pred_check_branch
    %12 = sbr.rel (0) target = $region9
  $region8: #{vit_forward.17} parent=0 // pred_region
    _
  $region9: #{vit_forward.17} parent=0 // pred_fallthru
    _
  // Predicated region
  $region10: #{vit_forward.17} parent=0 // pred_check
    _
  $region11: #{vit_forward.17} parent=0 // pred_check_branch
    %14 = sbr.rel (0) target = $region13
  $region12: #{vit_forward.17} parent=0 // pred_region
    _
  $region13: #{vit_forward.17} parent=0 // pred_fallthru
    _
  // Predicated region
  $region14: #{vit_forward.17} parent=0 // pred_check
    _
  $region15: #{vit_forward.17} parent=0 // pred_check_branch
    %16 = sbr.rel (0) target = $region17
  $region16: #{vit_forward.17} parent=0 // pred_region
    _
  $region17: #{vit_forward.17} parent=0 // pred_fallthru
    _
  %p18 = scmp.eq.s32.totalorder 0, 0
  // Predicated region
  $region18: #{vit_forward.17} parent=0 // pred_check
    %p19 = pneg %p18
  $region19: #{vit_forward.17} parent=0 // pred_check_branch
    %21 = sbr.rel (%p19) target = $region21
  $region20: #{vit_forward.17} parent=0 // pred_region
    %22 = vst [vmem:[#allocation2] sm:$0xff] 0.0
    %23 = vst [vmem:[#allocation2 + $0x8] sm:$0xff] 0.0
    %24 = vst [vmem:[#allocation2 + $0x10] sm:$0xff] 0.0
    %25 = vst [vmem:[#allocation2 + $0x18] sm:$0xff] 0.0
    %26 = vst [vmem:[#allocation2 + $0x20] sm:$0xff] 0.0
  $region21: #{vit_forward.17} parent=0 // pred_fallthru
    _
  %v27 = vld [vmem:[%s0] sm:$0xff]
  %v28 = vld [vmem:[%s0 + $0x8] sm:$0xff]
  %v29 = vld [vmem:[%s0 + $0x10] sm:$0xff]
  %v30 = vld [vmem:[%s0 + $0x18] sm:$0xff]
  %v31 = vld [vmem:[%s0 + $0x20] sm:$0xff]
  %v32 = vld [vmem:[%s0 + $0x28] sm:$0xff]
  %v33 = vld [vmem:[%s0 + $0x30] sm:$0xff]
  %v34 = vld [vmem:[%s0 + $0x38] sm:$0xff]
  %v35 = vld [vmem:[%s0 + $0x40] sm:$0xff]
  %v36 = vld [vmem:[%s0 + $0x48] sm:$0xff]
  %v37 = vld [vmem:[#allocation2] sm:$0xff]
  %v38 = vld [vmem:[#allocation2 + $0x8] sm:$0xff]
  %v39 = vld [vmem:[#allocation2 + $0x10] sm:$0xff]
  %v40 = vld [vmem:[#allocation2 + $0x18] sm:$0xff]
  %v41 = vld [vmem:[#allocation2 + $0x20] sm:$0xff]
  %v42 = vpack.c.bf16 %v29, %v27
  %v43 = vpack.c.bf16 %v30, %v28
  %v44 = vpack.c.bf16 %v33, %v31
  %v45 = vpack.c.bf16 %v34, %v32
  %v46 = vpack.c.bf16 %v35, %v35
  %v47 = vpack.c.bf16 %v36, %v36
  %v48 = vld [vmem:[%s1] sm:$0xf]
  %v49 = vld [vmem:[%s1 + $0x4] sm:$0xf]
  %v50 = vld [vmem:[%s1 + $0x8] sm:$0xf]
  %v51 = vld [vmem:[%s1 + $0xc] sm:$0xf]
  %v52 = vld [vmem:[%s1 + $0x10] sm:$0xf]
  %v53 = vld [vmem:[%s1 + $0x14] sm:$0xf]
  %v54 = vld [vmem:[%s1 + $0x18] sm:$0xf]
  %v55 = vld [vmem:[%s1 + $0x1c] sm:$0xf]
  %v56 = vld [vmem:[%s1 + $0x20] sm:$0xf]
  %v57 = vld [vmem:[%s1 + $0x24] sm:$0xf]
  %v58 = vld [vmem:[%s1 + $0x28] sm:$0xf]
  %v59 = vld [vmem:[%s1 + $0x2c] sm:$0xf]
  %v60 = vld [vmem:[%s1 + $0x30] sm:$0xf]
  %v61 = vld [vmem:[%s1 + $0x34] sm:$0xf]
  %v62 = vld [vmem:[%s1 + $0x38] sm:$0xf]
  %v63 = vld [vmem:[%s1 + $0x3c] sm:$0xf]
  %v64 = vld [vmem:[%s1 + $0x40] sm:$0xf]
  %v65 = vld [vmem:[%s1 + $0x44] sm:$0xf]
  %v66 = vld [vmem:[%s1 + $0x48] sm:$0xf]
  %v67 = vld [vmem:[%s1 + $0x4c] sm:$0xf]
  %v68 = vld [vmem:[%s1 + $0x50] sm:$0xf]
  %v69 = vld [vmem:[%s1 + $0x54] sm:$0xf]
  %v70 = vld [vmem:[%s1 + $0x58] sm:$0xf]
  %v71 = vld [vmem:[%s1 + $0x5c] sm:$0xf]
  %v72 = vld [vmem:[%s1 + $0x60] sm:$0xf]
  %v73 = vld [vmem:[%s1 + $0x64] sm:$0xf]
  %v74 = vld [vmem:[%s1 + $0x68] sm:$0xf]
  %v75 = vld [vmem:[%s1 + $0x6c] sm:$0xf]
  %v76 = vld [vmem:[%s1 + $0x70] sm:$0xf]
  %v77 = vld [vmem:[%s1 + $0x74] sm:$0xf]
  %v78 = vld [vmem:[%s1 + $0x78] sm:$0xf]
  %v79 = vld [vmem:[%s1 + $0x7c] sm:$0xf]
  %v112 = vunpack.c.l.b16 %v48
  %v113 = vunpack.c.l.b16 %v49
  %v114 = vunpack.c.l.b16 %v50
  %v115 = vunpack.c.l.b16 %v51
  %v116 = vunpack.c.l.b16 %v52
  %v117 = vunpack.c.l.b16 %v53
  %v118 = vunpack.c.l.b16 %v54
  %v119 = vunpack.c.l.b16 %v55
  %v120 = vunpack.c.l.b16 %v56
  %v121 = vunpack.c.l.b16 %v57
  %v122 = vunpack.c.l.b16 %v58
  %v123 = vunpack.c.l.b16 %v59
  %v124 = vunpack.c.l.b16 %v60
  %v125 = vunpack.c.l.b16 %v61
  %v126 = vunpack.c.l.b16 %v62
  %v127 = vunpack.c.l.b16 %v63
  %v128 = vunpack.c.l.b16 %v64
  %v129 = vunpack.c.l.b16 %v65
  %v130 = vunpack.c.l.b16 %v66
  %v131 = vunpack.c.l.b16 %v67
  %v132 = vunpack.c.l.b16 %v68
  %v133 = vunpack.c.l.b16 %v69
  %v134 = vunpack.c.l.b16 %v70
  %v135 = vunpack.c.l.b16 %v71
  %v136 = vunpack.c.l.b16 %v72
  %v137 = vunpack.c.l.b16 %v73
  %v138 = vunpack.c.l.b16 %v74
  %v139 = vunpack.c.l.b16 %v75
  %v140 = vunpack.c.l.b16 %v76
  %v141 = vunpack.c.l.b16 %v77
  %v142 = vunpack.c.l.b16 %v78
  %v143 = vunpack.c.l.b16 %v79
  %v144 = vpack.c.b16 %v113, %v112
  %v145 = vpack.c.b16 %v115, %v114
  %v146 = vpack.c.b16 %v117, %v116
  %v147 = vpack.c.b16 %v119, %v118
  %v148 = vpack.c.b16 %v121, %v120
  %v149 = vpack.c.b16 %v123, %v122
  %v150 = vpack.c.b16 %v125, %v124
  %v151 = vpack.c.b16 %v127, %v126
  %v152 = vpack.c.b16 %v129, %v128
  %v153 = vpack.c.b16 %v131, %v130
  %v154 = vpack.c.b16 %v133, %v132
  %v155 = vpack.c.b16 %v135, %v134
  %v156 = vpack.c.b16 %v137, %v136
  %v157 = vpack.c.b16 %v139, %v138
  %v158 = vpack.c.b16 %v141, %v140
  %v159 = vpack.c.b16 %v143, %v142
  %176 = vmatprep.subr.bf16.mxu0 0
  %177 = vmatpush1.bf16.msra.mxu0 %v144
  %178 = vmatprep.subr.bf16.mxu0 0
  %179 = vmatpush1.bf16.msra.mxu0 %v145
  %180 = vmatprep.subr.bf16.mxu0 0
  %181 = vmatpush1.bf16.msra.mxu0 %v146
  %182 = vmatprep.subr.bf16.mxu0 0
  %183 = vmatpush1.bf16.msra.mxu0 %v147
  %184 = vmatprep.subr.bf16.mxu0 0
  %185 = vmatpush1.bf16.msra.mxu0 %v148
  %186 = vmatprep.subr.bf16.mxu0 0
  %187 = vmatpush1.bf16.msra.mxu0 %v149
  %188 = vmatprep.subr.bf16.mxu0 0
  %189 = vmatpush1.bf16.msra.mxu0 %v150
  %190 = vmatprep.subr.bf16.mxu0 0
  %191 = vmatpush1.bf16.msra.mxu0 %v151
  %192 = vmatprep.subr.bf16.mxu0 0
  %193 = vmatpush1.bf16.msra.mxu0 %v152
  %194 = vmatprep.subr.bf16.mxu0 0
  %195 = vmatpush1.bf16.msra.mxu0 %v153
  %196 = vmatprep.subr.bf16.mxu0 0
  %197 = vmatpush1.bf16.msra.mxu0 %v154
  %198 = vmatprep.subr.bf16.mxu0 0
  %199 = vmatpush1.bf16.msra.mxu0 %v155
  %200 = vmatprep.subr.bf16.mxu0 0
  %201 = vmatpush1.bf16.msra.mxu0 %v156
  %202 = vmatprep.subr.bf16.mxu0 0
  %203 = vmatpush1.bf16.msra.mxu0 %v157
  %204 = vmatprep.subr.bf16.mxu0 0
  %205 = vmatpush1.bf16.msra.mxu0 %v158
  %206 = vmatprep.subr.bf16.mxu0 0
  %207 = vmatpush1.bf16.msra.mxu0 %v159
  %208 = vmatprep.mubr.bf16.mxu0 %v43
  %209 = vmatmul.mubr.bf16.gmra.mrb[0].mxu0 %v42
  %v210 = vpop.f32.mrb[0].mxu0
  %v211 = vadd.f32 0.0, %v210
  %v212 = vpop.f32.mrb[0].mxu0
  %v213 = vpop.f32.mrb[0].mxu0
  %v214 = vadd.f32 0.0, %v213
  %v215 = vpop.f32.mrb[0].mxu0
  %216 = vmatprep.mubr.bf16.mxu0 %v45
  %217 = vmatmul.mubr.bf16.gmra.mrb[0].mxu0 %v44
  %v218 = vpop.f32.mrb[0].mxu0
  %v219 = vadd.f32 0.0, %v218
  %v220 = vpop.f32.mrb[0].mxu0
  %v221 = vpop.f32.mrb[0].mxu0
  %v222 = vadd.f32 0.0, %v221
  %v223 = vpop.f32.mrb[0].mxu0
  %224 = vmatprep.mubr.bf16.mxu0 %v47
  %225 = vmatmul.mubr.bf16.gmra.mrb[0].mxu0 %v46
  %v226 = vpop.f32.mrb[0].mxu0
  %v227 = vadd.f32 0.0, %v226
  %v228 = vpop.f32.mrb[0].mxu0
  %v229 = vpop.f32.mrb[0].mxu0
  %v230 = vpop.f32.mrb[0].mxu0
  %231 = vdwg.mxu0
  %v232 = vadd.f32 %v37, %v211
  %v233 = vadd.f32 %v38, %v214
  %v234 = vadd.f32 %v39, %v219
  %v235 = vadd.f32 %v40, %v222
  %v236 = vadd.f32 %v41, %v227
  %237 = vst [vmem:[#allocation2] sm:$0xff] %v232
  %238 = vst [vmem:[#allocation2 + $0x8] sm:$0xff] %v233
  %239 = vst [vmem:[#allocation2 + $0x10] sm:$0xff] %v234
  %240 = vst [vmem:[#allocation2 + $0x18] sm:$0xff] %v235
  %241 = vst [vmem:[#allocation2 + $0x20] sm:$0xff] %v236
  // Predicated region
  $region22: #{vit_forward.17} parent=0 // pred_check
    %p242 = pneg %p18
  $region23: #{vit_forward.17} parent=0 // pred_check_branch
    %244 = sbr.rel (%p242) target = $region25
  $region24: #{vit_forward.17} parent=0 // pred_region
    %v245 = vld [vmem:[#allocation2] sm:$0xff]
    %v246 = vld [vmem:[#allocation2 + $0x8] sm:$0xff]
    %v247 = vld [vmem:[#allocation2 + $0x10] sm:$0xff]
    %v248 = vld [vmem:[#allocation2 + $0x18] sm:$0xff]
    %v249 = vld [vmem:[#allocation2 + $0x20] sm:$0xff]
    %v250 = vld [vmem:[%s2] sm:$0x1]
    %v252 = vlaneseq
    %v253 = vshrl.u32 %v252, 7
    %v254 = vsub.s32 0, %v253
    %v255 = vrot.slane %v250, %v254
    %v257 = vadd.f32 %v245, %v255
    %v258 = vadd.f32 %v246, %v255
    %v259 = vadd.f32 %v247, %v255
    %v260 = vadd.f32 %v248, %v255
    %v261 = vadd.f32 %v249, %v255
    %v262 = vld [vmem:[%s3] sm:$0xff]
    %v263 = vld [vmem:[%s3 + $0x8] sm:$0xff]
    %v264 = vld [vmem:[%s3 + $0x10] sm:$0xff]
    %v265 = vld [vmem:[%s3 + $0x18] sm:$0xff]
    %v266 = vld [vmem:[%s3 + $0x20] sm:$0xff]
    %v267 = vadd.f32 %v257, %v262
    %v268 = vadd.f32 %v258, %v263
    %v269 = vadd.f32 %v259, %v264
    %v270 = vadd.f32 %v260, %v265
    %v271 = vadd.f32 %v261, %v266
    %272 = vst [vmem:[%s4] sm:$0xff] %v267
    %273 = vst [vmem:[%s4 + $0x8] sm:$0xff] %v268
    %274 = vst [vmem:[%s4 + $0x10] sm:$0xff] %v269
    %275 = vst [vmem:[%s4 + $0x18] sm:$0xff] %v270
    %276 = vst [vmem:[%s4 + $0x20] sm:$0xff] %v271
  $region25: #{vit_forward.17} parent=0 // pred_fallthru
    _
  // Predicated region
  $region26: #{vit_forward.17} parent=0 // pred_check
    _
  $region27: #{vit_forward.17} parent=0 // pred_check_branch
    %278 = sbr.rel (0) target = $region29
  $region28: #{vit_forward.17} parent=0 // pred_region
    _
  $region29: #{vit_forward.17} parent=0 // pred_fallthru
    _
  // Predicated region
  $region30: #{vit_forward.17} parent=0 // pred_check
    _
  $region31: #{vit_forward.17} parent=0 // pred_check_branch
    %280 = sbr.rel (0) target = $region33
  $region32: #{vit_forward.17} parent=0 // pred_region
    _
  $region33: #{vit_forward.17} parent=0 // pred_fallthru
    _

</llo_original>
